<compile_context>
chip_gen: v6e
topology: v6e:2x2x1
jax: 0.10.0
libtpu: 0.0.40
codegen_flags: <defaults>
</compile_context>

<pallas_src>
import functools
import math

import jax
import jax.numpy as jnp
from jax import lax
from jax.experimental import pallas as pl
from jax.experimental.pallas import tpu as pltpu


def _round_up(x, m):
    return ((x + m - 1) // m) * m


def _choose_tiles(S):
    """(TQ, TK, padded_S). TK is always a multiple of TQ, padded_S of both."""
    s8 = _round_up(S, 8)
    if s8 <= 1024:
        return s8, s8, s8
    tq = 512
    tk = 512 if s8 <= 4096 else 1024
    return tq, tk, _round_up(S, tk)


# ---------------------------------------------------------------------------
# Prologue kernel: 1x1-conv K / V projections, written once per pixel (bf16).
# ---------------------------------------------------------------------------
def _kv_proj_kernel(x_ref, wk_ref, wv_ref, k_ref, v_ref):
    xb = x_ref[0].astype(jnp.bfloat16)                                  # (TS, Cp)
    k = jnp.dot(xb, wk_ref[...], preferred_element_type=jnp.float32)    # (TS, Dp)
    v = jnp.dot(xb, wv_ref[...], preferred_element_type=jnp.float32)    # (TS, Cp)
    k_ref[0] = k.astype(k_ref.dtype)
    v_ref[0] = v.astype(v_ref.dtype)


# ---------------------------------------------------------------------------
# Main kernel: fused Q projection + flash-style attention + gamma residual.
# ---------------------------------------------------------------------------
def _attn_kernel(xq_ref, k_ref, v_ref, wq_ref, bq_ref, bv_ref, gamma_ref,
                 o_ref, q_sc, m_sc, l_sc, acc_sc, *, seq_len, mask_kv):
    """One (batch, q-tile, kv-tile) grid step.

    xq_ref  : (1, TQ, Cp) f32   query-side input rows (also the residual)
    k_ref   : (1, TK, Dp) bf16  pre-projected keys
    v_ref   : (1, TK, Cp) bf16  pre-projected values (bias deferred to epilogue)
    wq_ref  : (Cp, Dp)    bf16  query weights;  bq_ref: (1, Dp) f32
    bv_ref  : (1, Cp)     f32   value bias (added once in the epilogue)
    gamma   : (1, 1)      f32   SMEM scalar
    o_ref   : (1, TQ, Cp) f32   output rows (resident across the kv axis)
    q_sc    : (TQ, Dp)    bf16  cached query projection
    m_sc/l_sc : (TQ, 1)   f32   running max / softmax denominator
    acc_sc  : (TQ, Cp)    f32   running attention-weighted value sum
    """
    ki = pl.program_id(2)
    nk = pl.num_programs(2)

    @pl.when(ki == 0)
    def _():
        # Query projection: one lane-dense MXU matmul, cached for all kv tiles.
        xq = xq_ref[0].astype(jnp.bfloat16)                             # (TQ, Cp)
        q = jnp.dot(xq, wq_ref[...], preferred_element_type=jnp.float32)
        q_sc[...] = (q + bq_ref[...]).astype(jnp.bfloat16)
        m_sc[...] = jnp.full_like(m_sc, -jnp.inf)
        l_sc[...] = jnp.zeros_like(l_sc)
        acc_sc[...] = jnp.zeros_like(acc_sc)

    k = k_ref[0]                                                        # (TK, Dp)
    v = v_ref[0]                                                        # (TK, Cp)

    # Energy tile (TQ, TK): contract over the projection axis of both operands,
    # so no explicit transpose/relayout of k is needed.
    s = lax.dot_general(q_sc[...], k,
                        dimension_numbers=(((1,), (1,)), ((), ())),
                        preferred_element_type=jnp.float32)

    if mask_kv:  # only traced in when the sequence was padded
        tq, tk = s.shape
        col = ki * tk + lax.broadcasted_iota(jnp.int32, (tq, tk), 1)
        s = jnp.where(col < seq_len, s, -1e30)

    # Online softmax update (f32).
    m_prev = m_sc[...]
    m_new = jnp.maximum(m_prev, jnp.max(s, axis=-1, keepdims=True))
    alpha = jnp.exp(m_prev - m_new)
    p = jnp.exp(s - m_new)
    l_sc[...] = alpha * l_sc[...] + jnp.sum(p, axis=-1, keepdims=True)
    acc_sc[...] = alpha * acc_sc[...] + jnp.dot(
        p.astype(jnp.bfloat16), v, preferred_element_type=jnp.float32)
    m_sc[...] = m_new

    @pl.when(ki == nk - 1)
    def _():
        gamma = gamma_ref[0, 0]
        scale = gamma * pl.reciprocal(l_sc[...], approx=False)          # (TQ, 1)
        # y = gamma * (acc / l + bv) + x   ==   acc * (gamma/l) + gamma*bv + x
        o_ref[0] = (acc_sc[...] * scale
                    + gamma * bv_ref[...]
                    + xq_ref[0]).astype(o_ref.dtype)


def _self_attention_impl(x_nchw, params):
    """Mirror of SelfAttention.forward. x is NCHW (PyTorch convention)."""
    wq, bq, wk, bk, wv, bv, gamma = params
    del bk  # q.bk is constant per query row and cancels in softmax
    B, C, H, W = x_nchw.shape
    assert C % 8 == 0, "in_dim must be divisible by 8 (module uses in_dim // 8)"
    D = C // 8
    S = H * W

    # Lane-dense channel padding: zero-padded input channels / projection
    # columns contribute exactly zero, so the first C channels are unchanged.
    Cp = _round_up(C, 128)
    Dp = _round_up(D, 128)

    # Sequence tiling (flash-style); pad S to a tile multiple, mask in-kernel.
    TQ, TK, Sp = _choose_tiles(S)
    if B * (Sp // TQ) < 2 and Sp >= 16 and Sp % 16 == 0:
        TQ = Sp // 2  # keep >= 2 parallel grid steps for v7x's two TensorCores
    nQ, nK = Sp // TQ, Sp // TK
    mask_kv = Sp != S

    # NCHW -> (B, Sp, Cp) channels-last. Spatial flattening order (h*W + w)
    # matches torch's .view(B, C, H*W). Padded rows/channels are zero.
    x = jnp.transpose(x_nchw.reshape(B, C, S), (0, 2, 1)).astype(jnp.float32)
    x = jnp.pad(x, ((0, 0), (0, Sp - S), (0, Cp - C)))
    # TODO(synk): if the surrounding model can supply/consume (B, S, C)
    # channels-last activations, these transposes can be dropped entirely.

    # 1x1-conv weights as (Cin, Cout); torch (Cout,Cin,1,1) maps via [:, :, 0, 0].T
    wq_p = jnp.pad(wq, ((0, Cp - C), (0, Dp - D))).astype(jnp.bfloat16)
    wk_p = jnp.pad(wk, ((0, Cp - C), (0, Dp - D))).astype(jnp.bfloat16)
    wv_p = jnp.pad(wv, ((0, Cp - C), (0, Cp - C))).astype(jnp.bfloat16)
    bq_p = jnp.pad(bq, (0, Dp - D)).reshape(1, Dp).astype(jnp.float32)
    bv_p = jnp.pad(bv, (0, Cp - C)).reshape(1, Cp).astype(jnp.float32)
    gamma_p = jnp.reshape(jnp.asarray(gamma, jnp.float32), (1, 1))

    # ---- Prologue: K / V projected once per pixel, stored bf16 in HBM. ----
    TS = TK
    k_all, v_all = pl.pallas_call(
        _kv_proj_kernel,
        out_shape=(jax.ShapeDtypeStruct((B, Sp, Dp), jnp.bfloat16),
                   jax.ShapeDtypeStruct((B, Sp, Cp), jnp.bfloat16)),
        grid_spec=pltpu.PrefetchScalarGridSpec(
            num_scalar_prefetch=0,
            grid=(B, Sp // TS),
            in_specs=[
                pl.BlockSpec((1, TS, Cp), lambda b, si: (b, si, 0)),
                pl.BlockSpec((Cp, Dp), lambda b, si: (0, 0)),
                pl.BlockSpec((Cp, Cp), lambda b, si: (0, 0)),
            ],
            out_specs=[
                pl.BlockSpec((1, TS, Dp), lambda b, si: (b, si, 0)),
                pl.BlockSpec((1, TS, Cp), lambda b, si: (b, si, 0)),
            ],
        ),
        compiler_params=pltpu.CompilerParams(
            dimension_semantics=("parallel", "parallel")),
    )(x, wk_p, wv_p)

    # ---- VMEM budget: double-buffered pipeline blocks + scratch, 2x headroom,
    #      capped at 64 MiB so v7x (64 MiB physical / TC) stays safe. ----
    est = (2 * TQ * Cp * 4                    # xq tile (f32)
           + 2 * TK * Dp * 2                  # K tile (bf16)
           + 2 * TK * Cp * 2                  # V tile (bf16)
           + 2 * TQ * Cp * 4                  # output tile (f32)
           + 2 * (Cp * Dp * 2 + Dp * 4 + Cp * 4)          # Wq, bq, bv
           + TQ * Dp * 2 + 2 * TQ * 4 + TQ * Cp * 4       # scratch
           + 4 * TQ * TK * 4)                 # softmax intermediates
    vmem_limit = int(min(64 * 2 ** 20, max(32 * 2 ** 20, 2 * est)))

    kernel = functools.partial(_attn_kernel, seq_len=S, mask_kv=mask_kv)

    out = pl.pallas_call(
        kernel,
        out_shape=jax.ShapeDtypeStruct((B, Sp, Cp), jnp.float32),
        grid_spec=pltpu.PrefetchScalarGridSpec(
            num_scalar_prefetch=0,
            grid=(B, nQ, nK),
            in_specs=[
                pl.BlockSpec((1, TQ, Cp), lambda b, qi, ki: (b, qi, 0)),  # x (q rows)
                pl.BlockSpec((1, TK, Dp), lambda b, qi, ki: (b, ki, 0)),  # K tile
                pl.BlockSpec((1, TK, Cp), lambda b, qi, ki: (b, ki, 0)),  # V tile
                pl.BlockSpec((Cp, Dp), lambda b, qi, ki: (0, 0)),         # Wq
                pl.BlockSpec((1, Dp), lambda b, qi, ki: (0, 0)),          # bq
                pl.BlockSpec((1, Cp), lambda b, qi, ki: (0, 0)),          # bv
                pl.BlockSpec((1, 1), lambda b, qi, ki: (0, 0),            # gamma
                             memory_space=pltpu.MemorySpace.SMEM),
            ],
            out_specs=pl.BlockSpec((1, TQ, Cp), lambda b, qi, ki: (b, qi, 0)),
            scratch_shapes=[
                pltpu.VMEM((TQ, Dp), jnp.bfloat16),   # cached q projection
                pltpu.VMEM((TQ, 1), jnp.float32),     # running max
                pltpu.VMEM((TQ, 1), jnp.float32),     # running denominator
                pltpu.VMEM((TQ, Cp), jnp.float32),    # output accumulator
            ],
        ),
        compiler_params=pltpu.CompilerParams(
            dimension_semantics=("parallel", "parallel", "arbitrary"),
            vmem_limit_bytes=vmem_limit,
        ),
    )(x, k_all, v_all, wq_p, bq_p, bv_p, gamma_p)

    # Drop sequence/channel padding and restore NCHW.
    out = out[:, :S, :C]
    return jnp.transpose(out, (0, 2, 1)).reshape(B, C, H, W)


self_attention = jax.jit(_self_attention_impl)


if __name__ == "__main__":
    key = jax.random.PRNGKey(0)
    kx, kq, kk, kv, kbq, kbk, kbv = jax.random.split(key, 7)

    # Small shapes consistent with the module: in_dim divisible by 8.
    B, C, H, W = 2, 32, 16, 16
    D = C // 8

    x = jax.random.normal(kx, (B, C, H, W), jnp.float32)

    scale = 1.0 / math.sqrt(C)
    wq = jax.random.normal(kq, (C, D), jnp.float32) * scale
    wk = jax.random.normal(kk, (C, D), jnp.float32) * scale
    wv = jax.random.normal(kv, (C, C), jnp.float32) * scale
    bq = jax.random.normal(kbq, (D,), jnp.float32) * 0.01
    bk = jax.random.normal(kbk, (D,), jnp.float32) * 0.01
    bv = jax.random.normal(kbv, (C,), jnp.float32) * 0.01
    # nn.Parameter(torch.zeros(1)) initializes gamma to 0 (output == x); use a
    # nonzero value here so the attention path is actually exercised.
    gamma = jnp.float32(0.37)

    params = (wq, bq, wk, bk, wv, bv, gamma)

    out = self_attention(x, params)
    out = jax.block_until_ready(out)
    assert out.shape == (B, C, H, W)
    assert bool(jnp.all(jnp.isfinite(out)))
    print("KERNEL_OK")
</pallas_src>

<mosaic_0001>
module attributes {stable_mosaic.version = 11 : i64} {
  func.func @_kv_proj_kernel(%arg0: i32, %arg1: i32, %arg2: memref<1x256x128xf32, #tpu.memory_space<vmem>>, %arg3: memref<128x128xbf16, #tpu.memory_space<vmem>>, %arg4: memref<128x128xbf16, #tpu.memory_space<vmem>>, %arg5: memref<1x256x128xbf16, #tpu.memory_space<vmem>>, %arg6: memref<1x256x128xbf16, #tpu.memory_space<vmem>>) attributes {dimension_semantics = [#tpu.dimension_semantics<parallel>, #tpu.dimension_semantics<parallel>], iteration_bounds = array<i64: 2, 1>, scalar_prefetch = 0 : i64, scratch_operands = 0 : i64, tpu.core_type = #tpu.core_type<tc>, window_params = [{transform_indices = @transform_0, window_bounds = array<i64: 1, 256, 128>}, {pipeline_mode = #tpu.pipeline_mode<synchronous>, transform_indices = @transform_1, window_bounds = array<i64: 128, 128>}, {pipeline_mode = #tpu.pipeline_mode<synchronous>, transform_indices = @transform_2, window_bounds = array<i64: 128, 128>}, {transform_indices = @transform_3, window_bounds = array<i64: 1, 256, 128>}, {transform_indices = @transform_4, window_bounds = array<i64: 1, 256, 128>}]} {
    %c0 = arith.constant 0 : index
    %c0_0 = arith.constant 0 : index
    %c0_1 = arith.constant 0 : index
    %0 = vector.load %arg2[%c0, %c0_0, %c0_1] : memref<1x256x128xf32, #tpu.memory_space<vmem>>, vector<1x256x128xf32>
    %1 = vector.shape_cast %0 : vector<1x256x128xf32> to vector<256x128xf32>
    %2 = arith.truncf %1 : vector<256x128xf32> to vector<256x128xbf16>
    %c0_2 = arith.constant 0 : index
    %c0_3 = arith.constant 0 : index
    %3 = vector.load %arg3[%c0_2, %c0_3] : memref<128x128xbf16, #tpu.memory_space<vmem>>, vector<128x128xbf16>
    %cst = arith.constant dense<0.000000e+00> : vector<256x128xf32>
    %4 = tpu.matmul %2, %3, %cst {dimension_numbers = #tpu.dot_dimension_numbers<[1], [0], [0], [1], [0, 0, 1, 1], [], []>} : vector<256x128xbf16>, vector<128x128xbf16>, vector<256x128xf32> -> vector<256x128xf32>
    %c0_4 = arith.constant 0 : index
    %c0_5 = arith.constant 0 : index
    %5 = vector.load %arg4[%c0_4, %c0_5] : memref<128x128xbf16, #tpu.memory_space<vmem>>, vector<128x128xbf16>
    %cst_6 = arith.constant dense<0.000000e+00> : vector<256x128xf32>
    %6 = tpu.matmul %2, %5, %cst_6 {dimension_numbers = #tpu.dot_dimension_numbers<[1], [0], [0], [1], [0, 0, 1, 1], [], []>} : vector<256x128xbf16>, vector<128x128xbf16>, vector<256x128xf32> -> vector<256x128xf32>
    %7 = arith.truncf %4 : vector<256x128xf32> to vector<256x128xbf16>
    %c0_7 = arith.constant 0 : index
    %c0_8 = arith.constant 0 : index
    %c0_9 = arith.constant 0 : index
    %8 = vector.load %arg5[%c0_7, %c0_8, %c0_9] : memref<1x256x128xbf16, #tpu.memory_space<vmem>>, vector<1x256x128xbf16>
    %9 = vector.shape_cast %8 : vector<1x256x128xbf16> to vector<256x128xbf16>
    %10 = vector.shape_cast %7 : vector<256x128xbf16> to vector<1x256x128xbf16>
    tpu.vector_store %arg5[%c0_7, %c0_8, %c0_9], %10 {strides = array<i32>} : memref<1x256x128xbf16, #tpu.memory_space<vmem>>, vector<1x256x128xbf16>,
    %11 = arith.truncf %6 : vector<256x128xf32> to vector<256x128xbf16>
    %c0_10 = arith.constant 0 : index
    %c0_11 = arith.constant 0 : index
    %c0_12 = arith.constant 0 : index
    %12 = vector.load %arg6[%c0_10, %c0_11, %c0_12] : memref<1x256x128xbf16, #tpu.memory_space<vmem>>, vector<1x256x128xbf16>
    %13 = vector.shape_cast %12 : vector<1x256x128xbf16> to vector<256x128xbf16>
    %14 = vector.shape_cast %11 : vector<256x128xbf16> to vector<1x256x128xbf16>
    tpu.vector_store %arg6[%c0_10, %c0_11, %c0_12], %14 {strides = array<i32>} : memref<1x256x128xbf16, #tpu.memory_space<vmem>>, vector<1x256x128xbf16>,
    return
  }
  func.func @transform_0(%arg0: i32, %arg1: i32) -> (i32, i32, i32) {
    %c0_i32 = arith.constant 0 : i32
    %c0_i32_0 = arith.constant 0 : i32
    return %arg0, %arg1, %c0_i32 : i32, i32, i32
  }
  func.func @transform_1(%arg0: i32, %arg1: i32) -> (i32, i32) {
    %c0_i32 = arith.constant 0 : i32
    %c0_i32_0 = arith.constant 0 : i32
    %c0_i32_1 = arith.constant 0 : i32
    return %c0_i32, %c0_i32_0 : i32, i32
  }
  func.func @transform_2(%arg0: i32, %arg1: i32) -> (i32, i32) {
    %c0_i32 = arith.constant 0 : i32
    %c0_i32_0 = arith.constant 0 : i32
    %c0_i32_1 = arith.constant 0 : i32
    return %c0_i32, %c0_i32_0 : i32, i32
  }
  func.func @transform_3(%arg0: i32, %arg1: i32) -> (i32, i32, i32) {
    %c0_i32 = arith.constant 0 : i32
    %c0_i32_0 = arith.constant 0 : i32
    return %arg0, %arg1, %c0_i32 : i32, i32, i32
  }
  func.func @transform_4(%arg0: i32, %arg1: i32) -> (i32, i32, i32) {
    %c0_i32 = arith.constant 0 : i32
    %c0_i32_0 = arith.constant 0 : i32
    return %arg0, %arg1, %c0_i32 : i32, i32, i32
  }
}

module attributes {stable_mosaic.version = 11 : i64} {
  func.func @_attn_kernel(%arg0: i32, %arg1: i32, %arg2: i32, %arg3: memref<1x256x128xf32, #tpu.memory_space<vmem>>, %arg4: memref<1x256x128xbf16, #tpu.memory_space<vmem>>, %arg5: memref<1x256x128xbf16, #tpu.memory_space<vmem>>, %arg6: memref<128x128xbf16, #tpu.memory_space<vmem>>, %arg7: memref<1x128xf32, #tpu.memory_space<vmem>>, %arg8: memref<1x128xf32, #tpu.memory_space<vmem>>, %arg9: memref<1x1xf32, #tpu.memory_space<smem>>, %arg10: memref<1x256x128xf32, #tpu.memory_space<vmem>>, %arg11: memref<256x128xbf16, #tpu.memory_space<vmem>>, %arg12: memref<256x1xf32, #tpu.memory_space<vmem>>, %arg13: memref<256x1xf32, #tpu.memory_space<vmem>>, %arg14: memref<256x128xf32, #tpu.memory_space<vmem>>) attributes {dimension_semantics = [#tpu.dimension_semantics<parallel>, #tpu.dimension_semantics<parallel>, #tpu.dimension_semantics<arbitrary>], iteration_bounds = array<i64: 2, 1, 1>, scalar_prefetch = 0 : i64, scratch_operands = 4 : i64, tpu.core_type = #tpu.core_type<tc>, window_params = [{transform_indices = @transform_0, window_bounds = array<i64: 1, 256, 128>}, {transform_indices = @transform_1, window_bounds = array<i64: 1, 256, 128>}, {transform_indices = @transform_2, window_bounds = array<i64: 1, 256, 128>}, {pipeline_mode = #tpu.pipeline_mode<synchronous>, transform_indices = @transform_3, window_bounds = array<i64: 128, 128>}, {pipeline_mode = #tpu.pipeline_mode<synchronous>, transform_indices = @transform_4, window_bounds = array<i64: 1, 128>}, {pipeline_mode = #tpu.pipeline_mode<synchronous>, transform_indices = @transform_5, window_bounds = array<i64: 1, 128>}, {transform_indices = @transform_6, window_bounds = array<i64: 1, 1>}, {transform_indices = @transform_7, window_bounds = array<i64: 1, 256, 128>}]} {
    %c0_i32 = arith.constant 0 : i32
    %0 = arith.cmpi eq, %arg2, %c0_i32 : i32
    %1 = arith.extui %0 : i1 to i32
    %c0_i32_0 = arith.constant 0 : i32
    %2 = arith.cmpi ne, %1, %c0_i32_0 : i32
    scf.if %2 {
      %c0_25 = arith.constant 0 : index
      %c0_26 = arith.constant 0 : index
      %c0_27 = arith.constant 0 : index
      %35 = vector.load %arg3[%c0_25, %c0_26, %c0_27] : memref<1x256x128xf32, #tpu.memory_space<vmem>>, vector<1x256x128xf32>
      %36 = vector.shape_cast %35 : vector<1x256x128xf32> to vector<256x128xf32>
      %37 = arith.truncf %36 : vector<256x128xf32> to vector<256x128xbf16>
      %c0_28 = arith.constant 0 : index
      %c0_29 = arith.constant 0 : index
      %38 = vector.load %arg6[%c0_28, %c0_29] : memref<128x128xbf16, #tpu.memory_space<vmem>>, vector<128x128xbf16>
      %cst_30 = arith.constant dense<0.000000e+00> : vector<256x128xf32>
      %39 = tpu.matmul %37, %38, %cst_30 {dimension_numbers = #tpu.dot_dimension_numbers<[1], [0], [0], [1], [0, 0, 1, 1], [], []>} : vector<256x128xbf16>, vector<128x128xbf16>, vector<256x128xf32> -> vector<256x128xf32>
      %c0_31 = arith.constant 0 : index
      %c0_32 = arith.constant 0 : index
      %40 = vector.load %arg7[%c0_31, %c0_32] : memref<1x128xf32, #tpu.memory_space<vmem>>, vector<1x128xf32>
      %41 = vector.broadcast %40 : vector<1x128xf32> to vector<256x128xf32>
      %42 = arith.addf %39, %41 : vector<256x128xf32>
      %43 = arith.truncf %42 : vector<256x128xf32> to vector<256x128xbf16>
      %c0_33 = arith.constant 0 : index
      %c0_34 = arith.constant 0 : index
      %44 = vector.load %arg11[%c0_33, %c0_34] : memref<256x128xbf16, #tpu.memory_space<vmem>>, vector<256x128xbf16>
      tpu.vector_store %arg11[%c0_33, %c0_34], %43 {strides = array<i32>} : memref<256x128xbf16, #tpu.memory_space<vmem>>, vector<256x128xbf16>,
      %cst_35 = arith.constant 0xFF800000 : f32
      %45 = vector.broadcast %cst_35 : f32 to vector<256x1xf32>
      %c0_36 = arith.constant 0 : index
      %c0_37 = arith.constant 0 : index
      %46 = vector.load %arg12[%c0_36, %c0_37] : memref<256x1xf32, #tpu.memory_space<vmem>>, vector<256x1xf32>
      tpu.vector_store %arg12[%c0_36, %c0_37], %45 {strides = array<i32>} : memref<256x1xf32, #tpu.memory_space<vmem>>, vector<256x1xf32>,
      %cst_38 = arith.constant 0.000000e+00 : f32
      %47 = vector.broadcast %cst_38 : f32 to vector<256x1xf32>
      %c0_39 = arith.constant 0 : index
      %c0_40 = arith.constant 0 : index
      %48 = vector.load %arg13[%c0_39, %c0_40] : memref<256x1xf32, #tpu.memory_space<vmem>>, vector<256x1xf32>
      tpu.vector_store %arg13[%c0_39, %c0_40], %47 {strides = array<i32>} : memref<256x1xf32, #tpu.memory_space<vmem>>, vector<256x1xf32>,
      %cst_41 = arith.constant 0.000000e+00 : f32
      %49 = vector.broadcast %cst_41 : f32 to vector<256x128xf32>
      %c0_42 = arith.constant 0 : index
      %c0_43 = arith.constant 0 : index
      %50 = vector.load %arg14[%c0_42, %c0_43] : memref<256x128xf32, #tpu.memory_space<vmem>>, vector<256x128xf32>
      tpu.vector_store %arg14[%c0_42, %c0_43], %49 {strides = array<i32>} : memref<256x128xf32, #tpu.memory_space<vmem>>, vector<256x128xf32>,
    } else {
    }
    %c0 = arith.constant 0 : index
    %c0_1 = arith.constant 0 : index
    %c0_2 = arith.constant 0 : index
    %3 = vector.load %arg4[%c0, %c0_1, %c0_2] : memref<1x256x128xbf16, #tpu.memory_space<vmem>>, vector<1x256x128xbf16>
    %4 = vector.shape_cast %3 : vector<1x256x128xbf16> to vector<256x128xbf16>
    %c0_3 = arith.constant 0 : index
    %c0_4 = arith.constant 0 : index
    %c0_5 = arith.constant 0 : index
    %5 = vector.load %arg5[%c0_3, %c0_4, %c0_5] : memref<1x256x128xbf16, #tpu.memory_space<vmem>>, vector<1x256x128xbf16>
    %6 = vector.shape_cast %5 : vector<1x256x128xbf16> to vector<256x128xbf16>
    %c0_6 = arith.constant 0 : index
    %c0_7 = arith.constant 0 : index
    %7 = vector.load %arg11[%c0_6, %c0_7] : memref<256x128xbf16, #tpu.memory_space<vmem>>, vector<256x128xbf16>
    %cst = arith.constant dense<0.000000e+00> : vector<256x256xf32>
    %8 = tpu.matmul %7, %4, %cst {dimension_numbers = #tpu.dot_dimension_numbers<[1], [1], [0], [0], [0, 0, 1, 0], [], []>} : vector<256x128xbf16>, vector<256x128xbf16>, vector<256x256xf32> -> vector<256x256xf32>
    %c0_8 = arith.constant 0 : index
    %c0_9 = arith.constant 0 : index
    %9 = vector.load %arg12[%c0_8, %c0_9] : memref<256x1xf32, #tpu.memory_space<vmem>>, vector<256x1xf32>
    %cst_10 = arith.constant dense<0xFF800000> : vector<256xf32>
    %10 = vector.multi_reduction <maximumf>, %8, %cst_10 [1] : vector<256x256xf32> to vector<256xf32>
    %11 = vector.shape_cast %10 : vector<256xf32> to vector<256x1xf32>
    %12 = arith.maximumf %9, %11 : vector<256x1xf32>
    %13 = arith.subf %9, %12 : vector<256x1xf32>
    %14 = math.exp %13 : vector<256x1xf32>
    %15 = vector.broadcast %12 : vector<256x1xf32> to vector<256x256xf32>
    %16 = arith.subf %8, %15 : vector<256x256xf32>
    %17 = math.exp %16 : vector<256x256xf32>
    %c0_11 = arith.constant 0 : index
    %c0_12 = arith.constant 0 : index
    %18 = vector.load %arg13[%c0_11, %c0_12] : memref<256x1xf32, #tpu.memory_space<vmem>>, vector<256x1xf32>
    %19 = arith.mulf %14, %18 : vector<256x1xf32>
    %cst_13 = arith.constant dense<0.000000e+00> : vector<256xf32>
    %20 = vector.multi_reduction <add>, %17, %cst_13 [1] : vector<256x256xf32> to vector<256xf32>
    %21 = vector.shape_cast %20 : vector<256xf32> to vector<256x1xf32>
    %22 = arith.addf %19, %21 : vector<256x1xf32>
    %c0_14 = arith.constant 0 : index
    %c0_15 = arith.constant 0 : index
    %23 = vector.load %arg13[%c0_14, %c0_15] : memref<256x1xf32, #tpu.memory_space<vmem>>, vector<256x1xf32>
    tpu.vector_store %arg13[%c0_14, %c0_15], %22 {strides = array<i32>} : memref<256x1xf32, #tpu.memory_space<vmem>>, vector<256x1xf32>,
    %c0_16 = arith.constant 0 : index
    %c0_17 = arith.constant 0 : index
    %24 = vector.load %arg14[%c0_16, %c0_17] : memref<256x128xf32, #tpu.memory_space<vmem>>, vector<256x128xf32>
    %25 = vector.broadcast %14 : vector<256x1xf32> to vector<256x128xf32>
    %26 = arith.mulf %25, %24 : vector<256x128xf32>
    %27 = arith.truncf %17 : vector<256x256xf32> to vector<256x256xbf16>
    %cst_18 = arith.constant dense<0.000000e+00> : vector<256x128xf32>
    %28 = tpu.matmul %27, %6, %cst_18 {dimension_numbers = #tpu.dot_dimension_numbers<[1], [0], [0], [1], [0, 0, 1, 1], [], []>} : vector<256x256xbf16>, vector<256x128xbf16>, vector<256x128xf32> -> vector<256x128xf32>
    %29 = arith.addf %26, %28 : vector<256x128xf32>
    %c0_19 = arith.constant 0 : index
    %c0_20 = arith.constant 0 : index
    %30 = vector.load %arg14[%c0_19, %c0_20] : memref<256x128xf32, #tpu.memory_space<vmem>>, vector<256x128xf32>
    tpu.vector_store %arg14[%c0_19, %c0_20], %29 {strides = array<i32>} : memref<256x128xf32, #tpu.memory_space<vmem>>, vector<256x128xf32>,
    %c0_21 = arith.constant 0 : index
    %c0_22 = arith.constant 0 : index
    %31 = vector.load %arg12[%c0_21, %c0_22] : memref<256x1xf32, #tpu.memory_space<vmem>>, vector<256x1xf32>
    tpu.vector_store %arg12[%c0_21, %c0_22], %12 {strides = array<i32>} : memref<256x1xf32, #tpu.memory_space<vmem>>, vector<256x1xf32>,
    %c0_i32_23 = arith.constant 0 : i32
    %32 = arith.cmpi eq, %arg2, %c0_i32_23 : i32
    %33 = arith.extui %32 : i1 to i32
    %c0_i32_24 = arith.constant 0 : i32
    %34 = arith.cmpi ne, %33, %c0_i32_24 : i32
    scf.if %34 {
      %c0_25 = arith.constant 0 : index
      %c0_26 = arith.constant 0 : index
      %35 = memref.load %arg9[%c0_25, %c0_26] : memref<1x1xf32, #tpu.memory_space<smem>>
      %c0_27 = arith.constant 0 : index
      %c0_28 = arith.constant 0 : index
      %36 = vector.load %arg13[%c0_27, %c0_28] : memref<256x1xf32, #tpu.memory_space<vmem>>, vector<256x1xf32>
      %37 = tpu.reciprocal %36 : vector<256x1xf32> -> vector<256x1xf32>
      %38 = vector.broadcast %35 : f32 to vector<256x1xf32>
      %39 = arith.mulf %38, %37 : vector<256x1xf32>
      %c0_29 = arith.constant 0 : index
      %c0_30 = arith.constant 0 : index
      %40 = vector.load %arg14[%c0_29, %c0_30] : memref<256x128xf32, #tpu.memory_space<vmem>>, vector<256x128xf32>
      %41 = vector.broadcast %39 : vector<256x1xf32> to vector<256x128xf32>
      %42 = arith.mulf %40, %41 : vector<256x128xf32>
      %c0_31 = arith.constant 0 : index
      %c0_32 = arith.constant 0 : index
      %43 = vector.load %arg8[%c0_31, %c0_32] : memref<1x128xf32, #tpu.memory_space<vmem>>, vector<1x128xf32>
      %44 = vector.broadcast %35 : f32 to vector<1x128xf32>
      %45 = arith.mulf %44, %43 : vector<1x128xf32>
      %46 = vector.broadcast %45 : vector<1x128xf32> to vector<256x128xf32>
      %47 = arith.addf %42, %46 : vector<256x128xf32>
      %c0_33 = arith.constant 0 : index
      %c0_34 = arith.constant 0 : index
      %c0_35 = arith.constant 0 : index
      %48 = vector.load %arg3[%c0_33, %c0_34, %c0_35] : memref<1x256x128xf32, #tpu.memory_space<vmem>>, vector<1x256x128xf32>
      %49 = vector.shape_cast %48 : vector<1x256x128xf32> to vector<256x128xf32>
      %50 = arith.addf %47, %49 : vector<256x128xf32>
      %c0_36 = arith.constant 0 : index
      %c0_37 = arith.constant 0 : index
      %c0_38 = arith.constant 0 : index
      %51 = vector.load %arg10[%c0_36, %c0_37, %c0_38] : memref<1x256x128xf32, #tpu.memory_space<vmem>>, vector<1x256x128xf32>
      %52 = vector.shape_cast %51 : vector<1x256x128xf32> to vector<256x128xf32>
      %53 = vector.shape_cast %50 : vector<256x128xf32> to vector<1x256x128xf32>
      tpu.vector_store %arg10[%c0_36, %c0_37, %c0_38], %53 {strides = array<i32>} : memref<1x256x128xf32, #tpu.memory_space<vmem>>, vector<1x256x128xf32>,
    } else {
    }
    return
  }
  func.func @transform_0(%arg0: i32, %arg1: i32, %arg2: i32) -> (i32, i32, i32) {
    %c0_i32 = arith.constant 0 : i32
    %c0_i32_0 = arith.constant 0 : i32
    return %arg0, %arg1, %c0_i32 : i32, i32, i32
  }
  func.func @transform_1(%arg0: i32, %arg1: i32, %arg2: i32) -> (i32, i32, i32) {
    %c0_i32 = arith.constant 0 : i32
    %c0_i32_0 = arith.constant 0 : i32
    return %arg0, %arg2, %c0_i32 : i32, i32, i32
  }
  func.func @transform_2(%arg0: i32, %arg1: i32, %arg2: i32) -> (i32, i32, i32) {
    %c0_i32 = arith.constant 0 : i32
    %c0_i32_0 = arith.constant 0 : i32
    return %arg0, %arg2, %c0_i32 : i32, i32, i32
  }
  func.func @transform_3(%arg0: i32, %arg1: i32, %arg2: i32) -> (i32, i32) {
    %c0_i32 = arith.constant 0 : i32
    %c0_i32_0 = arith.constant 0 : i32
    %c0_i32_1 = arith.constant 0 : i32
    return %c0_i32, %c0_i32_0 : i32, i32
  }
  func.func @transform_4(%arg0: i32, %arg1: i32, %arg2: i32) -> (i32, i32) {
    %c0_i32 = arith.constant 0 : i32
    %c0_i32_0 = arith.constant 0 : i32
    %c0_i32_1 = arith.constant 0 : i32
    return %c0_i32, %c0_i32_0 : i32, i32
  }
  func.func @transform_5(%arg0: i32, %arg1: i32, %arg2: i32) -> (i32, i32) {
    %c0_i32 = arith.constant 0 : i32
    %c0_i32_0 = arith.constant 0 : i32
    %c0_i32_1 = arith.constant 0 : i32
    return %c0_i32, %c0_i32_0 : i32, i32
  }
  func.func @transform_6(%arg0: i32, %arg1: i32, %arg2: i32) -> (i32, i32) {
    %c0_i32 = arith.constant 0 : i32
    %c0_i32_0 = arith.constant 0 : i32
    %c0_i32_1 = arith.constant 0 : i32
    return %c0_i32, %c0_i32_0 : i32, i32
  }
  func.func @transform_7(%arg0: i32, %arg1: i32, %arg2: i32) -> (i32, i32, i32) {
    %c0_i32 = arith.constant 0 : i32
    %c0_i32_0 = arith.constant 0 : i32
    return %arg0, %arg1, %c0_i32 : i32, i32, i32
  }
}

</mosaic_0001>

<llo_original>
// kernel: _self_attention_impl.2
$region0: #{_self_attention_impl.2}
  #allocation0 [shape = 'u32[]', space=smem, size = 0x4, offset = 0x4, fixed_abs, tag = 'smem constant byte address 0x4 - core index']
  #allocation1 [shape = 'u32[144,128]{1,0:T(1,128)}', space=vmem, size = 0x12000, scoped, tag = 'internal scratch']
  %s0 = inlined_call_operand.vmem [shape: f32[2,256,128], index: 0, kind: input, shape index: {}]
  %s1 = inlined_call_operand.vmem [shape: bf16[128,128], index: 1, kind: input, shape index: {}]
  %s2 = inlined_call_operand.vmem [shape: bf16[128,128], index: 2, kind: input, shape index: {}]
  %s3 = inlined_call_operand.vmem [shape: bf16[2,256,128], index: 3, kind: output, shape index: {0}]
  %s4 = inlined_call_operand.vmem [shape: bf16[2,256,128], index: 4, kind: output, shape index: {1}]
  %5 = xla_tuple %s3, %s4
  %s6 = sld [smem:[#allocation0]]
  $region53: #{_self_attention_impl.2} parent=0
    _
  %s8 = ssub.s32 1, %s6
  %s9 = scalar_select 0, %s8, %s6
  loop: start=0, step=1, limit=4
  $region2: #{_self_attention_impl.2} parent=0 // loop_pre_header
    _
  $region3: #{_self_attention_impl.2} parent=0 // loop_header
    %s11 = sphi 0, %s15
    %p12 = scmp.ge.s32.totalorder %s11, 4
    %s18 = sphi 0, %s30
    %s19 = sphi 0, %s26
    %s20 = sphi 0, %s18
    %s21 = sphi 0, %s19
    %s22 = sphi 0, %s20
    %s23 = sphi 0, %s21
    %s35 = sphi 0, %s37
    %s38 = sphi 0, %s35
    %s39 = sphi 0, %s38
    %s55 = sphi 0, %s39
    %s59 = sphi 0, %s59
    %s61 = sphi 0, %s59
    %s62 = sphi 0, %s61
    %s76 = sphi 0, %s62
    %s80 = sphi 0, %s80
    %s82 = sphi 0, %s80
    %s83 = sphi 0, %s82
    %s97 = sphi 0, %s83
    %s105 = sphi 0, %s107
    %s108 = sphi 0, %s105
    %s109 = sphi 0, %s108
    %s125 = sphi 0, %s109
    %s133 = sphi 0, %s135
    %s136 = sphi 0, %s133
    %s137 = sphi 0, %s136
    %s153 = sphi 0, %s137
  $region4: #{_self_attention_impl.2} parent=0 // loop_header_branch
    %14 = sbr.rel (%p12) target = $region8
  $region5: #{_self_attention_impl.2} parent=0 // loop_body
    %s16 = ssub.s32 %s11, 1
    %s17 = ssub.s32 %s11, 2
    %s24 = sadd.s32 1, %s19
    %p25 = scmp.ge.s32.totalorder %s24, 1
    %s26 = scalar_select %p25, 0, %s24
    %s27 = sadd.s32 1, %s18
    %s28 = scalar_select %p25, %s27, %s18
    %p29 = scmp.ge.s32.totalorder %s28, 2
    %s30 = scalar_select %p29, 0, %s28
    %s31 = ssub.s32 %s18, %s30
    %s32 = ssub.s32 %s19, %s26
    %s33 = sor.u32 %s31, %s32
    %p34 = scmp.eq.s32.totalorder %s33, 0
    %s36 = sadd.s32 %s35, 1
    %s37 = scalar_select %p34, %s35, %s36
    %p40 = pneg %p34
    %p41 = scmp.eq.s32.totalorder %s11, 1
    %p42 = por %p40, %p41
    %p43 = scmp.ne.s32.totalorder %s35, %s38
    %p44 = scmp.eq.s32.totalorder %s11, 0
    %p45 = por %p43, %p44
    %p46 = scmp.ne.s32.totalorder %s35, %s38
    %p47 = scmp.eq.s32.totalorder %s16, 1
    %p48 = por %p46, %p47
    %p49 = scmp.ne.s32.totalorder %s38, %s39
    %p50 = scmp.eq.s32.totalorder %s16, 0
    %p51 = por %p49, %p50
    %p52 = scmp.ne.s32.totalorder %s38, %s39
    %p53 = scmp.eq.s32.totalorder %s17, 1
    %p54 = por %p52, %p53
    %p56 = scmp.ne.s32.totalorder %s39, %s55
    %p57 = scmp.eq.s32.totalorder %s17, 0
    %p58 = por %p56, %p57
    %s60 = sadd.s32 %s59, 1
    %p63 = scmp.eq.s32.totalorder %s11, 1
    %p64 = scmp.ne.s32.totalorder %s59, %s61
    %p65 = scmp.eq.s32.totalorder %s11, 0
    %p66 = por %p64, %p65
    %p67 = scmp.ne.s32.totalorder %s59, %s61
    %p68 = scmp.eq.s32.totalorder %s16, 1
    %p69 = por %p67, %p68
    %p70 = scmp.ne.s32.totalorder %s61, %s62
    %p71 = scmp.eq.s32.totalorder %s16, 0
    %p72 = por %p70, %p71
    %p73 = scmp.ne.s32.totalorder %s61, %s62
    %p74 = scmp.eq.s32.totalorder %s17, 1
    %p75 = por %p73, %p74
    %p77 = scmp.ne.s32.totalorder %s62, %s76
    %p78 = scmp.eq.s32.totalorder %s17, 0
    %p79 = por %p77, %p78
    %s81 = sadd.s32 %s80, 1
    %p84 = scmp.eq.s32.totalorder %s11, 1
    %p85 = scmp.ne.s32.totalorder %s80, %s82
    %p86 = scmp.eq.s32.totalorder %s11, 0
    %p87 = por %p85, %p86
    %p88 = scmp.ne.s32.totalorder %s80, %s82
    %p89 = scmp.eq.s32.totalorder %s16, 1
    %p90 = por %p88, %p89
    %p91 = scmp.ne.s32.totalorder %s82, %s83
    %p92 = scmp.eq.s32.totalorder %s16, 0
    %p93 = por %p91, %p92
    %p94 = scmp.ne.s32.totalorder %s82, %s83
    %p95 = scmp.eq.s32.totalorder %s17, 1
    %p96 = por %p94, %p95
    %p98 = scmp.ne.s32.totalorder %s83, %s97
    %p99 = scmp.eq.s32.totalorder %s17, 0
    %p100 = por %p98, %p99
    %s101 = ssub.s32 %s18, %s30
    %s102 = ssub.s32 %s19, %s26
    %s103 = sor.u32 %s101, %s102
    %p104 = scmp.eq.s32.totalorder %s103, 0
    %s106 = sadd.s32 %s105, 1
    %s107 = scalar_select %p104, %s105, %s106
    %p110 = pneg %p104
    %p111 = scmp.eq.s32.totalorder %s11, 1
    %p112 = por %p110, %p111
    %p113 = scmp.ne.s32.totalorder %s105, %s108
    %p114 = scmp.eq.s32.totalorder %s11, 0
    %p115 = por %p113, %p114
    %p116 = scmp.ne.s32.totalorder %s105, %s108
    %p117 = scmp.eq.s32.totalorder %s16, 1
    %p118 = por %p116, %p117
    %p119 = scmp.ne.s32.totalorder %s108, %s109
    %p120 = scmp.eq.s32.totalorder %s16, 0
    %p121 = por %p119, %p120
    %p122 = scmp.ne.s32.totalorder %s108, %s109
    %p123 = scmp.eq.s32.totalorder %s17, 1
    %p124 = por %p122, %p123
    %p126 = scmp.ne.s32.totalorder %s109, %s125
    %p127 = scmp.eq.s32.totalorder %s17, 0
    %p128 = por %p126, %p127
    %s129 = ssub.s32 %s18, %s30
    %s130 = ssub.s32 %s19, %s26
    %s131 = sor.u32 %s129, %s130
    %p132 = scmp.eq.s32.totalorder %s131, 0
    %s134 = sadd.s32 %s133, 1
    %s135 = scalar_select %p132, %s133, %s134
    %p138 = pneg %p132
    %p139 = scmp.eq.s32.totalorder %s11, 1
    %p140 = por %p138, %p139
    %p141 = scmp.ne.s32.totalorder %s133, %s136
    %p142 = scmp.eq.s32.totalorder %s11, 0
    %p143 = por %p141, %p142
    %p144 = scmp.ne.s32.totalorder %s133, %s136
    %p145 = scmp.eq.s32.totalorder %s16, 1
    %p146 = por %p144, %p145
    %p147 = scmp.ne.s32.totalorder %s136, %s137
    %p148 = scmp.eq.s32.totalorder %s16, 0
    %p149 = por %p147, %p148
    %p150 = scmp.ne.s32.totalorder %s136, %s137
    %p151 = scmp.eq.s32.totalorder %s17, 1
    %p152 = por %p150, %p151
    %p154 = scmp.ne.s32.totalorder %s137, %s153
    %p155 = scmp.eq.s32.totalorder %s17, 0
    %p156 = por %p154, %p155
    %p157 = scmp.le.s32.totalorder 1, %s11
    %p158 = scmp.lt.s32.totalorder %s11, 3
    %p159 = pnand %p157, %p158
    %p160 = pneg %p159
    // Predicated region
    $region9: #{_self_attention_impl.2} parent=5 // pred_check
      _
    $region10: #{_self_attention_impl.2} parent=5 // pred_check_branch
      %162 = sbr.rel (%p159) target = $region12
    $region11: #{_self_attention_impl.2} parent=5 // pred_region
      %s163 = ssub.s32 %s11, 1
      // Predicated region
      $region13: #{_self_attention_impl.2} parent=11 // pred_check
        %p164 = pneg %p72
      $region14: #{_self_attention_impl.2} parent=11 // pred_check_branch
        %166 = sbr.rel (%p164) target = $region16
      $region15: #{_self_attention_impl.2} parent=11 // pred_region
        _
      $region16: #{_self_attention_impl.2} parent=11 // pred_fallthru
        _
      // Predicated region
      $region17: #{_self_attention_impl.2} parent=11 // pred_check
        %p167 = pneg %p93
      $region18: #{_self_attention_impl.2} parent=11 // pred_check_branch
        %169 = sbr.rel (%p167) target = $region20
      $region19: #{_self_attention_impl.2} parent=11 // pred_region
        _
      $region20: #{_self_attention_impl.2} parent=11 // pred_fallthru
        _
    $region12: #{_self_attention_impl.2} parent=5 // pred_fallthru
      _
    %p170 = scmp.lt.s32.totalorder %s11, 2
    // Predicated region
    $region21: #{_self_attention_impl.2} parent=5 // pred_check
      %p171 = pneg %p170
    $region22: #{_self_attention_impl.2} parent=5 // pred_check_branch
      %173 = sbr.rel (%p171) target = $region24
    $region23: #{_self_attention_impl.2} parent=5 // pred_region
      // Predicated region
      $region25: #{_self_attention_impl.2} parent=23 // pred_check
        %p174 = pneg %p45
      $region26: #{_self_attention_impl.2} parent=23 // pred_check_branch
        %176 = sbr.rel (%p174) target = $region28
      $region27: #{_self_attention_impl.2} parent=23 // pred_region
        %s177 = smul.u32 32, %s19
        %p178 = scmp.lt.s32.totalorder %s18, 1
        %s179 = scalar_select %p178, %s18, 1
        %p180 = scmp.lt.s32.totalorder %s177, 31
        %s181 = scalar_select %p180, %s177, 31
        %s182 = smul.addr %s179, 32
        %s183 = sadd.s32 %s181, %s182
        %s184 = smul.addr %s183, 8
        %s185 = scalar_lea.vmem %s0, %s184
        %s186 = smul.u32 32, %s19
      $region28: #{_self_attention_impl.2} parent=23 // pred_fallthru
        _
    $region24: #{_self_attention_impl.2} parent=5 // pred_fallthru
      _
    %p187 = scmp.le.s32.totalorder 1, %s11
    %p188 = scmp.lt.s32.totalorder %s11, 3
    %p189 = pnand %p187, %p188
    %p190 = pneg %p189
    // Predicated region
    $region29: #{_self_attention_impl.2} parent=5 // pred_check
      _
    $region30: #{_self_attention_impl.2} parent=5 // pred_check_branch
      %192 = sbr.rel (%p189) target = $region32
    $region31: #{_self_attention_impl.2} parent=5 // pred_region
      %s193 = ssub.s32 %s11, 1
      %s194 = smul.u32 32, %s21
      %p195 = scmp.lt.s32.totalorder %s20, 1
      %s196 = scalar_select %p195, %s20, 1
      %p197 = scmp.lt.s32.totalorder %s194, 31
      %s198 = scalar_select %p197, %s194, 31
      %s199 = smul.addr %s196, 32
      %s200 = sadd.s32 %s198, %s199
      %s201 = smul.addr %s200, 8
      %s202 = scalar_lea.vmem %s0, %s201
      %p203 = pneg %p51
      %p204 = pneg %p48
      %p205 = pneg %p72
      %p206 = pneg %p69
      %p207 = pneg %p93
      %p208 = pneg %p90
      %p209 = pneg %p121
      %p210 = pneg %p118
      %s211 = smul.u32 32, %s21
      %p212 = scmp.lt.s32.totalorder %s20, 1
      %s213 = scalar_select %p212, %s20, 1
      %p214 = scmp.lt.s32.totalorder %s211, 31
      %s215 = scalar_select %p214, %s211, 31
      %s216 = smul.addr %s213, 32
      %s217 = sadd.s32 %s215, %s216
      %s218 = smul.addr %s217, 4
      %s219 = scalar_lea.vmem %s3, %s218
      %p220 = pneg %p149
      %p221 = pneg %p146
      %s222 = smul.u32 32, %s21
      %p223 = scmp.lt.s32.totalorder %s20, 1
      %s224 = scalar_select %p223, %s20, 1
      %p225 = scmp.lt.s32.totalorder %s222, 31
      %s226 = scalar_select %p225, %s222, 31
      %s227 = smul.addr %s224, 32
      %s228 = sadd.s32 %s226, %s227
      %s229 = smul.addr %s228, 4
      %s230 = scalar_lea.vmem %s4, %s229
      %s231 = smul.u32 32, %s21
      %p232 = scmp.lt.s32.totalorder %s20, 1
      %s233 = scalar_select %p232, %s20, 1
      %p234 = scmp.lt.s32.totalorder %s231, 31
      %s235 = scalar_select %p234, %s231, 31
      %s236 = smul.addr %s233, 32
      %s237 = sadd.s32 %s235, %s236
      %s238 = smul.addr %s237, 8
      %s239 = scalar_lea.vmem %s0, %s238
      %s240 = smul.u32 32, %s21
      %s241 = smul.u32 32, %s21
      %p242 = scmp.lt.s32.totalorder %s20, 1
      %s243 = scalar_select %p242, %s20, 1
      %p244 = scmp.lt.s32.totalorder %s241, 31
      %s245 = scalar_select %p244, %s241, 31
      %s246 = smul.addr %s243, 32
      %s247 = sadd.s32 %s245, %s246
      %s248 = smul.addr %s247, 4
      %s249 = scalar_lea.vmem %s3, %s248
      %s250 = smul.u32 32, %s21
      %s251 = smul.u32 32, %s21
      %p252 = scmp.lt.s32.totalorder %s20, 1
      %s253 = scalar_select %p252, %s20, 1
      %p254 = scmp.lt.s32.totalorder %s251, 31
      %s255 = scalar_select %p254, %s251, 31
      %s256 = smul.addr %s253, 32
      %s257 = sadd.s32 %s255, %s256
      %s258 = smul.addr %s257, 4
      %s259 = scalar_lea.vmem %s4, %s258
      %s260 = smul.u32 32, %s21
      %v262 = vld [vmem:[%s239] sm:$0xff]
      %v263 = vld [vmem:[%s239 + $0x8] sm:$0xff]
      %v264 = vld [vmem:[%s239 + $0x10] sm:$0xff]
      %v265 = vld [vmem:[%s239 + $0x18] sm:$0xff]
      %v266 = vld [vmem:[%s239 + $0x20] sm:$0xff]
      %v267 = vld [vmem:[%s239 + $0x28] sm:$0xff]
      %v268 = vld [vmem:[%s239 + $0x30] sm:$0xff]
      %v269 = vld [vmem:[%s239 + $0x38] sm:$0xff]
      %v270 = vld [vmem:[%s239 + $0x40] sm:$0xff]
      %v271 = vld [vmem:[%s239 + $0x48] sm:$0xff]
      %v272 = vld [vmem:[%s239 + $0x50] sm:$0xff]
      %v273 = vld [vmem:[%s239 + $0x58] sm:$0xff]
      %v274 = vld [vmem:[%s239 + $0x60] sm:$0xff]
      %v275 = vld [vmem:[%s239 + $0x68] sm:$0xff]
      %v276 = vld [vmem:[%s239 + $0x70] sm:$0xff]
      %v277 = vld [vmem:[%s239 + $0x78] sm:$0xff]
      %v278 = vld [vmem:[%s239 + $0x80] sm:$0xff]
      %v279 = vld [vmem:[%s239 + $0x88] sm:$0xff]
      %v280 = vld [vmem:[%s239 + $0x90] sm:$0xff]
      %v281 = vld [vmem:[%s239 + $0x98] sm:$0xff]
      %v282 = vld [vmem:[%s239 + $0xa0] sm:$0xff]
      %v283 = vld [vmem:[%s239 + $0xa8] sm:$0xff]
      %v284 = vld [vmem:[%s239 + $0xb0] sm:$0xff]
      %v285 = vld [vmem:[%s239 + $0xb8] sm:$0xff]
      %v286 = vld [vmem:[%s239 + $0xc0] sm:$0xff]
      %v287 = vld [vmem:[%s239 + $0xc8] sm:$0xff]
      %v288 = vld [vmem:[%s239 + $0xd0] sm:$0xff]
      %v289 = vld [vmem:[%s239 + $0xd8] sm:$0xff]
      %v290 = vld [vmem:[%s239 + $0xe0] sm:$0xff]
      %v291 = vld [vmem:[%s239 + $0xe8] sm:$0xff]
      %v292 = vld [vmem:[%s239 + $0xf0] sm:$0xff]
      %v293 = vld [vmem:[%s239 + $0xf8] sm:$0xff]
      %v294 = vpack.c.bf16 %v263, %v262
      %v295 = vpack.c.bf16 %v265, %v264
      %v296 = vpack.c.bf16 %v267, %v266
      %v297 = vpack.c.bf16 %v269, %v268
      %v298 = vpack.c.bf16 %v271, %v270
      %v299 = vpack.c.bf16 %v273, %v272
      %v300 = vpack.c.bf16 %v275, %v274
      %v301 = vpack.c.bf16 %v277, %v276
      %v302 = vpack.c.bf16 %v279, %v278
      %v303 = vpack.c.bf16 %v281, %v280
      %v304 = vpack.c.bf16 %v283, %v282
      %v305 = vpack.c.bf16 %v285, %v284
      %v306 = vpack.c.bf16 %v287, %v286
      %v307 = vpack.c.bf16 %v289, %v288
      %v308 = vpack.c.bf16 %v291, %v290
      %v309 = vpack.c.bf16 %v293, %v292
      %v310 = vld [vmem:[%s1] sm:$0xf]
      %v311 = vld [vmem:[%s1 + $0x4] sm:$0xf]
      %v312 = vld [vmem:[%s1 + $0x8] sm:$0xf]
      %v313 = vld [vmem:[%s1 + $0xc] sm:$0xf]
      %v314 = vld [vmem:[%s1 + $0x10] sm:$0xf]
      %v315 = vld [vmem:[%s1 + $0x14] sm:$0xf]
      %v316 = vld [vmem:[%s1 + $0x18] sm:$0xf]
      %v317 = vld [vmem:[%s1 + $0x1c] sm:$0xf]
      %v318 = vld [vmem:[%s1 + $0x20] sm:$0xf]
      %v319 = vld [vmem:[%s1 + $0x24] sm:$0xf]
      %v320 = vld [vmem:[%s1 + $0x28] sm:$0xf]
      %v321 = vld [vmem:[%s1 + $0x2c] sm:$0xf]
      %v322 = vld [vmem:[%s1 + $0x30] sm:$0xf]
      %v323 = vld [vmem:[%s1 + $0x34] sm:$0xf]
      %v324 = vld [vmem:[%s1 + $0x38] sm:$0xf]
      %v325 = vld [vmem:[%s1 + $0x3c] sm:$0xf]
      %v342 = vunpack.c.l.b16 %v310
      %v343 = vunpack.c.l.b16 %v311
      %v344 = vunpack.c.l.b16 %v312
      %v345 = vunpack.c.l.b16 %v313
      %v346 = vunpack.c.l.b16 %v314
      %v347 = vunpack.c.l.b16 %v315
      %v348 = vunpack.c.l.b16 %v316
      %v349 = vunpack.c.l.b16 %v317
      %v350 = vunpack.c.l.b16 %v318
      %v351 = vunpack.c.l.b16 %v319
      %v352 = vunpack.c.l.b16 %v320
      %v353 = vunpack.c.l.b16 %v321
      %v354 = vunpack.c.l.b16 %v322
      %v355 = vunpack.c.l.b16 %v323
      %v356 = vunpack.c.l.b16 %v324
      %v357 = vunpack.c.l.b16 %v325
      %v358 = vpack.c.b16 %v343, %v342
      %v359 = vpack.c.b16 %v345, %v344
      %v360 = vpack.c.b16 %v347, %v346
      %v361 = vpack.c.b16 %v349, %v348
      %v362 = vpack.c.b16 %v351, %v350
      %v363 = vpack.c.b16 %v353, %v352
      %v364 = vpack.c.b16 %v355, %v354
      %v365 = vpack.c.b16 %v357, %v356
      %374 = vmatprep.subr.bf16.mxu0 0
      %375 = vmatpush1.bf16.msra.mxu0 %v365
      %376 = vmatprep.subr.bf16.mxu0 0
      %377 = vmatpush1.bf16.msra.mxu0 %v364
      %378 = vmatprep.subr.bf16.mxu0 0
      %379 = vmatpush1.bf16.msra.mxu0 %v363
      %380 = vmatprep.subr.bf16.mxu0 0
      %381 = vmatpush1.bf16.msra.mxu0 %v362
      %382 = vmatprep.subr.bf16.mxu0 0
      %383 = vmatpush1.bf16.msra.mxu0 %v361
      %384 = vmatprep.subr.bf16.mxu0 0
      %385 = vmatpush1.bf16.msra.mxu0 %v360
      %386 = vmatprep.subr.bf16.mxu0 0
      %387 = vmatpush1.bf16.msra.mxu0 %v359
      %388 = vmatprep.subr.bf16.mxu0 0
      %389 = vmatpush1.bf16.msra.mxu0 %v358
      %390 = vmatprep.subr.bf16.mxu0 0
      %391 = vmatpush2.bf16.msra.mxu0 0
      %392 = vmatprep.subr.bf16.mxu0 0
      %393 = vmatpush2.bf16.msra.mxu0 0
      %394 = vmatprep.subr.bf16.mxu0 0
      %395 = vmatpush2.bf16.msra.mxu0 0
      %396 = vmatprep.subr.bf16.mxu0 0
      %397 = vmatpush2.bf16.msra.mxu0 0
      %398 = vmatprep.subr.bf16.mxu0 0
      %399 = vmatpush2.bf16.msra.mxu0 0
      %400 = vmatprep.subr.bf16.mxu0 0
      %401 = vmatpush2.bf16.msra.mxu0 0
      %402 = vmatprep.subr.bf16.mxu0 0
      %403 = vmatpush2.bf16.msra.mxu0 0
      %404 = vmatprep.subr.bf16.mxu0 0
      %405 = vmatpush2.bf16.msra.mxu0 0
      %406 = vmatprep.mubr.bf16.mxu0 0
      %407 = vmatmul.mubr.bf16.gmra.mxu0 %v294
      %v408 = vpop.f32.mrf.mxu0
      %v409 = vadd.f32 0.0, %v408
      %v410 = vpop.f32.mrf.mxu0
      %v411 = vpop.f32.mrf.mxu0
      %v412 = vadd.f32 0.0, %v411
      %v413 = vpop.f32.mrf.mxu0
      %414 = vmatprep.mubr.bf16.mxu0 0
      %415 = vmatmul.mubr.bf16.gmra.mxu0 %v295
      %v416 = vpop.f32.mrf.mxu0
      %v417 = vadd.f32 0.0, %v416
      %v418 = vpop.f32.mrf.mxu0
      %v419 = vpop.f32.mrf.mxu0
      %v420 = vadd.f32 0.0, %v419
      %v421 = vpop.f32.mrf.mxu0
      %422 = vmatprep.mubr.bf16.mxu0 0
      %423 = vmatmul.mubr.bf16.gmra.mxu0 %v296
      %v424 = vpop.f32.mrf.mxu0
      %v425 = vadd.f32 0.0, %v424
      %v426 = vpop.f32.mrf.mxu0
      %v427 = vpop.f32.mrf.mxu0
      %v428 = vadd.f32 0.0, %v427
      %v429 = vpop.f32.mrf.mxu0
      %430 = vmatprep.mubr.bf16.mxu0 0
      %431 = vmatmul.mubr.bf16.gmra.mxu0 %v297
      %v432 = vpop.f32.mrf.mxu0
      %v433 = vadd.f32 0.0, %v432
      %v434 = vpop.f32.mrf.mxu0
      %v435 = vpop.f32.mrf.mxu0
      %v436 = vadd.f32 0.0, %v435
      %v437 = vpop.f32.mrf.mxu0
      %438 = vmatprep.mubr.bf16.mxu0 0
      %439 = vmatmul.mubr.bf16.gmra.mxu0 %v298
      %v440 = vpop.f32.mrf.mxu0
      %v441 = vadd.f32 0.0, %v440
      %v442 = vpop.f32.mrf.mxu0
      %v443 = vpop.f32.mrf.mxu0
      %v444 = vadd.f32 0.0, %v443
      %v445 = vpop.f32.mrf.mxu0
      %446 = vmatprep.mubr.bf16.mxu0 0
      %447 = vmatmul.mubr.bf16.gmra.mxu0 %v299
      %v448 = vpop.f32.mrf.mxu0
      %v449 = vadd.f32 0.0, %v448
      %v450 = vpop.f32.mrf.mxu0
      %v451 = vpop.f32.mrf.mxu0
      %v452 = vadd.f32 0.0, %v451
      %v453 = vpop.f32.mrf.mxu0
      %454 = vmatprep.mubr.bf16.mxu0 0
      %455 = vmatmul.mubr.bf16.gmra.mxu0 %v300
      %v456 = vpop.f32.mrf.mxu0
      %v457 = vadd.f32 0.0, %v456
      %v458 = vpop.f32.mrf.mxu0
      %v459 = vpop.f32.mrf.mxu0
      %v460 = vadd.f32 0.0, %v459
      %v461 = vpop.f32.mrf.mxu0
      %462 = vmatprep.mubr.bf16.mxu0 0
      %463 = vmatmul.mubr.bf16.gmra.mxu0 %v301
      %v464 = vpop.f32.mrf.mxu0
      %v465 = vadd.f32 0.0, %v464
      %v466 = vpop.f32.mrf.mxu0
      %v467 = vpop.f32.mrf.mxu0
      %v468 = vadd.f32 0.0, %v467
      %v469 = vpop.f32.mrf.mxu0
      %470 = vmatprep.mubr.bf16.mxu0 0
      %471 = vmatmul.mubr.bf16.gmra.mxu0 %v302
      %v472 = vpop.f32.mrf.mxu0
      %v473 = vadd.f32 0.0, %v472
      %v474 = vpop.f32.mrf.mxu0
      %v475 = vpop.f32.mrf.mxu0
      %v476 = vadd.f32 0.0, %v475
      %v477 = vpop.f32.mrf.mxu0
      %478 = vmatprep.mubr.bf16.mxu0 0
      %479 = vmatmul.mubr.bf16.gmra.mxu0 %v303
      %v480 = vpop.f32.mrf.mxu0
      %v481 = vadd.f32 0.0, %v480
      %v482 = vpop.f32.mrf.mxu0
      %v483 = vpop.f32.mrf.mxu0
      %v484 = vadd.f32 0.0, %v483
      %v485 = vpop.f32.mrf.mxu0
      %486 = vmatprep.mubr.bf16.mxu0 0
      %487 = vmatmul.mubr.bf16.gmra.mxu0 %v304
      %v488 = vpop.f32.mrf.mxu0
      %v489 = vadd.f32 0.0, %v488
      %v490 = vpop.f32.mrf.mxu0
      %v491 = vpop.f32.mrf.mxu0
      %v492 = vadd.f32 0.0, %v491
      %v493 = vpop.f32.mrf.mxu0
      %494 = vmatprep.mubr.bf16.mxu0 0
      %495 = vmatmul.mubr.bf16.gmra.mxu0 %v305
      %v496 = vpop.f32.mrf.mxu0
      %v497 = vadd.f32 0.0, %v496
      %v498 = vpop.f32.mrf.mxu0
      %v499 = vpop.f32.mrf.mxu0
      %v500 = vadd.f32 0.0, %v499
      %v501 = vpop.f32.mrf.mxu0
      %502 = vmatprep.mubr.bf16.mxu0 0
      %503 = vmatmul.mubr.bf16.gmra.mxu0 %v306
      %v504 = vpop.f32.mrf.mxu0
      %v505 = vadd.f32 0.0, %v504
      %v506 = vpop.f32.mrf.mxu0
      %v507 = vpop.f32.mrf.mxu0
      %v508 = vadd.f32 0.0, %v507
      %v509 = vpop.f32.mrf.mxu0
      %510 = vmatprep.mubr.bf16.mxu0 0
      %511 = vmatmul.mubr.bf16.gmra.mxu0 %v307
      %v512 = vpop.f32.mrf.mxu0
      %v513 = vadd.f32 0.0, %v512
      %v514 = vpop.f32.mrf.mxu0
      %v515 = vpop.f32.mrf.mxu0
      %v516 = vadd.f32 0.0, %v515
      %v517 = vpop.f32.mrf.mxu0
      %518 = vmatprep.mubr.bf16.mxu0 0
      %519 = vmatmul.mubr.bf16.gmra.mxu0 %v308
      %v520 = vpop.f32.mrf.mxu0
      %v521 = vadd.f32 0.0, %v520
      %v522 = vpop.f32.mrf.mxu0
      %v523 = vpop.f32.mrf.mxu0
      %v524 = vadd.f32 0.0, %v523
      %v525 = vpop.f32.mrf.mxu0
      %526 = vmatprep.mubr.bf16.mxu0 0
      %527 = vmatmul.mubr.bf16.gmra.mxu0 %v309
      %v528 = vpop.f32.mrf.mxu0
      %v529 = vadd.f32 0.0, %v528
      %v530 = vpop.f32.mrf.mxu0
      %v531 = vpop.f32.mrf.mxu0
      %v532 = vadd.f32 0.0, %v531
      %v533 = vpop.f32.mrf.mxu0
      %534 = vdwg.mxu0
      %v535 = vld [vmem:[%s2] sm:$0xf]
      %v536 = vld [vmem:[%s2 + $0x4] sm:$0xf]
      %v537 = vld [vmem:[%s2 + $0x8] sm:$0xf]
      %v538 = vld [vmem:[%s2 + $0xc] sm:$0xf]
      %v539 = vld [vmem:[%s2 + $0x10] sm:$0xf]
      %v540 = vld [vmem:[%s2 + $0x14] sm:$0xf]
      %v541 = vld [vmem:[%s2 + $0x18] sm:$0xf]
      %v542 = vld [vmem:[%s2 + $0x1c] sm:$0xf]
      %v543 = vld [vmem:[%s2 + $0x20] sm:$0xf]
      %v544 = vld [vmem:[%s2 + $0x24] sm:$0xf]
      %v545 = vld [vmem:[%s2 + $0x28] sm:$0xf]
      %v546 = vld [vmem:[%s2 + $0x2c] sm:$0xf]
      %v547 = vld [vmem:[%s2 + $0x30] sm:$0xf]
      %v548 = vld [vmem:[%s2 + $0x34] sm:$0xf]
      %v549 = vld [vmem:[%s2 + $0x38] sm:$0xf]
      %v550 = vld [vmem:[%s2 + $0x3c] sm:$0xf]
      %v567 = vunpack.c.l.b16 %v535
      %v568 = vunpack.c.l.b16 %v536
      %v569 = vunpack.c.l.b16 %v537
      %v570 = vunpack.c.l.b16 %v538
      %v571 = vunpack.c.l.b16 %v539
      %v572 = vunpack.c.l.b16 %v540
      %v573 = vunpack.c.l.b16 %v541
      %v574 = vunpack.c.l.b16 %v542
      %v575 = vunpack.c.l.b16 %v543
      %v576 = vunpack.c.l.b16 %v544
      %v577 = vunpack.c.l.b16 %v545
      %v578 = vunpack.c.l.b16 %v546
      %v579 = vunpack.c.l.b16 %v547
      %v580 = vunpack.c.l.b16 %v548
      %v581 = vunpack.c.l.b16 %v549
      %v582 = vunpack.c.l.b16 %v550
      %v583 = vpack.c.b16 %v568, %v567
      %v584 = vpack.c.b16 %v570, %v569
      %v585 = vpack.c.b16 %v572, %v571
      %v586 = vpack.c.b16 %v574, %v573
      %v587 = vpack.c.b16 %v576, %v575
      %v588 = vpack.c.b16 %v578, %v577
      %v589 = vpack.c.b16 %v580, %v579
      %v590 = vpack.c.b16 %v582, %v581
      %599 = vmatprep.subr.bf16.mxu0 0
      %600 = vmatpush1.bf16.msra.mxu0 %v590
      %601 = vmatprep.subr.bf16.mxu0 0
      %602 = vmatpush1.bf16.msra.mxu0 %v589
      %603 = vmatprep.subr.bf16.mxu0 0
      %604 = vmatpush1.bf16.msra.mxu0 %v588
      %605 = vmatprep.subr.bf16.mxu0 0
      %606 = vmatpush1.bf16.msra.mxu0 %v587
      %607 = vmatprep.subr.bf16.mxu0 0
      %608 = vmatpush1.bf16.msra.mxu0 %v586
      %609 = vmatprep.subr.bf16.mxu0 0
      %610 = vmatpush1.bf16.msra.mxu0 %v585
      %611 = vmatprep.subr.bf16.mxu0 0
      %612 = vmatpush1.bf16.msra.mxu0 %v584
      %613 = vmatprep.subr.bf16.mxu0 0
      %614 = vmatpush1.bf16.msra.mxu0 %v583
      %615 = vmatprep.subr.bf16.mxu0 0
      %616 = vmatpush2.bf16.msra.mxu0 0
      %617 = vmatprep.subr.bf16.mxu0 0
      %618 = vmatpush2.bf16.msra.mxu0 0
      %619 = vmatprep.subr.bf16.mxu0 0
      %620 = vmatpush2.bf16.msra.mxu0 0
      %621 = vmatprep.subr.bf16.mxu0 0
      %622 = vmatpush2.bf16.msra.mxu0 0
      %623 = vmatprep.subr.bf16.mxu0 0
      %624 = vmatpush2.bf16.msra.mxu0 0
      %625 = vmatprep.subr.bf16.mxu0 0
      %626 = vmatpush2.bf16.msra.mxu0 0
      %627 = vmatprep.subr.bf16.mxu0 0
      %628 = vmatpush2.bf16.msra.mxu0 0
      %629 = vmatprep.subr.bf16.mxu0 0
      %630 = vmatpush2.bf16.msra.mxu0 0
      %631 = vmatprep.mubr.bf16.mxu0 0
      %632 = vmatmul.mubr.bf16.gmra.mxu0 %v294
      %v633 = vpop.f32.mrf.mxu0
      %v634 = vadd.f32 0.0, %v633
      %v635 = vpop.f32.mrf.mxu0
      %v636 = vpop.f32.mrf.mxu0
      %v637 = vadd.f32 0.0, %v636
      %v638 = vpop.f32.mrf.mxu0
      %639 = vmatprep.mubr.bf16.mxu0 0
      %640 = vmatmul.mubr.bf16.gmra.mxu0 %v295
      %v641 = vpop.f32.mrf.mxu0
      %v642 = vadd.f32 0.0, %v641
      %v643 = vpop.f32.mrf.mxu0
      %v644 = vpop.f32.mrf.mxu0
      %v645 = vadd.f32 0.0, %v644
      %v646 = vpop.f32.mrf.mxu0
      %647 = vmatprep.mubr.bf16.mxu0 0
      %648 = vmatmul.mubr.bf16.gmra.mxu0 %v296
      %v649 = vpop.f32.mrf.mxu0
      %v650 = vadd.f32 0.0, %v649
      %v651 = vpop.f32.mrf.mxu0
      %v652 = vpop.f32.mrf.mxu0
      %v653 = vadd.f32 0.0, %v652
      %v654 = vpop.f32.mrf.mxu0
      %655 = vmatprep.mubr.bf16.mxu0 0
      %656 = vmatmul.mubr.bf16.gmra.mxu0 %v297
      %v657 = vpop.f32.mrf.mxu0
      %v658 = vadd.f32 0.0, %v657
      %v659 = vpop.f32.mrf.mxu0
      %v660 = vpop.f32.mrf.mxu0
      %v661 = vadd.f32 0.0, %v660
      %v662 = vpop.f32.mrf.mxu0
      %663 = vmatprep.mubr.bf16.mxu0 0
      %664 = vmatmul.mubr.bf16.gmra.mxu0 %v298
      %v665 = vpop.f32.mrf.mxu0
      %v666 = vadd.f32 0.0, %v665
      %v667 = vpop.f32.mrf.mxu0
      %v668 = vpop.f32.mrf.mxu0
      %v669 = vadd.f32 0.0, %v668
      %v670 = vpop.f32.mrf.mxu0
      %671 = vmatprep.mubr.bf16.mxu0 0
      %672 = vmatmul.mubr.bf16.gmra.mxu0 %v299
      %v673 = vpop.f32.mrf.mxu0
      %v674 = vadd.f32 0.0, %v673
      %v675 = vpop.f32.mrf.mxu0
      %v676 = vpop.f32.mrf.mxu0
      %v677 = vadd.f32 0.0, %v676
      %v678 = vpop.f32.mrf.mxu0
      %679 = vmatprep.mubr.bf16.mxu0 0
      %680 = vmatmul.mubr.bf16.gmra.mxu0 %v300
      %v681 = vpop.f32.mrf.mxu0
      %v682 = vadd.f32 0.0, %v681
      %v683 = vpop.f32.mrf.mxu0
      %v684 = vpop.f32.mrf.mxu0
      %v685 = vadd.f32 0.0, %v684
      %v686 = vpop.f32.mrf.mxu0
      %687 = vmatprep.mubr.bf16.mxu0 0
      %688 = vmatmul.mubr.bf16.gmra.mxu0 %v301
      %v689 = vpop.f32.mrf.mxu0
      %v690 = vadd.f32 0.0, %v689
      %v691 = vpop.f32.mrf.mxu0
      %v692 = vpop.f32.mrf.mxu0
      %v693 = vadd.f32 0.0, %v692
      %v694 = vpop.f32.mrf.mxu0
      %695 = vmatprep.mubr.bf16.mxu0 0
      %696 = vmatmul.mubr.bf16.gmra.mxu0 %v302
      %v697 = vpop.f32.mrf.mxu0
      %v698 = vadd.f32 0.0, %v697
      %v699 = vpop.f32.mrf.mxu0
      %v700 = vpop.f32.mrf.mxu0
      %v701 = vadd.f32 0.0, %v700
      %v702 = vpop.f32.mrf.mxu0
      %703 = vmatprep.mubr.bf16.mxu0 0
      %704 = vmatmul.mubr.bf16.gmra.mxu0 %v303
      %v705 = vpop.f32.mrf.mxu0
      %v706 = vadd.f32 0.0, %v705
      %v707 = vpop.f32.mrf.mxu0
      %v708 = vpop.f32.mrf.mxu0
      %v709 = vadd.f32 0.0, %v708
      %v710 = vpop.f32.mrf.mxu0
      %711 = vmatprep.mubr.bf16.mxu0 0
      %712 = vmatmul.mubr.bf16.gmra.mxu0 %v304
      %v713 = vpop.f32.mrf.mxu0
      %v714 = vadd.f32 0.0, %v713
      %v715 = vpop.f32.mrf.mxu0
      %v716 = vpop.f32.mrf.mxu0
      %v717 = vadd.f32 0.0, %v716
      %v718 = vpop.f32.mrf.mxu0
      %719 = vmatprep.mubr.bf16.mxu0 0
      %720 = vmatmul.mubr.bf16.gmra.mxu0 %v305
      %v721 = vpop.f32.mrf.mxu0
      %v722 = vadd.f32 0.0, %v721
      %v723 = vpop.f32.mrf.mxu0
      %v724 = vpop.f32.mrf.mxu0
      %v725 = vadd.f32 0.0, %v724
      %v726 = vpop.f32.mrf.mxu0
      %727 = vmatprep.mubr.bf16.mxu0 0
      %728 = vmatmul.mubr.bf16.gmra.mxu0 %v306
      %v729 = vpop.f32.mrf.mxu0
      %v730 = vadd.f32 0.0, %v729
      %v731 = vpop.f32.mrf.mxu0
      %v732 = vpop.f32.mrf.mxu0
      %v733 = vadd.f32 0.0, %v732
      %v734 = vpop.f32.mrf.mxu0
      %735 = vmatprep.mubr.bf16.mxu0 0
      %736 = vmatmul.mubr.bf16.gmra.mxu0 %v307
      %v737 = vpop.f32.mrf.mxu0
      %v738 = vadd.f32 0.0, %v737
      %v739 = vpop.f32.mrf.mxu0
      %v740 = vpop.f32.mrf.mxu0
      %v741 = vadd.f32 0.0, %v740
      %v742 = vpop.f32.mrf.mxu0
      %743 = vmatprep.mubr.bf16.mxu0 0
      %744 = vmatmul.mubr.bf16.gmra.mxu0 %v308
      %v745 = vpop.f32.mrf.mxu0
      %v746 = vadd.f32 0.0, %v745
      %v747 = vpop.f32.mrf.mxu0
      %v748 = vpop.f32.mrf.mxu0
      %v749 = vadd.f32 0.0, %v748
      %v750 = vpop.f32.mrf.mxu0
      %751 = vmatprep.mubr.bf16.mxu0 0
      %752 = vmatmul.mubr.bf16.gmra.mxu0 %v309
      %v753 = vpop.f32.mrf.mxu0
      %v754 = vadd.f32 0.0, %v753
      %v755 = vpop.f32.mrf.mxu0
      %v756 = vpop.f32.mrf.mxu0
      %v757 = vadd.f32 0.0, %v756
      %v758 = vpop.f32.mrf.mxu0
      %759 = vdwg.mxu0
      %v760 = vpack.c.bf16 %v412, %v409
      %v761 = vpack.c.bf16 %v420, %v417
      %v762 = vpack.c.bf16 %v428, %v425
      %v763 = vpack.c.bf16 %v436, %v433
      %v764 = vpack.c.bf16 %v444, %v441
      %v765 = vpack.c.bf16 %v452, %v449
      %v766 = vpack.c.bf16 %v460, %v457
      %v767 = vpack.c.bf16 %v468, %v465
      %v768 = vpack.c.bf16 %v476, %v473
      %v769 = vpack.c.bf16 %v484, %v481
      %v770 = vpack.c.bf16 %v492, %v489
      %v771 = vpack.c.bf16 %v500, %v497
      %v772 = vpack.c.bf16 %v508, %v505
      %v773 = vpack.c.bf16 %v516, %v513
      %v774 = vpack.c.bf16 %v524, %v521
      %v775 = vpack.c.bf16 %v532, %v529
      %v792 = vunpack.c.l.b16 %v760
      %v793 = vunpack.c.h.b16 %v760
      %v794 = vunpack.c.l.b16 %v761
      %v795 = vunpack.c.h.b16 %v761
      %v796 = vunpack.c.l.b16 %v762
      %v797 = vunpack.c.h.b16 %v762
      %v798 = vunpack.c.l.b16 %v763
      %v799 = vunpack.c.h.b16 %v763
      %v800 = vunpack.c.l.b16 %v764
      %v801 = vunpack.c.h.b16 %v764
      %v802 = vunpack.c.l.b16 %v765
      %v803 = vunpack.c.h.b16 %v765
      %v804 = vunpack.c.l.b16 %v766
      %v805 = vunpack.c.h.b16 %v766
      %v806 = vunpack.c.l.b16 %v767
      %v807 = vunpack.c.h.b16 %v767
      %v808 = vunpack.c.l.b16 %v768
      %v809 = vunpack.c.h.b16 %v768
      %v810 = vunpack.c.l.b16 %v769
      %v811 = vunpack.c.h.b16 %v769
      %v812 = vunpack.c.l.b16 %v770
      %v813 = vunpack.c.h.b16 %v770
      %v814 = vunpack.c.l.b16 %v771
      %v815 = vunpack.c.h.b16 %v771
      %v816 = vunpack.c.l.b16 %v772
      %v817 = vunpack.c.h.b16 %v772
      %v818 = vunpack.c.l.b16 %v773
      %v819 = vunpack.c.h.b16 %v773
      %v820 = vunpack.c.l.b16 %v774
      %v821 = vunpack.c.h.b16 %v774
      %v822 = vunpack.c.l.b16 %v775
      %v823 = vunpack.c.h.b16 %v775
      %v824 = vpack.c.b16 %v792, %v792
      %v825 = vpack.c.b16 %v793, %v793
      %v826 = vpack.c.b16 %v794, %v794
      %v827 = vpack.c.b16 %v795, %v795
      %v828 = vpack.c.b16 %v796, %v796
      %v829 = vpack.c.b16 %v797, %v797
      %v830 = vpack.c.b16 %v798, %v798
      %v831 = vpack.c.b16 %v799, %v799
      %v832 = vpack.c.b16 %v800, %v800
      %v833 = vpack.c.b16 %v801, %v801
      %v834 = vpack.c.b16 %v802, %v802
      %v835 = vpack.c.b16 %v803, %v803
      %v836 = vpack.c.b16 %v804, %v804
      %v837 = vpack.c.b16 %v805, %v805
      %v838 = vpack.c.b16 %v806, %v806
      %v839 = vpack.c.b16 %v807, %v807
      %v840 = vpack.c.b16 %v808, %v808
      %v841 = vpack.c.b16 %v809, %v809
      %v842 = vpack.c.b16 %v810, %v810
      %v843 = vpack.c.b16 %v811, %v811
      %v844 = vpack.c.b16 %v812, %v812
      %v845 = vpack.c.b16 %v813, %v813
      %v846 = vpack.c.b16 %v814, %v814
      %v847 = vpack.c.b16 %v815, %v815
      %v848 = vpack.c.b16 %v816, %v816
      %v849 = vpack.c.b16 %v817, %v817
      %v850 = vpack.c.b16 %v818, %v818
      %v851 = vpack.c.b16 %v819, %v819
      %v852 = vpack.c.b16 %v820, %v820
      %v853 = vpack.c.b16 %v821, %v821
      %v854 = vpack.c.b16 %v822, %v822
      %v855 = vpack.c.b16 %v823, %v823
      %888 = vst [vmem:[%s249] sm:$0xf] %v824
      %889 = vst [vmem:[%s249 + $0x4] sm:$0xf] %v825
      %890 = vst [vmem:[%s249 + $0x8] sm:$0xf] %v826
      %891 = vst [vmem:[%s249 + $0xc] sm:$0xf] %v827
      %892 = vst [vmem:[%s249 + $0x10] sm:$0xf] %v828
      %893 = vst [vmem:[%s249 + $0x14] sm:$0xf] %v829
      %894 = vst [vmem:[%s249 + $0x18] sm:$0xf] %v830
      %895 = vst [vmem:[%s249 + $0x1c] sm:$0xf] %v831
      %896 = vst [vmem:[%s249 + $0x20] sm:$0xf] %v832
      %897 = vst [vmem:[%s249 + $0x24] sm:$0xf] %v833
      %898 = vst [vmem:[%s249 + $0x28] sm:$0xf] %v834
      %899 = vst [vmem:[%s249 + $0x2c] sm:$0xf] %v835
      %900 = vst [vmem:[%s249 + $0x30] sm:$0xf] %v836
      %901 = vst [vmem:[%s249 + $0x34] sm:$0xf] %v837
      %902 = vst [vmem:[%s249 + $0x38] sm:$0xf] %v838
      %903 = vst [vmem:[%s249 + $0x3c] sm:$0xf] %v839
      %904 = vst [vmem:[%s249 + $0x40] sm:$0xf] %v840
      %905 = vst [vmem:[%s249 + $0x44] sm:$0xf] %v841
      %906 = vst [vmem:[%s249 + $0x48] sm:$0xf] %v842
      %907 = vst [vmem:[%s249 + $0x4c] sm:$0xf] %v843
      %908 = vst [vmem:[%s249 + $0x50] sm:$0xf] %v844
      %909 = vst [vmem:[%s249 + $0x54] sm:$0xf] %v845
      %910 = vst [vmem:[%s249 + $0x58] sm:$0xf] %v846
      %911 = vst [vmem:[%s249 + $0x5c] sm:$0xf] %v847
      %912 = vst [vmem:[%s249 + $0x60] sm:$0xf] %v848
      %913 = vst [vmem:[%s249 + $0x64] sm:$0xf] %v849
      %914 = vst [vmem:[%s249 + $0x68] sm:$0xf] %v850
      %915 = vst [vmem:[%s249 + $0x6c] sm:$0xf] %v851
      %916 = vst [vmem:[%s249 + $0x70] sm:$0xf] %v852
      %917 = vst [vmem:[%s249 + $0x74] sm:$0xf] %v853
      %918 = vst [vmem:[%s249 + $0x78] sm:$0xf] %v854
      %919 = vst [vmem:[%s249 + $0x7c] sm:$0xf] %v855
      %v920 = vpack.c.bf16 %v637, %v634
      %v921 = vpack.c.bf16 %v645, %v642
      %v922 = vpack.c.bf16 %v653, %v650
      %v923 = vpack.c.bf16 %v661, %v658
      %v924 = vpack.c.bf16 %v669, %v666
      %v925 = vpack.c.bf16 %v677, %v674
      %v926 = vpack.c.bf16 %v685, %v682
      %v927 = vpack.c.bf16 %v693, %v690
      %v928 = vpack.c.bf16 %v701, %v698
      %v929 = vpack.c.bf16 %v709, %v706
      %v930 = vpack.c.bf16 %v717, %v714
      %v931 = vpack.c.bf16 %v725, %v722
      %v932 = vpack.c.bf16 %v733, %v730
      %v933 = vpack.c.bf16 %v741, %v738
      %v934 = vpack.c.bf16 %v749, %v746
      %v935 = vpack.c.bf16 %v757, %v754
      %v952 = vunpack.c.l.b16 %v920
      %v953 = vunpack.c.h.b16 %v920
      %v954 = vunpack.c.l.b16 %v921
      %v955 = vunpack.c.h.b16 %v921
      %v956 = vunpack.c.l.b16 %v922
      %v957 = vunpack.c.h.b16 %v922
      %v958 = vunpack.c.l.b16 %v923
      %v959 = vunpack.c.h.b16 %v923
      %v960 = vunpack.c.l.b16 %v924
      %v961 = vunpack.c.h.b16 %v924
      %v962 = vunpack.c.l.b16 %v925
      %v963 = vunpack.c.h.b16 %v925
      %v964 = vunpack.c.l.b16 %v926
      %v965 = vunpack.c.h.b16 %v926
      %v966 = vunpack.c.l.b16 %v927
      %v967 = vunpack.c.h.b16 %v927
      %v968 = vunpack.c.l.b16 %v928
      %v969 = vunpack.c.h.b16 %v928
      %v970 = vunpack.c.l.b16 %v929
      %v971 = vunpack.c.h.b16 %v929
      %v972 = vunpack.c.l.b16 %v930
      %v973 = vunpack.c.h.b16 %v930
      %v974 = vunpack.c.l.b16 %v931
      %v975 = vunpack.c.h.b16 %v931
      %v976 = vunpack.c.l.b16 %v932
      %v977 = vunpack.c.h.b16 %v932
      %v978 = vunpack.c.l.b16 %v933
      %v979 = vunpack.c.h.b16 %v933
      %v980 = vunpack.c.l.b16 %v934
      %v981 = vunpack.c.h.b16 %v934
      %v982 = vunpack.c.l.b16 %v935
      %v983 = vunpack.c.h.b16 %v935
      %v984 = vpack.c.b16 %v952, %v952
      %v985 = vpack.c.b16 %v953, %v953
      %v986 = vpack.c.b16 %v954, %v954
      %v987 = vpack.c.b16 %v955, %v955
      %v988 = vpack.c.b16 %v956, %v956
      %v989 = vpack.c.b16 %v957, %v957
      %v990 = vpack.c.b16 %v958, %v958
      %v991 = vpack.c.b16 %v959, %v959
      %v992 = vpack.c.b16 %v960, %v960
      %v993 = vpack.c.b16 %v961, %v961
      %v994 = vpack.c.b16 %v962, %v962
      %v995 = vpack.c.b16 %v963, %v963
      %v996 = vpack.c.b16 %v964, %v964
      %v997 = vpack.c.b16 %v965, %v965
      %v998 = vpack.c.b16 %v966, %v966
      %v999 = vpack.c.b16 %v967, %v967
      %v1000 = vpack.c.b16 %v968, %v968
      %v1001 = vpack.c.b16 %v969, %v969
      %v1002 = vpack.c.b16 %v970, %v970
      %v1003 = vpack.c.b16 %v971, %v971
      %v1004 = vpack.c.b16 %v972, %v972
      %v1005 = vpack.c.b16 %v973, %v973
      %v1006 = vpack.c.b16 %v974, %v974
      %v1007 = vpack.c.b16 %v975, %v975
      %v1008 = vpack.c.b16 %v976, %v976
      %v1009 = vpack.c.b16 %v977, %v977
      %v1010 = vpack.c.b16 %v978, %v978
      %v1011 = vpack.c.b16 %v979, %v979
      %v1012 = vpack.c.b16 %v980, %v980
      %v1013 = vpack.c.b16 %v981, %v981
      %v1014 = vpack.c.b16 %v982, %v982
      %v1015 = vpack.c.b16 %v983, %v983
      %1048 = vst [vmem:[%s259] sm:$0xf] %v984
      %1049 = vst [vmem:[%s259 + $0x4] sm:$0xf] %v985
      %1050 = vst [vmem:[%s259 + $0x8] sm:$0xf] %v986
      %1051 = vst [vmem:[%s259 + $0xc] sm:$0xf] %v987
      %1052 = vst [vmem:[%s259 + $0x10] sm:$0xf] %v988
      %1053 = vst [vmem:[%s259 + $0x14] sm:$0xf] %v989
      %1054 = vst [vmem:[%s259 + $0x18] sm:$0xf] %v990
      %1055 = vst [vmem:[%s259 + $0x1c] sm:$0xf] %v991
      %1056 = vst [vmem:[%s259 + $0x20] sm:$0xf] %v992
      %1057 = vst [vmem:[%s259 + $0x24] sm:$0xf] %v993
      %1058 = vst [vmem:[%s259 + $0x28] sm:$0xf] %v994
      %1059 = vst [vmem:[%s259 + $0x2c] sm:$0xf] %v995
      %1060 = vst [vmem:[%s259 + $0x30] sm:$0xf] %v996
      %1061 = vst [vmem:[%s259 + $0x34] sm:$0xf] %v997
      %1062 = vst [vmem:[%s259 + $0x38] sm:$0xf] %v998
      %1063 = vst [vmem:[%s259 + $0x3c] sm:$0xf] %v999
      %1064 = vst [vmem:[%s259 + $0x40] sm:$0xf] %v1000
      %1065 = vst [vmem:[%s259 + $0x44] sm:$0xf] %v1001
      %1066 = vst [vmem:[%s259 + $0x48] sm:$0xf] %v1002
      %1067 = vst [vmem:[%s259 + $0x4c] sm:$0xf] %v1003
      %1068 = vst [vmem:[%s259 + $0x50] sm:$0xf] %v1004
      %1069 = vst [vmem:[%s259 + $0x54] sm:$0xf] %v1005
      %1070 = vst [vmem:[%s259 + $0x58] sm:$0xf] %v1006
      %1071 = vst [vmem:[%s259 + $0x5c] sm:$0xf] %v1007
      %1072 = vst [vmem:[%s259 + $0x60] sm:$0xf] %v1008
      %1073 = vst [vmem:[%s259 + $0x64] sm:$0xf] %v1009
      %1074 = vst [vmem:[%s259 + $0x68] sm:$0xf] %v1010
      %1075 = vst [vmem:[%s259 + $0x6c] sm:$0xf] %v1011
      %1076 = vst [vmem:[%s259 + $0x70] sm:$0xf] %v1012
      %1077 = vst [vmem:[%s259 + $0x74] sm:$0xf] %v1013
      %1078 = vst [vmem:[%s259 + $0x78] sm:$0xf] %v1014
      %1079 = vst [vmem:[%s259 + $0x7c] sm:$0xf] %v1015
      %s1080 = smul.u32 32, %s21
      %p1081 = scmp.lt.s32.totalorder %s20, 1
      %s1082 = scalar_select %p1081, %s20, 1
      %p1083 = scmp.lt.s32.totalorder %s1080, 31
      %s1084 = scalar_select %p1083, %s1080, 31
      %s1085 = smul.addr %s1082, 32
      %s1086 = sadd.s32 %s1084, %s1085
      %s1087 = smul.addr %s1086, 4
      %s1088 = scalar_lea.vmem %s3, %s1087
      %s1089 = smul.u32 32, %s21
      %p1090 = scmp.lt.s32.totalorder %s20, 1
      %s1091 = scalar_select %p1090, %s20, 1
      %p1092 = scmp.lt.s32.totalorder %s1089, 31
      %s1093 = scalar_select %p1092, %s1089, 31
      %s1094 = smul.addr %s1091, 32
      %s1095 = sadd.s32 %s1093, %s1094
      %s1096 = smul.addr %s1095, 4
      %s1097 = scalar_lea.vmem %s4, %s1096
      // Predicated region
      $region33: #{_self_attention_impl.2} parent=31 // pred_check
        %p1098 = pneg %p118
      $region34: #{_self_attention_impl.2} parent=31 // pred_check_branch
        %1100 = sbr.rel (%p1098) target = $region36
      $region35: #{_self_attention_impl.2} parent=31 // pred_region
        %s1101 = smul.u32 32, %s21
      $region36: #{_self_attention_impl.2} parent=31 // pred_fallthru
        _
      // Predicated region
      $region37: #{_self_attention_impl.2} parent=31 // pred_check
        %p1102 = pneg %p146
      $region38: #{_self_attention_impl.2} parent=31 // pred_check_branch
        %1104 = sbr.rel (%p1102) target = $region40
      $region39: #{_self_attention_impl.2} parent=31 // pred_region
        %s1105 = smul.u32 32, %s21
      $region40: #{_self_attention_impl.2} parent=31 // pred_fallthru
        _
    $region32: #{_self_attention_impl.2} parent=5 // pred_fallthru
      _
    %p1106 = scmp.le.s32.totalorder 2, %s11
    // Predicated region
    $region41: #{_self_attention_impl.2} parent=5 // pred_check
      %p1107 = pneg %p1106
    $region42: #{_self_attention_impl.2} parent=5 // pred_check_branch
      %1109 = sbr.rel (%p1107) target = $region44
    $region43: #{_self_attention_impl.2} parent=5 // pred_region
      %s1110 = ssub.s32 %s11, 2
      // Predicated region
      $region45: #{_self_attention_impl.2} parent=43 // pred_check
        %p1111 = pneg %p124
      $region46: #{_self_attention_impl.2} parent=43 // pred_check_branch
        %1113 = sbr.rel (%p1111) target = $region48
      $region47: #{_self_attention_impl.2} parent=43 // pred_region
        %s1114 = smul.u32 32, %s23
        %p1115 = scmp.lt.s32.totalorder %s22, 1
        %s1116 = scalar_select %p1115, %s22, 1
        %p1117 = scmp.lt.s32.totalorder %s1114, 31
        %s1118 = scalar_select %p1117, %s1114, 31
        %s1119 = smul.addr %s1116, 32
        %s1120 = sadd.s32 %s1118, %s1119
        %s1121 = smul.addr %s1120, 4
        %s1122 = scalar_lea.vmem %s3, %s1121
      $region48: #{_self_attention_impl.2} parent=43 // pred_fallthru
        _
      // Predicated region
      $region49: #{_self_attention_impl.2} parent=43 // pred_check
        %p1123 = pneg %p152
      $region50: #{_self_attention_impl.2} parent=43 // pred_check_branch
        %1125 = sbr.rel (%p1123) target = $region52
      $region51: #{_self_attention_impl.2} parent=43 // pred_region
        %s1126 = smul.u32 32, %s23
        %p1127 = scmp.lt.s32.totalorder %s22, 1
        %s1128 = scalar_select %p1127, %s22, 1
        %p1129 = scmp.lt.s32.totalorder %s1126, 31
        %s1130 = scalar_select %p1129, %s1126, 31
        %s1131 = smul.addr %s1128, 32
        %s1132 = sadd.s32 %s1130, %s1131
        %s1133 = smul.addr %s1132, 4
        %s1134 = scalar_lea.vmem %s4, %s1133
      $region52: #{_self_attention_impl.2} parent=43 // pred_fallthru
        _
    $region44: #{_self_attention_impl.2} parent=5 // pred_fallthru
      _
  $region6: #{_self_attention_impl.2} parent=0 // loop_footer
    %s15 = sadd.s32 1, %s11
  $region7: #{_self_attention_impl.2} parent=0 // loop_footer_branch
    %10 = sbr.rel target = $region3
  $region8: #{_self_attention_impl.2} parent=0 // loop_exit
    _

// kernel: _self_attention_impl.3
$region0: #{_self_attention_impl.3}
  #allocation0 [shape = 'u32[]', space=smem, size = 0x4, offset = 0x4, fixed_abs, tag = 'smem constant byte address 0x4 - core index']
  #allocation1 [shape = 'u32[144,128]{1,0:T(1,128)}', space=vmem, size = 0x12000, scoped, tag = 'internal scratch']
  #allocation2 [shape = 'bf16[256,128]{1,0:T(8,128)(2,1)}', space=vmem, size = 0x10000, scoped, tag = 'scratch operand']
  #allocation3 [shape = 'f32[256,1]{1,0:T(8,128)}', space=vmem, size = 0x20000, scoped, tag = 'scratch operand']
  #allocation4 [shape = 'f32[256,1]{1,0:T(8,128)}', space=vmem, size = 0x20000, scoped, tag = 'scratch operand']
  #allocation5 [shape = 'f32[256,128]{1,0:T(8,128)}', space=vmem, size = 0x20000, scoped, tag = 'scratch operand']
  #allocation6 [shape = 'f32[1,1]{1,0:T(1,128)S(6)}', space=smem, size = 0x200, scoped, tag = 'scoped memory for _self_attention_impl.3']
  %s0 = inlined_call_operand.vmem [shape: f32[2,256,128], index: 0, kind: input, shape index: {}]
  %s1 = inlined_call_operand.vmem [shape: bf16[2,256,128], index: 1, kind: input, shape index: {}]
  %s2 = inlined_call_operand.vmem [shape: bf16[2,256,128], index: 2, kind: input, shape index: {}]
  %s3 = inlined_call_operand.vmem [shape: bf16[128,128], index: 3, kind: input, shape index: {}]
  %s4 = inlined_call_operand.vmem [shape: f32[1,128], index: 4, kind: input, shape index: {}]
  %s5 = inlined_call_operand.vmem [shape: f32[1,128], index: 5, kind: input, shape index: {}]
  %s6 = inlined_call_operand.<no memory space> [shape: f32[1,1], index: 6, kind: input, shape index: {}]
  %s7 = inlined_call_operand.hbm [shape: f32[2,256,128], index: 7, kind: output, shape index: {}]
  %s8 = sld [smem:[#allocation0]]
  $region69: #{_self_attention_impl.3} parent=0
    _
  %s10 = ssub.s32 1, %s8
  %s11 = scalar_select 0, %s10, %s8
  %12 = sst [smem:[#allocation6]] %s6
  $region1: #{_self_attention_impl.3} parent=0
    #allocation7 [shape = 'u8[262144]{0}', space=vmem, size = 0x40000, scoped, tag = 'output window, operand 0']
    #allocation8 [shape = 's32[2]{0}', space=sflag, size = 0x8, scoped, tag = 'scoped memory for _self_attention_impl.3']
    %13 = vsyncpa [#allocation8], 0
    %s14 = scalar_lea.sflag [#allocation8], 1
    %15 = vsyncpa %s14, 0
    loop: start=0, step=1, limit=4
    $region2: #{_self_attention_impl.3} parent=1 // loop_pre_header
      _
    $region3: #{_self_attention_impl.3} parent=1 // loop_header
      %s17 = sphi 0, %s21
      %p18 = scmp.ge.s32.totalorder %s17, 4
      %s24 = sphi 0, %s43
      %s25 = sphi 0, %s39
      %s26 = sphi 0, %s35
      %s27 = sphi 0, %s24
      %s28 = sphi 0, %s25
      %s29 = sphi 0, %s26
      %s30 = sphi 0, %s27
      %s31 = sphi 0, %s28
      %s32 = sphi 0, %s29
      %s48 = sphi 0, %s50
      %s51 = sphi 0, %s48
      %s52 = sphi 0, %s51
      %s68 = sphi 0, %s52
      %s76 = sphi 0, %s78
      %s79 = sphi 0, %s76
      %s80 = sphi 0, %s79
      %s96 = sphi 0, %s80
      %s104 = sphi 0, %s106
      %s107 = sphi 0, %s104
      %s108 = sphi 0, %s107
      %s124 = sphi 0, %s108
      %s128 = sphi 0, %s128
      %s130 = sphi 0, %s128
      %s131 = sphi 0, %s130
      %s145 = sphi 0, %s131
      %s149 = sphi 0, %s149
      %s151 = sphi 0, %s149
      %s152 = sphi 0, %s151
      %s166 = sphi 0, %s152
      %s170 = sphi 0, %s170
      %s172 = sphi 0, %s170
      %s173 = sphi 0, %s172
      %s187 = sphi 0, %s173
      %s191 = sphi 0, %s191
      %s193 = sphi 0, %s191
      %s194 = sphi 0, %s193
      %s208 = sphi 0, %s194
      %s216 = sphi 0, %s218
      %s219 = sphi 0, %s216
      %s220 = sphi 0, %s219
      %s236 = sphi 0, %s220
    $region4: #{_self_attention_impl.3} parent=1 // loop_header_branch
      %20 = sbr.rel (%p18) target = $region8
    $region5: #{_self_attention_impl.3} parent=1 // loop_body
      %s22 = ssub.s32 %s17, 1
      %s23 = ssub.s32 %s17, 2
      %s33 = sadd.s32 1, %s26
      %p34 = scmp.ge.s32.totalorder %s33, 1
      %s35 = scalar_select %p34, 0, %s33
      %s36 = sadd.s32 1, %s25
      %s37 = scalar_select %p34, %s36, %s25
      %p38 = scmp.ge.s32.totalorder %s37, 1
      %s39 = scalar_select %p38, 0, %s37
      %s40 = sadd.s32 1, %s24
      %s41 = scalar_select %p38, %s40, %s24
      %p42 = scmp.ge.s32.totalorder %s41, 2
      %s43 = scalar_select %p42, 0, %s41
      %s44 = ssub.s32 %s24, %s43
      %s45 = ssub.s32 %s25, %s39
      %s46 = sor.u32 %s44, %s45
      %p47 = scmp.eq.s32.totalorder %s46, 0
      %s49 = sadd.s32 %s48, 1
      %s50 = scalar_select %p47, %s48, %s49
      %p53 = pneg %p47
      %p54 = scmp.eq.s32.totalorder %s17, 1
      %p55 = por %p53, %p54
      %p56 = scmp.ne.s32.totalorder %s48, %s51
      %p57 = scmp.eq.s32.totalorder %s17, 0
      %p58 = por %p56, %p57
      %p59 = scmp.ne.s32.totalorder %s48, %s51
      %p60 = scmp.eq.s32.totalorder %s22, 1
      %p61 = por %p59, %p60
      %p62 = scmp.ne.s32.totalorder %s51, %s52
      %p63 = scmp.eq.s32.totalorder %s22, 0
      %p64 = por %p62, %p63
      %p65 = scmp.ne.s32.totalorder %s51, %s52
      %p66 = scmp.eq.s32.totalorder %s23, 1
      %p67 = por %p65, %p66
      %p69 = scmp.ne.s32.totalorder %s52, %s68
      %p70 = scmp.eq.s32.totalorder %s23, 0
      %p71 = por %p69, %p70
      %s72 = ssub.s32 %s24, %s43
      %s73 = ssub.s32 %s26, %s35
      %s74 = sor.u32 %s72, %s73
      %p75 = scmp.eq.s32.totalorder %s74, 0
      %s77 = sadd.s32 %s76, 1
      %s78 = scalar_select %p75, %s76, %s77
      %p81 = pneg %p75
      %p82 = scmp.eq.s32.totalorder %s17, 1
      %p83 = por %p81, %p82
      %p84 = scmp.ne.s32.totalorder %s76, %s79
      %p85 = scmp.eq.s32.totalorder %s17, 0
      %p86 = por %p84, %p85
      %p87 = scmp.ne.s32.totalorder %s76, %s79
      %p88 = scmp.eq.s32.totalorder %s22, 1
      %p89 = por %p87, %p88
      %p90 = scmp.ne.s32.totalorder %s79, %s80
      %p91 = scmp.eq.s32.totalorder %s22, 0
      %p92 = por %p90, %p91
      %p93 = scmp.ne.s32.totalorder %s79, %s80
      %p94 = scmp.eq.s32.totalorder %s23, 1
      %p95 = por %p93, %p94
      %p97 = scmp.ne.s32.totalorder %s80, %s96
      %p98 = scmp.eq.s32.totalorder %s23, 0
      %p99 = por %p97, %p98
      %s100 = ssub.s32 %s24, %s43
      %s101 = ssub.s32 %s26, %s35
      %s102 = sor.u32 %s100, %s101
      %p103 = scmp.eq.s32.totalorder %s102, 0
      %s105 = sadd.s32 %s104, 1
      %s106 = scalar_select %p103, %s104, %s105
      %p109 = pneg %p103
      %p110 = scmp.eq.s32.totalorder %s17, 1
      %p111 = por %p109, %p110
      %p112 = scmp.ne.s32.totalorder %s104, %s107
      %p113 = scmp.eq.s32.totalorder %s17, 0
      %p114 = por %p112, %p113
      %p115 = scmp.ne.s32.totalorder %s104, %s107
      %p116 = scmp.eq.s32.totalorder %s22, 1
      %p117 = por %p115, %p116
      %p118 = scmp.ne.s32.totalorder %s107, %s108
      %p119 = scmp.eq.s32.totalorder %s22, 0
      %p120 = por %p118, %p119
      %p121 = scmp.ne.s32.totalorder %s107, %s108
      %p122 = scmp.eq.s32.totalorder %s23, 1
      %p123 = por %p121, %p122
      %p125 = scmp.ne.s32.totalorder %s108, %s124
      %p126 = scmp.eq.s32.totalorder %s23, 0
      %p127 = por %p125, %p126
      %s129 = sadd.s32 %s128, 1
      %p132 = scmp.eq.s32.totalorder %s17, 1
      %p133 = scmp.ne.s32.totalorder %s128, %s130
      %p134 = scmp.eq.s32.totalorder %s17, 0
      %p135 = por %p133, %p134
      %p136 = scmp.ne.s32.totalorder %s128, %s130
      %p137 = scmp.eq.s32.totalorder %s22, 1
      %p138 = por %p136, %p137
      %p139 = scmp.ne.s32.totalorder %s130, %s131
      %p140 = scmp.eq.s32.totalorder %s22, 0
      %p141 = por %p139, %p140
      %p142 = scmp.ne.s32.totalorder %s130, %s131
      %p143 = scmp.eq.s32.totalorder %s23, 1
      %p144 = por %p142, %p143
      %p146 = scmp.ne.s32.totalorder %s131, %s145
      %p147 = scmp.eq.s32.totalorder %s23, 0
      %p148 = por %p146, %p147
      %s150 = sadd.s32 %s149, 1
      %p153 = scmp.eq.s32.totalorder %s17, 1
      %p154 = scmp.ne.s32.totalorder %s149, %s151
      %p155 = scmp.eq.s32.totalorder %s17, 0
      %p156 = por %p154, %p155
      %p157 = scmp.ne.s32.totalorder %s149, %s151
      %p158 = scmp.eq.s32.totalorder %s22, 1
      %p159 = por %p157, %p158
      %p160 = scmp.ne.s32.totalorder %s151, %s152
      %p161 = scmp.eq.s32.totalorder %s22, 0
      %p162 = por %p160, %p161
      %p163 = scmp.ne.s32.totalorder %s151, %s152
      %p164 = scmp.eq.s32.totalorder %s23, 1
      %p165 = por %p163, %p164
      %p167 = scmp.ne.s32.totalorder %s152, %s166
      %p168 = scmp.eq.s32.totalorder %s23, 0
      %p169 = por %p167, %p168
      %s171 = sadd.s32 %s170, 1
      %p174 = scmp.eq.s32.totalorder %s17, 1
      %p175 = scmp.ne.s32.totalorder %s170, %s172
      %p176 = scmp.eq.s32.totalorder %s17, 0
      %p177 = por %p175, %p176
      %p178 = scmp.ne.s32.totalorder %s170, %s172
      %p179 = scmp.eq.s32.totalorder %s22, 1
      %p180 = por %p178, %p179
      %p181 = scmp.ne.s32.totalorder %s172, %s173
      %p182 = scmp.eq.s32.totalorder %s22, 0
      %p183 = por %p181, %p182
      %p184 = scmp.ne.s32.totalorder %s172, %s173
      %p185 = scmp.eq.s32.totalorder %s23, 1
      %p186 = por %p184, %p185
      %p188 = scmp.ne.s32.totalorder %s173, %s187
      %p189 = scmp.eq.s32.totalorder %s23, 0
      %p190 = por %p188, %p189
      %s192 = sadd.s32 %s191, 1
      %p195 = scmp.eq.s32.totalorder %s17, 1
      %p196 = scmp.ne.s32.totalorder %s191, %s193
      %p197 = scmp.eq.s32.totalorder %s17, 0
      %p198 = por %p196, %p197
      %p199 = scmp.ne.s32.totalorder %s191, %s193
      %p200 = scmp.eq.s32.totalorder %s22, 1
      %p201 = por %p199, %p200
      %p202 = scmp.ne.s32.totalorder %s193, %s194
      %p203 = scmp.eq.s32.totalorder %s22, 0
      %p204 = por %p202, %p203
      %p205 = scmp.ne.s32.totalorder %s193, %s194
      %p206 = scmp.eq.s32.totalorder %s23, 1
      %p207 = por %p205, %p206
      %p209 = scmp.ne.s32.totalorder %s194, %s208
      %p210 = scmp.eq.s32.totalorder %s23, 0
      %p211 = por %p209, %p210
      %s212 = ssub.s32 %s24, %s43
      %s213 = ssub.s32 %s25, %s39
      %s214 = sor.u32 %s212, %s213
      %p215 = scmp.eq.s32.totalorder %s214, 0
      %s217 = sadd.s32 %s216, 1
      %s218 = scalar_select %p215, %s216, %s217
      %p221 = pneg %p215
      %p222 = scmp.eq.s32.totalorder %s17, 1
      %p223 = por %p221, %p222
      %p224 = scmp.ne.s32.totalorder %s216, %s219
      %p225 = scmp.eq.s32.totalorder %s17, 0
      %p226 = por %p224, %p225
      %p227 = scmp.ne.s32.totalorder %s216, %s219
      %p228 = scmp.eq.s32.totalorder %s22, 1
      %p229 = por %p227, %p228
      %p230 = scmp.ne.s32.totalorder %s219, %s220
      %p231 = scmp.eq.s32.totalorder %s22, 0
      %p232 = por %p230, %p231
      %p233 = scmp.ne.s32.totalorder %s219, %s220
      %p234 = scmp.eq.s32.totalorder %s23, 1
      %p235 = por %p233, %p234
      %p237 = scmp.ne.s32.totalorder %s220, %s236
      %p238 = scmp.eq.s32.totalorder %s23, 0
      %p239 = por %p237, %p238
      %p240 = scmp.le.s32.totalorder 1, %s17
      %p241 = scmp.lt.s32.totalorder %s17, 3
      %p242 = pnand %p240, %p241
      %p243 = pneg %p242
      // Predicated region
      $region9: #{_self_attention_impl.3} parent=5 // pred_check
        _
      $region10: #{_self_attention_impl.3} parent=5 // pred_check_branch
        %245 = sbr.rel (%p242) target = $region12
      $region11: #{_self_attention_impl.3} parent=5 // pred_region
        %s246 = ssub.s32 %s17, 1
        // Predicated region
        $region13: #{_self_attention_impl.3} parent=11 // pred_check
          %p247 = pneg %p141
        $region14: #{_self_attention_impl.3} parent=11 // pred_check_branch
          %249 = sbr.rel (%p247) target = $region16
        $region15: #{_self_attention_impl.3} parent=11 // pred_region
          _
        $region16: #{_self_attention_impl.3} parent=11 // pred_fallthru
          _
        // Predicated region
        $region17: #{_self_attention_impl.3} parent=11 // pred_check
          %p250 = pneg %p162
        $region18: #{_self_attention_impl.3} parent=11 // pred_check_branch
          %252 = sbr.rel (%p250) target = $region20
        $region19: #{_self_attention_impl.3} parent=11 // pred_region
          _
        $region20: #{_self_attention_impl.3} parent=11 // pred_fallthru
          _
        // Predicated region
        $region21: #{_self_attention_impl.3} parent=11 // pred_check
          %p253 = pneg %p183
        $region22: #{_self_attention_impl.3} parent=11 // pred_check_branch
          %255 = sbr.rel (%p253) target = $region24
        $region23: #{_self_attention_impl.3} parent=11 // pred_region
          _
        $region24: #{_self_attention_impl.3} parent=11 // pred_fallthru
          _
        // Predicated region
        $region25: #{_self_attention_impl.3} parent=11 // pred_check
          %p256 = pneg %p204
        $region26: #{_self_attention_impl.3} parent=11 // pred_check_branch
          %258 = sbr.rel (%p256) target = $region28
        $region27: #{_self_attention_impl.3} parent=11 // pred_region
          _
        $region28: #{_self_attention_impl.3} parent=11 // pred_fallthru
          _
      $region12: #{_self_attention_impl.3} parent=5 // pred_fallthru
        _
      %p259 = scmp.lt.s32.totalorder %s17, 2
      // Predicated region
      $region29: #{_self_attention_impl.3} parent=5 // pred_check
        %p260 = pneg %p259
      $region30: #{_self_attention_impl.3} parent=5 // pred_check_branch
        %262 = sbr.rel (%p260) target = $region32
      $region31: #{_self_attention_impl.3} parent=5 // pred_region
        // Predicated region
        $region33: #{_self_attention_impl.3} parent=31 // pred_check
          %p263 = pneg %p58
        $region34: #{_self_attention_impl.3} parent=31 // pred_check_branch
          %265 = sbr.rel (%p263) target = $region36
        $region35: #{_self_attention_impl.3} parent=31 // pred_region
          %s266 = smul.u32 32, %s25
          %p267 = scmp.lt.s32.totalorder %s24, 1
          %s268 = scalar_select %p267, %s24, 1
          %p269 = scmp.lt.s32.totalorder %s266, 31
          %s270 = scalar_select %p269, %s266, 31
          %s271 = smul.addr %s268, 32
          %s272 = sadd.s32 %s270, %s271
          %s273 = smul.addr %s272, 8
          %s274 = scalar_lea.vmem %s0, %s273
          %s275 = smul.u32 32, %s25
        $region36: #{_self_attention_impl.3} parent=31 // pred_fallthru
          _
        // Predicated region
        $region37: #{_self_attention_impl.3} parent=31 // pred_check
          %p276 = pneg %p86
        $region38: #{_self_attention_impl.3} parent=31 // pred_check_branch
          %278 = sbr.rel (%p276) target = $region40
        $region39: #{_self_attention_impl.3} parent=31 // pred_region
          %s279 = smul.u32 32, %s26
          %p280 = scmp.lt.s32.totalorder %s24, 1
          %s281 = scalar_select %p280, %s24, 1
          %p282 = scmp.lt.s32.totalorder %s279, 31
          %s283 = scalar_select %p282, %s279, 31
          %s284 = smul.addr %s281, 32
          %s285 = sadd.s32 %s283, %s284
          %s286 = smul.addr %s285, 4
          %s287 = scalar_lea.vmem %s1, %s286
          %s288 = smul.u32 32, %s26
        $region40: #{_self_attention_impl.3} parent=31 // pred_fallthru
          _
        // Predicated region
        $region41: #{_self_attention_impl.3} parent=31 // pred_check
          %p289 = pneg %p114
        $region42: #{_self_attention_impl.3} parent=31 // pred_check_branch
          %291 = sbr.rel (%p289) target = $region44
        $region43: #{_self_attention_impl.3} parent=31 // pred_region
          %s292 = smul.u32 32, %s26
          %p293 = scmp.lt.s32.totalorder %s24, 1
          %s294 = scalar_select %p293, %s24, 1
          %p295 = scmp.lt.s32.totalorder %s292, 31
          %s296 = scalar_select %p295, %s292, 31
          %s297 = smul.addr %s294, 32
          %s298 = sadd.s32 %s296, %s297
          %s299 = smul.addr %s298, 4
          %s300 = scalar_lea.vmem %s2, %s299
          %s301 = smul.u32 32, %s26
        $region44: #{_self_attention_impl.3} parent=31 // pred_fallthru
          _
      $region32: #{_self_attention_impl.3} parent=5 // pred_fallthru
        _
      %p302 = scmp.le.s32.totalorder 1, %s17
      %p303 = scmp.lt.s32.totalorder %s17, 3
      %p304 = pnand %p302, %p303
      %p305 = pneg %p304
      // Predicated region
      $region45: #{_self_attention_impl.3} parent=5 // pred_check
        _
      $region46: #{_self_attention_impl.3} parent=5 // pred_check_branch
        %307 = sbr.rel (%p304) target = $region48
      $region47: #{_self_attention_impl.3} parent=5 // pred_region
        %s308 = ssub.s32 %s17, 1
        %s309 = smul.u32 32, %s28
        %p310 = scmp.lt.s32.totalorder %s27, 1
        %s311 = scalar_select %p310, %s27, 1
        %p312 = scmp.lt.s32.totalorder %s309, 31
        %s313 = scalar_select %p312, %s309, 31
        %s314 = smul.addr %s311, 32
        %s315 = sadd.s32 %s313, %s314
        %s316 = smul.addr %s315, 8
        %s317 = scalar_lea.vmem %s0, %s316
        %p318 = pneg %p64
        %p319 = pneg %p61
        %s320 = smul.u32 32, %s29
        %p321 = scmp.lt.s32.totalorder %s27, 1
        %s322 = scalar_select %p321, %s27, 1
        %p323 = scmp.lt.s32.totalorder %s320, 31
        %s324 = scalar_select %p323, %s320, 31
        %s325 = smul.addr %s322, 32
        %s326 = sadd.s32 %s324, %s325
        %s327 = smul.addr %s326, 4
        %s328 = scalar_lea.vmem %s1, %s327
        %p329 = pneg %p92
        %p330 = pneg %p89
        %s331 = smul.u32 32, %s29
        %p332 = scmp.lt.s32.totalorder %s27, 1
        %s333 = scalar_select %p332, %s27, 1
        %p334 = scmp.lt.s32.totalorder %s331, 31
        %s335 = scalar_select %p334, %s331, 31
        %s336 = smul.addr %s333, 32
        %s337 = sadd.s32 %s335, %s336
        %s338 = smul.addr %s337, 4
        %s339 = scalar_lea.vmem %s2, %s338
        %p340 = pneg %p120
        %p341 = pneg %p117
        %p342 = pneg %p141
        %p343 = pneg %p138
        %p344 = pneg %p162
        %p345 = pneg %p159
        %p346 = pneg %p183
        %p347 = pneg %p180
        %p348 = pneg %p204
        %p349 = pneg %p201
        %p350 = pneg %p232
        %p351 = pneg %p229
        %s352 = sand.u32 %s219, 1
        %s353 = scalar_lea.sflag [#allocation8], %s352
        %s354 = sand.u32 %s219, 1
        %s355 = smul.addr %s354, 256
        %s356 = scalar_lea.vmem [#allocation7], %s355
        %s357 = smul.u32 32, %s28
        %p358 = scmp.lt.s32.totalorder %s27, 1
        %s359 = scalar_select %p358, %s27, 1
        %p360 = scmp.lt.s32.totalorder %s357, 31
        %s361 = scalar_select %p360, %s357, 31
        %s362 = smul.addr %s359, 32
        %s363 = sadd.s32 %s361, %s362
        %s364 = smul.addr %s363, 8
        %s365 = scalar_lea.vmem %s0, %s364
        %s366 = smul.u32 32, %s28
        %s367 = smul.u32 32, %s29
        %p368 = scmp.lt.s32.totalorder %s27, 1
        %s369 = scalar_select %p368, %s27, 1
        %p370 = scmp.lt.s32.totalorder %s367, 31
        %s371 = scalar_select %p370, %s367, 31
        %s372 = smul.addr %s369, 32
        %s373 = sadd.s32 %s371, %s372
        %s374 = smul.addr %s373, 4
        %s375 = scalar_lea.vmem %s1, %s374
        %s376 = smul.u32 32, %s29
        %s377 = smul.u32 32, %s29
        %p378 = scmp.lt.s32.totalorder %s27, 1
        %s379 = scalar_select %p378, %s27, 1
        %p380 = scmp.lt.s32.totalorder %s377, 31
        %s381 = scalar_select %p380, %s377, 31
        %s382 = smul.addr %s379, 32
        %s383 = sadd.s32 %s381, %s382
        %s384 = smul.addr %s383, 4
        %s385 = scalar_lea.vmem %s2, %s384
        %s386 = smul.u32 32, %s29
        %s387 = smul.u32 32, %s28
        %p389 = scmp.eq.s32.totalorder %s29, 0
        // Predicated region
        $region49: #{_self_attention_impl.3} parent=47 // pred_check
          %p390 = pneg %p389
        $region50: #{_self_attention_impl.3} parent=47 // pred_check_branch
          %392 = sbr.rel (%p390) target = $region52
        $region51: #{_self_attention_impl.3} parent=47 // pred_region
          %v393 = vld [vmem:[%s365] sm:$0xff]
          %v394 = vld [vmem:[%s365 + $0x8] sm:$0xff]
          %v395 = vld [vmem:[%s365 + $0x10] sm:$0xff]
          %v396 = vld [vmem:[%s365 + $0x18] sm:$0xff]
          %v397 = vld [vmem:[%s365 + $0x20] sm:$0xff]
          %v398 = vld [vmem:[%s365 + $0x28] sm:$0xff]
          %v399 = vld [vmem:[%s365 + $0x30] sm:$0xff]
          %v400 = vld [vmem:[%s365 + $0x38] sm:$0xff]
          %v401 = vld [vmem:[%s365 + $0x40] sm:$0xff]
          %v402 = vld [vmem:[%s365 + $0x48] sm:$0xff]
          %v403 = vld [vmem:[%s365 + $0x50] sm:$0xff]
          %v404 = vld [vmem:[%s365 + $0x58] sm:$0xff]
          %v405 = vld [vmem:[%s365 + $0x60] sm:$0xff]
          %v406 = vld [vmem:[%s365 + $0x68] sm:$0xff]
          %v407 = vld [vmem:[%s365 + $0x70] sm:$0xff]
          %v408 = vld [vmem:[%s365 + $0x78] sm:$0xff]
          %v409 = vld [vmem:[%s365 + $0x80] sm:$0xff]
          %v410 = vld [vmem:[%s365 + $0x88] sm:$0xff]
          %v411 = vld [vmem:[%s365 + $0x90] sm:$0xff]
          %v412 = vld [vmem:[%s365 + $0x98] sm:$0xff]
          %v413 = vld [vmem:[%s365 + $0xa0] sm:$0xff]
          %v414 = vld [vmem:[%s365 + $0xa8] sm:$0xff]
          %v415 = vld [vmem:[%s365 + $0xb0] sm:$0xff]
          %v416 = vld [vmem:[%s365 + $0xb8] sm:$0xff]
          %v417 = vld [vmem:[%s365 + $0xc0] sm:$0xff]
          %v418 = vld [vmem:[%s365 + $0xc8] sm:$0xff]
          %v419 = vld [vmem:[%s365 + $0xd0] sm:$0xff]
          %v420 = vld [vmem:[%s365 + $0xd8] sm:$0xff]
          %v421 = vld [vmem:[%s365 + $0xe0] sm:$0xff]
          %v422 = vld [vmem:[%s365 + $0xe8] sm:$0xff]
          %v423 = vld [vmem:[%s365 + $0xf0] sm:$0xff]
          %v424 = vld [vmem:[%s365 + $0xf8] sm:$0xff]
          %v425 = vpack.c.bf16 %v394, %v393
          %v426 = vpack.c.bf16 %v396, %v395
          %v427 = vpack.c.bf16 %v398, %v397
          %v428 = vpack.c.bf16 %v400, %v399
          %v429 = vpack.c.bf16 %v402, %v401
          %v430 = vpack.c.bf16 %v404, %v403
          %v431 = vpack.c.bf16 %v406, %v405
          %v432 = vpack.c.bf16 %v408, %v407
          %v433 = vpack.c.bf16 %v410, %v409
          %v434 = vpack.c.bf16 %v412, %v411
          %v435 = vpack.c.bf16 %v414, %v413
          %v436 = vpack.c.bf16 %v416, %v415
          %v437 = vpack.c.bf16 %v418, %v417
          %v438 = vpack.c.bf16 %v420, %v419
          %v439 = vpack.c.bf16 %v422, %v421
          %v440 = vpack.c.bf16 %v424, %v423
          %v441 = vld [vmem:[%s3] sm:$0xf]
          %v442 = vld [vmem:[%s3 + $0x4] sm:$0xf]
          %v443 = vld [vmem:[%s3 + $0x8] sm:$0xf]
          %v444 = vld [vmem:[%s3 + $0xc] sm:$0xf]
          %v445 = vld [vmem:[%s3 + $0x10] sm:$0xf]
          %v446 = vld [vmem:[%s3 + $0x14] sm:$0xf]
          %v447 = vld [vmem:[%s3 + $0x18] sm:$0xf]
          %v448 = vld [vmem:[%s3 + $0x1c] sm:$0xf]
          %v449 = vld [vmem:[%s3 + $0x20] sm:$0xf]
          %v450 = vld [vmem:[%s3 + $0x24] sm:$0xf]
          %v451 = vld [vmem:[%s3 + $0x28] sm:$0xf]
          %v452 = vld [vmem:[%s3 + $0x2c] sm:$0xf]
          %v453 = vld [vmem:[%s3 + $0x30] sm:$0xf]
          %v454 = vld [vmem:[%s3 + $0x34] sm:$0xf]
          %v455 = vld [vmem:[%s3 + $0x38] sm:$0xf]
          %v456 = vld [vmem:[%s3 + $0x3c] sm:$0xf]
          %v457 = vld [vmem:[%s4] sm:$0x1]
          %v459 = vlaneseq
          %v460 = vshrl.u32 %v459, 7
          %v461 = vsub.s32 0, %v460
          %v462 = vrot.slane %v457, %v461
          %v480 = vunpack.c.l.b16 %v441
          %v481 = vunpack.c.l.b16 %v442
          %v482 = vunpack.c.l.b16 %v443
          %v483 = vunpack.c.l.b16 %v444
          %v484 = vunpack.c.l.b16 %v445
          %v485 = vunpack.c.l.b16 %v446
          %v486 = vunpack.c.l.b16 %v447
          %v487 = vunpack.c.l.b16 %v448
          %v488 = vunpack.c.l.b16 %v449
          %v489 = vunpack.c.l.b16 %v450
          %v490 = vunpack.c.l.b16 %v451
          %v491 = vunpack.c.l.b16 %v452
          %v492 = vunpack.c.l.b16 %v453
          %v493 = vunpack.c.l.b16 %v454
          %v494 = vunpack.c.l.b16 %v455
          %v495 = vunpack.c.l.b16 %v456
          %v496 = vpack.c.b16 %v481, %v480
          %v497 = vpack.c.b16 %v483, %v482
          %v498 = vpack.c.b16 %v485, %v484
          %v499 = vpack.c.b16 %v487, %v486
          %v500 = vpack.c.b16 %v489, %v488
          %v501 = vpack.c.b16 %v491, %v490
          %v502 = vpack.c.b16 %v493, %v492
          %v503 = vpack.c.b16 %v495, %v494
          %512 = vmatprep.subr.bf16.mxu0 0
          %513 = vmatpush1.bf16.msra.mxu0 %v503
          %514 = vmatprep.subr.bf16.mxu0 0
          %515 = vmatpush1.bf16.msra.mxu0 %v502
          %516 = vmatprep.subr.bf16.mxu0 0
          %517 = vmatpush1.bf16.msra.mxu0 %v501
          %518 = vmatprep.subr.bf16.mxu0 0
          %519 = vmatpush1.bf16.msra.mxu0 %v500
          %520 = vmatprep.subr.bf16.mxu0 0
          %521 = vmatpush1.bf16.msra.mxu0 %v499
          %522 = vmatprep.subr.bf16.mxu0 0
          %523 = vmatpush1.bf16.msra.mxu0 %v498
          %524 = vmatprep.subr.bf16.mxu0 0
          %525 = vmatpush1.bf16.msra.mxu0 %v497
          %526 = vmatprep.subr.bf16.mxu0 0
          %527 = vmatpush1.bf16.msra.mxu0 %v496
          %528 = vmatprep.subr.bf16.mxu0 0
          %529 = vmatpush2.bf16.msra.mxu0 0
          %530 = vmatprep.subr.bf16.mxu0 0
          %531 = vmatpush2.bf16.msra.mxu0 0
          %532 = vmatprep.subr.bf16.mxu0 0
          %533 = vmatpush2.bf16.msra.mxu0 0
          %534 = vmatprep.subr.bf16.mxu0 0
          %535 = vmatpush2.bf16.msra.mxu0 0
          %536 = vmatprep.subr.bf16.mxu0 0
          %537 = vmatpush2.bf16.msra.mxu0 0
          %538 = vmatprep.subr.bf16.mxu0 0
          %539 = vmatpush2.bf16.msra.mxu0 0
          %540 = vmatprep.subr.bf16.mxu0 0
          %541 = vmatpush2.bf16.msra.mxu0 0
          %542 = vmatprep.subr.bf16.mxu0 0
          %543 = vmatpush2.bf16.msra.mxu0 0
          %544 = vmatprep.mubr.bf16.mxu0 0
          %545 = vmatmul.mubr.bf16.gmra.mxu0 %v425
          %v546 = vpop.f32.mrf.mxu0
          %v547 = vadd.f32 %v462, %v546
          %v548 = vpop.f32.mrf.mxu0
          %v549 = vpop.f32.mrf.mxu0
          %v550 = vadd.f32 %v462, %v549
          %v551 = vpop.f32.mrf.mxu0
          %552 = vmatprep.mubr.bf16.mxu0 0
          %553 = vmatmul.mubr.bf16.gmra.mxu0 %v426
          %v554 = vpop.f32.mrf.mxu0
          %v555 = vadd.f32 %v462, %v554
          %v556 = vpop.f32.mrf.mxu0
          %v557 = vpop.f32.mrf.mxu0
          %v558 = vadd.f32 %v462, %v557
          %v559 = vpop.f32.mrf.mxu0
          %560 = vmatprep.mubr.bf16.mxu0 0
          %561 = vmatmul.mubr.bf16.gmra.mxu0 %v427
          %v562 = vpop.f32.mrf.mxu0
          %v563 = vadd.f32 %v462, %v562
          %v564 = vpop.f32.mrf.mxu0
          %v565 = vpop.f32.mrf.mxu0
          %v566 = vadd.f32 %v462, %v565
          %v567 = vpop.f32.mrf.mxu0
          %568 = vmatprep.mubr.bf16.mxu0 0
          %569 = vmatmul.mubr.bf16.gmra.mxu0 %v428
          %v570 = vpop.f32.mrf.mxu0
          %v571 = vadd.f32 %v462, %v570
          %v572 = vpop.f32.mrf.mxu0
          %v573 = vpop.f32.mrf.mxu0
          %v574 = vadd.f32 %v462, %v573
          %v575 = vpop.f32.mrf.mxu0
          %576 = vmatprep.mubr.bf16.mxu0 0
          %577 = vmatmul.mubr.bf16.gmra.mxu0 %v429
          %v578 = vpop.f32.mrf.mxu0
          %v579 = vadd.f32 %v462, %v578
          %v580 = vpop.f32.mrf.mxu0
          %v581 = vpop.f32.mrf.mxu0
          %v582 = vadd.f32 %v462, %v581
          %v583 = vpop.f32.mrf.mxu0
          %584 = vmatprep.mubr.bf16.mxu0 0
          %585 = vmatmul.mubr.bf16.gmra.mxu0 %v430
          %v586 = vpop.f32.mrf.mxu0
          %v587 = vadd.f32 %v462, %v586
          %v588 = vpop.f32.mrf.mxu0
          %v589 = vpop.f32.mrf.mxu0
          %v590 = vadd.f32 %v462, %v589
          %v591 = vpop.f32.mrf.mxu0
          %592 = vmatprep.mubr.bf16.mxu0 0
          %593 = vmatmul.mubr.bf16.gmra.mxu0 %v431
          %v594 = vpop.f32.mrf.mxu0
          %v595 = vadd.f32 %v462, %v594
          %v596 = vpop.f32.mrf.mxu0
          %v597 = vpop.f32.mrf.mxu0
          %v598 = vadd.f32 %v462, %v597
          %v599 = vpop.f32.mrf.mxu0
          %600 = vmatprep.mubr.bf16.mxu0 0
          %601 = vmatmul.mubr.bf16.gmra.mxu0 %v432
          %v602 = vpop.f32.mrf.mxu0
          %v603 = vadd.f32 %v462, %v602
          %v604 = vpop.f32.mrf.mxu0
          %v605 = vpop.f32.mrf.mxu0
          %v606 = vadd.f32 %v462, %v605
          %v607 = vpop.f32.mrf.mxu0
          %608 = vmatprep.mubr.bf16.mxu0 0
          %609 = vmatmul.mubr.bf16.gmra.mxu0 %v433
          %v610 = vpop.f32.mrf.mxu0
          %v611 = vadd.f32 %v462, %v610
          %v612 = vpop.f32.mrf.mxu0
          %v613 = vpop.f32.mrf.mxu0
          %v614 = vadd.f32 %v462, %v613
          %v615 = vpop.f32.mrf.mxu0
          %616 = vmatprep.mubr.bf16.mxu0 0
          %617 = vmatmul.mubr.bf16.gmra.mxu0 %v434
          %v618 = vpop.f32.mrf.mxu0
          %v619 = vadd.f32 %v462, %v618
          %v620 = vpop.f32.mrf.mxu0
          %v621 = vpop.f32.mrf.mxu0
          %v622 = vadd.f32 %v462, %v621
          %v623 = vpop.f32.mrf.mxu0
          %624 = vmatprep.mubr.bf16.mxu0 0
          %625 = vmatmul.mubr.bf16.gmra.mxu0 %v435
          %v626 = vpop.f32.mrf.mxu0
          %v627 = vadd.f32 %v462, %v626
          %v628 = vpop.f32.mrf.mxu0
          %v629 = vpop.f32.mrf.mxu0
          %v630 = vadd.f32 %v462, %v629
          %v631 = vpop.f32.mrf.mxu0
          %632 = vmatprep.mubr.bf16.mxu0 0
          %633 = vmatmul.mubr.bf16.gmra.mxu0 %v436
          %v634 = vpop.f32.mrf.mxu0
          %v635 = vadd.f32 %v462, %v634
          %v636 = vpop.f32.mrf.mxu0
          %v637 = vpop.f32.mrf.mxu0
          %v638 = vadd.f32 %v462, %v637
          %v639 = vpop.f32.mrf.mxu0
          %640 = vmatprep.mubr.bf16.mxu0 0
          %641 = vmatmul.mubr.bf16.gmra.mxu0 %v437
          %v642 = vpop.f32.mrf.mxu0
          %v643 = vadd.f32 %v462, %v642
          %v644 = vpop.f32.mrf.mxu0
          %v645 = vpop.f32.mrf.mxu0
          %v646 = vadd.f32 %v462, %v645
          %v647 = vpop.f32.mrf.mxu0
          %648 = vmatprep.mubr.bf16.mxu0 0
          %649 = vmatmul.mubr.bf16.gmra.mxu0 %v438
          %v650 = vpop.f32.mrf.mxu0
          %v651 = vadd.f32 %v462, %v650
          %v652 = vpop.f32.mrf.mxu0
          %v653 = vpop.f32.mrf.mxu0
          %v654 = vadd.f32 %v462, %v653
          %v655 = vpop.f32.mrf.mxu0
          %656 = vmatprep.mubr.bf16.mxu0 0
          %657 = vmatmul.mubr.bf16.gmra.mxu0 %v439
          %v658 = vpop.f32.mrf.mxu0
          %v659 = vadd.f32 %v462, %v658
          %v660 = vpop.f32.mrf.mxu0
          %v661 = vpop.f32.mrf.mxu0
          %v662 = vadd.f32 %v462, %v661
          %v663 = vpop.f32.mrf.mxu0
          %664 = vmatprep.mubr.bf16.mxu0 0
          %665 = vmatmul.mubr.bf16.gmra.mxu0 %v440
          %v666 = vpop.f32.mrf.mxu0
          %v667 = vadd.f32 %v462, %v666
          %v668 = vpop.f32.mrf.mxu0
          %v669 = vpop.f32.mrf.mxu0
          %v670 = vadd.f32 %v462, %v669
          %v671 = vpop.f32.mrf.mxu0
          %672 = vdwg.mxu0
          %v673 = vpack.c.bf16 %v550, %v547
          %v674 = vpack.c.bf16 %v558, %v555
          %v675 = vpack.c.bf16 %v566, %v563
          %v676 = vpack.c.bf16 %v574, %v571
          %v677 = vpack.c.bf16 %v582, %v579
          %v678 = vpack.c.bf16 %v590, %v587
          %v679 = vpack.c.bf16 %v598, %v595
          %v680 = vpack.c.bf16 %v606, %v603
          %v681 = vpack.c.bf16 %v614, %v611
          %v682 = vpack.c.bf16 %v622, %v619
          %v683 = vpack.c.bf16 %v630, %v627
          %v684 = vpack.c.bf16 %v638, %v635
          %v685 = vpack.c.bf16 %v646, %v643
          %v686 = vpack.c.bf16 %v654, %v651
          %v687 = vpack.c.bf16 %v662, %v659
          %v688 = vpack.c.bf16 %v670, %v667
          %v705 = vunpack.c.l.b16 %v673
          %v706 = vunpack.c.h.b16 %v673
          %v707 = vunpack.c.l.b16 %v674
          %v708 = vunpack.c.h.b16 %v674
          %v709 = vunpack.c.l.b16 %v675
          %v710 = vunpack.c.h.b16 %v675
          %v711 = vunpack.c.l.b16 %v676
          %v712 = vunpack.c.h.b16 %v676
          %v713 = vunpack.c.l.b16 %v677
          %v714 = vunpack.c.h.b16 %v677
          %v715 = vunpack.c.l.b16 %v678
          %v716 = vunpack.c.h.b16 %v678
          %v717 = vunpack.c.l.b16 %v679
          %v718 = vunpack.c.h.b16 %v679
          %v719 = vunpack.c.l.b16 %v680
          %v720 = vunpack.c.h.b16 %v680
          %v721 = vunpack.c.l.b16 %v681
          %v722 = vunpack.c.h.b16 %v681
          %v723 = vunpack.c.l.b16 %v682
          %v724 = vunpack.c.h.b16 %v682
          %v725 = vunpack.c.l.b16 %v683
          %v726 = vunpack.c.h.b16 %v683
          %v727 = vunpack.c.l.b16 %v684
          %v728 = vunpack.c.h.b16 %v684
          %v729 = vunpack.c.l.b16 %v685
          %v730 = vunpack.c.h.b16 %v685
          %v731 = vunpack.c.l.b16 %v686
          %v732 = vunpack.c.h.b16 %v686
          %v733 = vunpack.c.l.b16 %v687
          %v734 = vunpack.c.h.b16 %v687
          %v735 = vunpack.c.l.b16 %v688
          %v736 = vunpack.c.h.b16 %v688
          %v737 = vpack.c.b16 %v705, %v705
          %v738 = vpack.c.b16 %v706, %v706
          %v739 = vpack.c.b16 %v707, %v707
          %v740 = vpack.c.b16 %v708, %v708
          %v741 = vpack.c.b16 %v709, %v709
          %v742 = vpack.c.b16 %v710, %v710
          %v743 = vpack.c.b16 %v711, %v711
          %v744 = vpack.c.b16 %v712, %v712
          %v745 = vpack.c.b16 %v713, %v713
          %v746 = vpack.c.b16 %v714, %v714
          %v747 = vpack.c.b16 %v715, %v715
          %v748 = vpack.c.b16 %v716, %v716
          %v749 = vpack.c.b16 %v717, %v717
          %v750 = vpack.c.b16 %v718, %v718
          %v751 = vpack.c.b16 %v719, %v719
          %v752 = vpack.c.b16 %v720, %v720
          %v753 = vpack.c.b16 %v721, %v721
          %v754 = vpack.c.b16 %v722, %v722
          %v755 = vpack.c.b16 %v723, %v723
          %v756 = vpack.c.b16 %v724, %v724
          %v757 = vpack.c.b16 %v725, %v725
          %v758 = vpack.c.b16 %v726, %v726
          %v759 = vpack.c.b16 %v727, %v727
          %v760 = vpack.c.b16 %v728, %v728
          %v761 = vpack.c.b16 %v729, %v729
          %v762 = vpack.c.b16 %v730, %v730
          %v763 = vpack.c.b16 %v731, %v731
          %v764 = vpack.c.b16 %v732, %v732
          %v765 = vpack.c.b16 %v733, %v733
          %v766 = vpack.c.b16 %v734, %v734
          %v767 = vpack.c.b16 %v735, %v735
          %v768 = vpack.c.b16 %v736, %v736
          %801 = vst [vmem:[#allocation2] sm:$0xf] %v737
          %802 = vst [vmem:[#allocation2 + $0x4] sm:$0xf] %v738
          %803 = vst [vmem:[#allocation2 + $0x8] sm:$0xf] %v739
          %804 = vst [vmem:[#allocation2 + $0xc] sm:$0xf] %v740
          %805 = vst [vmem:[#allocation2 + $0x10] sm:$0xf] %v741
          %806 = vst [vmem:[#allocation2 + $0x14] sm:$0xf] %v742
          %807 = vst [vmem:[#allocation2 + $0x18] sm:$0xf] %v743
          %808 = vst [vmem:[#allocation2 + $0x1c] sm:$0xf] %v744
          %809 = vst [vmem:[#allocation2 + $0x20] sm:$0xf] %v745
          %810 = vst [vmem:[#allocation2 + $0x24] sm:$0xf] %v746
          %811 = vst [vmem:[#allocation2 + $0x28] sm:$0xf] %v747
          %812 = vst [vmem:[#allocation2 + $0x2c] sm:$0xf] %v748
          %813 = vst [vmem:[#allocation2 + $0x30] sm:$0xf] %v749
          %814 = vst [vmem:[#allocation2 + $0x34] sm:$0xf] %v750
          %815 = vst [vmem:[#allocation2 + $0x38] sm:$0xf] %v751
          %816 = vst [vmem:[#allocation2 + $0x3c] sm:$0xf] %v752
          %817 = vst [vmem:[#allocation2 + $0x40] sm:$0xf] %v753
          %818 = vst [vmem:[#allocation2 + $0x44] sm:$0xf] %v754
          %819 = vst [vmem:[#allocation2 + $0x48] sm:$0xf] %v755
          %820 = vst [vmem:[#allocation2 + $0x4c] sm:$0xf] %v756
          %821 = vst [vmem:[#allocation2 + $0x50] sm:$0xf] %v757
          %822 = vst [vmem:[#allocation2 + $0x54] sm:$0xf] %v758
          %823 = vst [vmem:[#allocation2 + $0x58] sm:$0xf] %v759
          %824 = vst [vmem:[#allocation2 + $0x5c] sm:$0xf] %v760
          %825 = vst [vmem:[#allocation2 + $0x60] sm:$0xf] %v761
          %826 = vst [vmem:[#allocation2 + $0x64] sm:$0xf] %v762
          %827 = vst [vmem:[#allocation2 + $0x68] sm:$0xf] %v763
          %828 = vst [vmem:[#allocation2 + $0x6c] sm:$0xf] %v764
          %829 = vst [vmem:[#allocation2 + $0x70] sm:$0xf] %v765
          %830 = vst [vmem:[#allocation2 + $0x74] sm:$0xf] %v766
          %831 = vst [vmem:[#allocation2 + $0x78] sm:$0xf] %v767
          %832 = vst [vmem:[#allocation2 + $0x7c] sm:$0xf] %v768
          %vm833 = vcmask 7168
          %834 = vst.msk [vmem:[#allocation3] sm:$0xff] %vm833, -inf
          %835 = vst.msk [vmem:[#allocation3 + $0x8] sm:$0xff] %vm833, -inf
          %836 = vst.msk [vmem:[#allocation3 + $0x10] sm:$0xff] %vm833, -inf
          %837 = vst.msk [vmem:[#allocation3 + $0x18] sm:$0xff] %vm833, -inf
          %838 = vst.msk [vmem:[#allocation3 + $0x20] sm:$0xff] %vm833, -inf
          %839 = vst.msk [vmem:[#allocation3 + $0x28] sm:$0xff] %vm833, -inf
          %840 = vst.msk [vmem:[#allocation3 + $0x30] sm:$0xff] %vm833, -inf
          %841 = vst.msk [vmem:[#allocation3 + $0x38] sm:$0xff] %vm833, -inf
          %842 = vst.msk [vmem:[#allocation3 + $0x40] sm:$0xff] %vm833, -inf
          %843 = vst.msk [vmem:[#allocation3 + $0x48] sm:$0xff] %vm833, -inf
          %844 = vst.msk [vmem:[#allocation3 + $0x50] sm:$0xff] %vm833, -inf
          %845 = vst.msk [vmem:[#allocation3 + $0x58] sm:$0xff] %vm833, -inf
          %846 = vst.msk [vmem:[#allocation3 + $0x60] sm:$0xff] %vm833, -inf
          %847 = vst.msk [vmem:[#allocation3 + $0x68] sm:$0xff] %vm833, -inf
          %848 = vst.msk [vmem:[#allocation3 + $0x70] sm:$0xff] %vm833, -inf
          %849 = vst.msk [vmem:[#allocation3 + $0x78] sm:$0xff] %vm833, -inf
          %850 = vst.msk [vmem:[#allocation3 + $0x80] sm:$0xff] %vm833, -inf
          %851 = vst.msk [vmem:[#allocation3 + $0x88] sm:$0xff] %vm833, -inf
          %852 = vst.msk [vmem:[#allocation3 + $0x90] sm:$0xff] %vm833, -inf
          %853 = vst.msk [vmem:[#allocation3 + $0x98] sm:$0xff] %vm833, -inf
          %854 = vst.msk [vmem:[#allocation3 + $0xa0] sm:$0xff] %vm833, -inf
          %855 = vst.msk [vmem:[#allocation3 + $0xa8] sm:$0xff] %vm833, -inf
          %856 = vst.msk [vmem:[#allocation3 + $0xb0] sm:$0xff] %vm833, -inf
          %857 = vst.msk [vmem:[#allocation3 + $0xb8] sm:$0xff] %vm833, -inf
          %858 = vst.msk [vmem:[#allocation3 + $0xc0] sm:$0xff] %vm833, -inf
          %859 = vst.msk [vmem:[#allocation3 + $0xc8] sm:$0xff] %vm833, -inf
          %860 = vst.msk [vmem:[#allocation3 + $0xd0] sm:$0xff] %vm833, -inf
          %861 = vst.msk [vmem:[#allocation3 + $0xd8] sm:$0xff] %vm833, -inf
          %862 = vst.msk [vmem:[#allocation3 + $0xe0] sm:$0xff] %vm833, -inf
          %863 = vst.msk [vmem:[#allocation3 + $0xe8] sm:$0xff] %vm833, -inf
          %864 = vst.msk [vmem:[#allocation3 + $0xf0] sm:$0xff] %vm833, -inf
          %865 = vst.msk [vmem:[#allocation3 + $0xf8] sm:$0xff] %vm833, -inf
          %866 = vst.msk [vmem:[#allocation4] sm:$0xff] %vm833, 0.0
          %867 = vst.msk [vmem:[#allocation4 + $0x8] sm:$0xff] %vm833, 0.0
          %868 = vst.msk [vmem:[#allocation4 + $0x10] sm:$0xff] %vm833, 0.0
          %869 = vst.msk [vmem:[#allocation4 + $0x18] sm:$0xff] %vm833, 0.0
          %870 = vst.msk [vmem:[#allocation4 + $0x20] sm:$0xff] %vm833, 0.0
          %871 = vst.msk [vmem:[#allocation4 + $0x28] sm:$0xff] %vm833, 0.0
          %872 = vst.msk [vmem:[#allocation4 + $0x30] sm:$0xff] %vm833, 0.0
          %873 = vst.msk [vmem:[#allocation4 + $0x38] sm:$0xff] %vm833, 0.0
          %874 = vst.msk [vmem:[#allocation4 + $0x40] sm:$0xff] %vm833, 0.0
          %875 = vst.msk [vmem:[#allocation4 + $0x48] sm:$0xff] %vm833, 0.0
          %876 = vst.msk [vmem:[#allocation4 + $0x50] sm:$0xff] %vm833, 0.0
          %877 = vst.msk [vmem:[#allocation4 + $0x58] sm:$0xff] %vm833, 0.0
          %878 = vst.msk [vmem:[#allocation4 + $0x60] sm:$0xff] %vm833, 0.0
          %879 = vst.msk [vmem:[#allocation4 + $0x68] sm:$0xff] %vm833, 0.0
          %880 = vst.msk [vmem:[#allocation4 + $0x70] sm:$0xff] %vm833, 0.0
          %881 = vst.msk [vmem:[#allocation4 + $0x78] sm:$0xff] %vm833, 0.0
          %882 = vst.msk [vmem:[#allocation4 + $0x80] sm:$0xff] %vm833, 0.0
          %883 = vst.msk [vmem:[#allocation4 + $0x88] sm:$0xff] %vm833, 0.0
          %884 = vst.msk [vmem:[#allocation4 + $0x90] sm:$0xff] %vm833, 0.0
          %885 = vst.msk [vmem:[#allocation4 + $0x98] sm:$0xff] %vm833, 0.0
          %886 = vst.msk [vmem:[#allocation4 + $0xa0] sm:$0xff] %vm833, 0.0
          %887 = vst.msk [vmem:[#allocation4 + $0xa8] sm:$0xff] %vm833, 0.0
          %888 = vst.msk [vmem:[#allocation4 + $0xb0] sm:$0xff] %vm833, 0.0
          %889 = vst.msk [vmem:[#allocation4 + $0xb8] sm:$0xff] %vm833, 0.0
          %890 = vst.msk [vmem:[#allocation4 + $0xc0] sm:$0xff] %vm833, 0.0
          %891 = vst.msk [vmem:[#allocation4 + $0xc8] sm:$0xff] %vm833, 0.0
          %892 = vst.msk [vmem:[#allocation4 + $0xd0] sm:$0xff] %vm833, 0.0
          %893 = vst.msk [vmem:[#allocation4 + $0xd8] sm:$0xff] %vm833, 0.0
          %894 = vst.msk [vmem:[#allocation4 + $0xe0] sm:$0xff] %vm833, 0.0
          %895 = vst.msk [vmem:[#allocation4 + $0xe8] sm:$0xff] %vm833, 0.0
          %896 = vst.msk [vmem:[#allocation4 + $0xf0] sm:$0xff] %vm833, 0.0
          %897 = vst.msk [vmem:[#allocation4 + $0xf8] sm:$0xff] %vm833, 0.0
          %898 = vst [vmem:[#allocation5] sm:$0xff] 0.0
          %899 = vst [vmem:[#allocation5 + $0x8] sm:$0xff] 0.0
          %900 = vst [vmem:[#allocation5 + $0x10] sm:$0xff] 0.0
          %901 = vst [vmem:[#allocation5 + $0x18] sm:$0xff] 0.0
          %902 = vst [vmem:[#allocation5 + $0x20] sm:$0xff] 0.0
          %903 = vst [vmem:[#allocation5 + $0x28] sm:$0xff] 0.0
          %904 = vst [vmem:[#allocation5 + $0x30] sm:$0xff] 0.0
          %905 = vst [vmem:[#allocation5 + $0x38] sm:$0xff] 0.0
          %906 = vst [vmem:[#allocation5 + $0x40] sm:$0xff] 0.0
          %907 = vst [vmem:[#allocation5 + $0x48] sm:$0xff] 0.0
          %908 = vst [vmem:[#allocation5 + $0x50] sm:$0xff] 0.0
          %909 = vst [vmem:[#allocation5 + $0x58] sm:$0xff] 0.0
          %910 = vst [vmem:[#allocation5 + $0x60] sm:$0xff] 0.0
          %911 = vst [vmem:[#allocation5 + $0x68] sm:$0xff] 0.0
          %912 = vst [vmem:[#allocation5 + $0x70] sm:$0xff] 0.0
          %913 = vst [vmem:[#allocation5 + $0x78] sm:$0xff] 0.0
          %914 = vst [vmem:[#allocation5 + $0x80] sm:$0xff] 0.0
          %915 = vst [vmem:[#allocation5 + $0x88] sm:$0xff] 0.0
          %916 = vst [vmem:[#allocation5 + $0x90] sm:$0xff] 0.0
          %917 = vst [vmem:[#allocation5 + $0x98] sm:$0xff] 0.0
          %918 = vst [vmem:[#allocation5 + $0xa0] sm:$0xff] 0.0
          %919 = vst [vmem:[#allocation5 + $0xa8] sm:$0xff] 0.0
          %920 = vst [vmem:[#allocation5 + $0xb0] sm:$0xff] 0.0
          %921 = vst [vmem:[#allocation5 + $0xb8] sm:$0xff] 0.0
          %922 = vst [vmem:[#allocation5 + $0xc0] sm:$0xff] 0.0
          %923 = vst [vmem:[#allocation5 + $0xc8] sm:$0xff] 0.0
          %924 = vst [vmem:[#allocation5 + $0xd0] sm:$0xff] 0.0
          %925 = vst [vmem:[#allocation5 + $0xd8] sm:$0xff] 0.0
          %926 = vst [vmem:[#allocation5 + $0xe0] sm:$0xff] 0.0
          %927 = vst [vmem:[#allocation5 + $0xe8] sm:$0xff] 0.0
          %928 = vst [vmem:[#allocation5 + $0xf0] sm:$0xff] 0.0
          %929 = vst [vmem:[#allocation5 + $0xf8] sm:$0xff] 0.0
        $region52: #{_self_attention_impl.3} parent=47 // pred_fallthru
          _
        %v930 = vld [vmem:[%s375] sm:$0xf]
        %v931 = vld [vmem:[%s375 + $0x4] sm:$0xf]
        %v932 = vld [vmem:[%s375 + $0x8] sm:$0xf]
        %v933 = vld [vmem:[%s375 + $0xc] sm:$0xf]
        %v934 = vld [vmem:[%s375 + $0x10] sm:$0xf]
        %v935 = vld [vmem:[%s375 + $0x14] sm:$0xf]
        %v936 = vld [vmem:[%s375 + $0x18] sm:$0xf]
        %v937 = vld [vmem:[%s375 + $0x1c] sm:$0xf]
        %v938 = vld [vmem:[%s375 + $0x20] sm:$0xf]
        %v939 = vld [vmem:[%s375 + $0x24] sm:$0xf]
        %v940 = vld [vmem:[%s375 + $0x28] sm:$0xf]
        %v941 = vld [vmem:[%s375 + $0x2c] sm:$0xf]
        %v942 = vld [vmem:[%s375 + $0x30] sm:$0xf]
        %v943 = vld [vmem:[%s375 + $0x34] sm:$0xf]
        %v944 = vld [vmem:[%s375 + $0x38] sm:$0xf]
        %v945 = vld [vmem:[%s375 + $0x3c] sm:$0xf]
        %v946 = vld [vmem:[%s375 + $0x40] sm:$0xf]
        %v947 = vld [vmem:[%s375 + $0x44] sm:$0xf]
        %v948 = vld [vmem:[%s375 + $0x48] sm:$0xf]
        %v949 = vld [vmem:[%s375 + $0x4c] sm:$0xf]
        %v950 = vld [vmem:[%s375 + $0x50] sm:$0xf]
        %v951 = vld [vmem:[%s375 + $0x54] sm:$0xf]
        %v952 = vld [vmem:[%s375 + $0x58] sm:$0xf]
        %v953 = vld [vmem:[%s375 + $0x5c] sm:$0xf]
        %v954 = vld [vmem:[%s375 + $0x60] sm:$0xf]
        %v955 = vld [vmem:[%s375 + $0x64] sm:$0xf]
        %v956 = vld [vmem:[%s375 + $0x68] sm:$0xf]
        %v957 = vld [vmem:[%s375 + $0x6c] sm:$0xf]
        %v958 = vld [vmem:[%s375 + $0x70] sm:$0xf]
        %v959 = vld [vmem:[%s375 + $0x74] sm:$0xf]
        %v960 = vld [vmem:[%s375 + $0x78] sm:$0xf]
        %v961 = vld [vmem:[%s375 + $0x7c] sm:$0xf]
        %v962 = vld [vmem:[%s385] sm:$0xf]
        %v963 = vld [vmem:[%s385 + $0x4] sm:$0xf]
        %v964 = vld [vmem:[%s385 + $0x8] sm:$0xf]
        %v965 = vld [vmem:[%s385 + $0xc] sm:$0xf]
        %v966 = vld [vmem:[%s385 + $0x10] sm:$0xf]
        %v967 = vld [vmem:[%s385 + $0x14] sm:$0xf]
        %v968 = vld [vmem:[%s385 + $0x18] sm:$0xf]
        %v969 = vld [vmem:[%s385 + $0x1c] sm:$0xf]
        %v970 = vld [vmem:[%s385 + $0x20] sm:$0xf]
        %v971 = vld [vmem:[%s385 + $0x24] sm:$0xf]
        %v972 = vld [vmem:[%s385 + $0x28] sm:$0xf]
        %v973 = vld [vmem:[%s385 + $0x2c] sm:$0xf]
        %v974 = vld [vmem:[%s385 + $0x30] sm:$0xf]
        %v975 = vld [vmem:[%s385 + $0x34] sm:$0xf]
        %v976 = vld [vmem:[%s385 + $0x38] sm:$0xf]
        %v977 = vld [vmem:[%s385 + $0x3c] sm:$0xf]
        %v978 = vld [vmem:[%s385 + $0x40] sm:$0xf]
        %v979 = vld [vmem:[%s385 + $0x44] sm:$0xf]
        %v980 = vld [vmem:[%s385 + $0x48] sm:$0xf]
        %v981 = vld [vmem:[%s385 + $0x4c] sm:$0xf]
        %v982 = vld [vmem:[%s385 + $0x50] sm:$0xf]
        %v983 = vld [vmem:[%s385 + $0x54] sm:$0xf]
        %v984 = vld [vmem:[%s385 + $0x58] sm:$0xf]
        %v985 = vld [vmem:[%s385 + $0x5c] sm:$0xf]
        %v986 = vld [vmem:[%s385 + $0x60] sm:$0xf]
        %v987 = vld [vmem:[%s385 + $0x64] sm:$0xf]
        %v988 = vld [vmem:[%s385 + $0x68] sm:$0xf]
        %v989 = vld [vmem:[%s385 + $0x6c] sm:$0xf]
        %v990 = vld [vmem:[%s385 + $0x70] sm:$0xf]
        %v991 = vld [vmem:[%s385 + $0x74] sm:$0xf]
        %v992 = vld [vmem:[%s385 + $0x78] sm:$0xf]
        %v993 = vld [vmem:[%s385 + $0x7c] sm:$0xf]
        %v994 = vld [vmem:[#allocation2] sm:$0xf]
        %v995 = vld [vmem:[#allocation2 + $0x4] sm:$0xf]
        %v996 = vld [vmem:[#allocation2 + $0x8] sm:$0xf]
        %v997 = vld [vmem:[#allocation2 + $0xc] sm:$0xf]
        %v998 = vld [vmem:[#allocation2 + $0x10] sm:$0xf]
        %v999 = vld [vmem:[#allocation2 + $0x14] sm:$0xf]
        %v1000 = vld [vmem:[#allocation2 + $0x18] sm:$0xf]
        %v1001 = vld [vmem:[#allocation2 + $0x1c] sm:$0xf]
        %v1002 = vld [vmem:[#allocation2 + $0x20] sm:$0xf]
        %v1003 = vld [vmem:[#allocation2 + $0x24] sm:$0xf]
        %v1004 = vld [vmem:[#allocation2 + $0x28] sm:$0xf]
        %v1005 = vld [vmem:[#allocation2 + $0x2c] sm:$0xf]
        %v1006 = vld [vmem:[#allocation2 + $0x30] sm:$0xf]
        %v1007 = vld [vmem:[#allocation2 + $0x34] sm:$0xf]
        %v1008 = vld [vmem:[#allocation2 + $0x38] sm:$0xf]
        %v1009 = vld [vmem:[#allocation2 + $0x3c] sm:$0xf]
        %v1010 = vld [vmem:[#allocation2 + $0x40] sm:$0xf]
        %v1011 = vld [vmem:[#allocation2 + $0x44] sm:$0xf]
        %v1012 = vld [vmem:[#allocation2 + $0x48] sm:$0xf]
        %v1013 = vld [vmem:[#allocation2 + $0x4c] sm:$0xf]
        %v1014 = vld [vmem:[#allocation2 + $0x50] sm:$0xf]
        %v1015 = vld [vmem:[#allocation2 + $0x54] sm:$0xf]
        %v1016 = vld [vmem:[#allocation2 + $0x58] sm:$0xf]
        %v1017 = vld [vmem:[#allocation2 + $0x5c] sm:$0xf]
        %v1018 = vld [vmem:[#allocation2 + $0x60] sm:$0xf]
        %v1019 = vld [vmem:[#allocation2 + $0x64] sm:$0xf]
        %v1020 = vld [vmem:[#allocation2 + $0x68] sm:$0xf]
        %v1021 = vld [vmem:[#allocation2 + $0x6c] sm:$0xf]
        %v1022 = vld [vmem:[#allocation2 + $0x70] sm:$0xf]
        %v1023 = vld [vmem:[#allocation2 + $0x74] sm:$0xf]
        %v1024 = vld [vmem:[#allocation2 + $0x78] sm:$0xf]
        %v1025 = vld [vmem:[#allocation2 + $0x7c] sm:$0xf]
        %v1058 = vunpack.c.l.b16 %v994
        %v1059 = vunpack.c.l.b16 %v995
        %v1060 = vunpack.c.l.b16 %v996
        %v1061 = vunpack.c.l.b16 %v997
        %v1062 = vunpack.c.l.b16 %v998
        %v1063 = vunpack.c.l.b16 %v999
        %v1064 = vunpack.c.l.b16 %v1000
        %v1065 = vunpack.c.l.b16 %v1001
        %v1066 = vunpack.c.l.b16 %v1002
        %v1067 = vunpack.c.l.b16 %v1003
        %v1068 = vunpack.c.l.b16 %v1004
        %v1069 = vunpack.c.l.b16 %v1005
        %v1070 = vunpack.c.l.b16 %v1006
        %v1071 = vunpack.c.l.b16 %v1007
        %v1072 = vunpack.c.l.b16 %v1008
        %v1073 = vunpack.c.l.b16 %v1009
        %v1074 = vunpack.c.l.b16 %v1010
        %v1075 = vunpack.c.l.b16 %v1011
        %v1076 = vunpack.c.l.b16 %v1012
        %v1077 = vunpack.c.l.b16 %v1013
        %v1078 = vunpack.c.l.b16 %v1014
        %v1079 = vunpack.c.l.b16 %v1015
        %v1080 = vunpack.c.l.b16 %v1016
        %v1081 = vunpack.c.l.b16 %v1017
        %v1082 = vunpack.c.l.b16 %v1018
        %v1083 = vunpack.c.l.b16 %v1019
        %v1084 = vunpack.c.l.b16 %v1020
        %v1085 = vunpack.c.l.b16 %v1021
        %v1086 = vunpack.c.l.b16 %v1022
        %v1087 = vunpack.c.l.b16 %v1023
        %v1088 = vunpack.c.l.b16 %v1024
        %v1089 = vunpack.c.l.b16 %v1025
        %v1090 = vpack.c.b16 %v1059, %v1058
        %v1091 = vpack.c.b16 %v1061, %v1060
        %v1092 = vpack.c.b16 %v1063, %v1062
        %v1093 = vpack.c.b16 %v1065, %v1064
        %v1094 = vpack.c.b16 %v1067, %v1066
        %v1095 = vpack.c.b16 %v1069, %v1068
        %v1096 = vpack.c.b16 %v1071, %v1070
        %v1097 = vpack.c.b16 %v1073, %v1072
        %v1098 = vpack.c.b16 %v1075, %v1074
        %v1099 = vpack.c.b16 %v1077, %v1076
        %v1100 = vpack.c.b16 %v1079, %v1078
        %v1101 = vpack.c.b16 %v1081, %v1080
        %v1102 = vpack.c.b16 %v1083, %v1082
        %v1103 = vpack.c.b16 %v1085, %v1084
        %v1104 = vpack.c.b16 %v1087, %v1086
        %v1105 = vpack.c.b16 %v1089, %v1088
        %v1154 = vunpack.c.l.b16 %v930
        %v1155 = vunpack.c.l.b16 %v931
        %v1156 = vunpack.c.l.b16 %v932
        %v1157 = vunpack.c.l.b16 %v933
        %v1158 = vunpack.c.l.b16 %v934
        %v1159 = vunpack.c.l.b16 %v935
        %v1160 = vunpack.c.l.b16 %v936
        %v1161 = vunpack.c.l.b16 %v937
        %v1162 = vunpack.c.l.b16 %v938
        %v1163 = vunpack.c.l.b16 %v939
        %v1164 = vunpack.c.l.b16 %v940
        %v1165 = vunpack.c.l.b16 %v941
        %v1166 = vunpack.c.l.b16 %v942
        %v1167 = vunpack.c.l.b16 %v943
        %v1168 = vunpack.c.l.b16 %v944
        %v1169 = vunpack.c.l.b16 %v945
        %v1170 = vunpack.c.l.b16 %v946
        %v1171 = vunpack.c.l.b16 %v947
        %v1172 = vunpack.c.l.b16 %v948
        %v1173 = vunpack.c.l.b16 %v949
        %v1174 = vunpack.c.l.b16 %v950
        %v1175 = vunpack.c.l.b16 %v951
        %v1176 = vunpack.c.l.b16 %v952
        %v1177 = vunpack.c.l.b16 %v953
        %v1178 = vunpack.c.l.b16 %v954
        %v1179 = vunpack.c.l.b16 %v955
        %v1180 = vunpack.c.l.b16 %v956
        %v1181 = vunpack.c.l.b16 %v957
        %v1182 = vunpack.c.l.b16 %v958
        %v1183 = vunpack.c.l.b16 %v959
        %v1184 = vunpack.c.l.b16 %v960
        %v1185 = vunpack.c.l.b16 %v961
        %v1186 = vpack.c.b16 %v1155, %v1154
        %v1187 = vpack.c.b16 %v1157, %v1156
        %v1188 = vpack.c.b16 %v1159, %v1158
        %v1189 = vpack.c.b16 %v1161, %v1160
        %v1190 = vpack.c.b16 %v1163, %v1162
        %v1191 = vpack.c.b16 %v1165, %v1164
        %v1192 = vpack.c.b16 %v1167, %v1166
        %v1193 = vpack.c.b16 %v1169, %v1168
        %v1194 = vpack.c.b16 %v1171, %v1170
        %v1195 = vpack.c.b16 %v1173, %v1172
        %v1196 = vpack.c.b16 %v1175, %v1174
        %v1197 = vpack.c.b16 %v1177, %v1176
        %v1198 = vpack.c.b16 %v1179, %v1178
        %v1199 = vpack.c.b16 %v1181, %v1180
        %v1200 = vpack.c.b16 %v1183, %v1182
        %v1201 = vpack.c.b16 %v1185, %v1184
        %1218 = vmatprep.subr.bf16.mxu0 0
        %1219 = vmatpush1.bf16.xpose.msra.mxu0 %v1193
        %1220 = vmatprep.subr.bf16.mxu0 0
        %1221 = vmatpush1.bf16.xpose.msra.mxu0 %v1192
        %1222 = vmatprep.subr.bf16.mxu0 0
        %1223 = vmatpush1.bf16.xpose.msra.mxu0 %v1191
        %1224 = vmatprep.subr.bf16.mxu0 0
        %1225 = vmatpush1.bf16.xpose.msra.mxu0 %v1190
        %1226 = vmatprep.subr.bf16.mxu0 0
        %1227 = vmatpush1.bf16.xpose.msra.mxu0 %v1189
        %1228 = vmatprep.subr.bf16.mxu0 0
        %1229 = vmatpush1.bf16.xpose.msra.mxu0 %v1188
        %1230 = vmatprep.subr.bf16.mxu0 0
        %1231 = vmatpush1.bf16.xpose.msra.mxu0 %v1187
        %1232 = vmatprep.subr.bf16.mxu0 0
        %1233 = vmatpush1.bf16.xpose.msra.mxu0 %v1186
        %1234 = vmatprep.subr.bf16.mxu0 0
        %1235 = vmatpush2.bf16.xpose.msra.mxu0 %v1201
        %1236 = vmatprep.subr.bf16.mxu0 0
        %1237 = vmatpush2.bf16.xpose.msra.mxu0 %v1200
        %1238 = vmatprep.subr.bf16.mxu0 0
        %1239 = vmatpush2.bf16.xpose.msra.mxu0 %v1199
        %1240 = vmatprep.subr.bf16.mxu0 0
        %1241 = vmatpush2.bf16.xpose.msra.mxu0 %v1198
        %1242 = vmatprep.subr.bf16.mxu0 0
        %1243 = vmatpush2.bf16.xpose.msra.mxu0 %v1197
        %1244 = vmatprep.subr.bf16.mxu0 0
        %1245 = vmatpush2.bf16.xpose.msra.mxu0 %v1196
        %1246 = vmatprep.subr.bf16.mxu0 0
        %1247 = vmatpush2.bf16.xpose.msra.mxu0 %v1195
        %1248 = vmatprep.subr.bf16.mxu0 0
        %1249 = vmatpush2.bf16.xpose.msra.mxu0 %v1194
        %1250 = vmatprep.mubr.bf16.mxu0 0
        %1251 = vmatmul.mubr.bf16.gmra.mxu0 %v1090
        %v1252 = vpop.f32.mrf.mxu0
        %v1253 = vadd.f32 0.0, %v1252
        %v1254 = vpop.f32.mrf.mxu0
        %v1255 = vadd.f32 0.0, %v1254
        %v1256 = vpop.f32.mrf.mxu0
        %v1257 = vadd.f32 0.0, %v1256
        %v1258 = vpop.f32.mrf.mxu0
        %v1259 = vadd.f32 0.0, %v1258
        %1260 = vmatprep.mubr.bf16.mxu0 0
        %1261 = vmatmul.mubr.bf16.gmra.mxu0 %v1091
        %v1262 = vpop.f32.mrf.mxu0
        %v1263 = vadd.f32 0.0, %v1262
        %v1264 = vpop.f32.mrf.mxu0
        %v1265 = vadd.f32 0.0, %v1264
        %v1266 = vpop.f32.mrf.mxu0
        %v1267 = vadd.f32 0.0, %v1266
        %v1268 = vpop.f32.mrf.mxu0
        %v1269 = vadd.f32 0.0, %v1268
        %1270 = vmatprep.mubr.bf16.mxu0 0
        %1271 = vmatmul.mubr.bf16.gmra.mxu0 %v1092
        %v1272 = vpop.f32.mrf.mxu0
        %v1273 = vadd.f32 0.0, %v1272
        %v1274 = vpop.f32.mrf.mxu0
        %v1275 = vadd.f32 0.0, %v1274
        %v1276 = vpop.f32.mrf.mxu0
        %v1277 = vadd.f32 0.0, %v1276
        %v1278 = vpop.f32.mrf.mxu0
        %v1279 = vadd.f32 0.0, %v1278
        %1280 = vmatprep.mubr.bf16.mxu0 0
        %1281 = vmatmul.mubr.bf16.gmra.mxu0 %v1093
        %v1282 = vpop.f32.mrf.mxu0
        %v1283 = vadd.f32 0.0, %v1282
        %v1284 = vpop.f32.mrf.mxu0
        %v1285 = vadd.f32 0.0, %v1284
        %v1286 = vpop.f32.mrf.mxu0
        %v1287 = vadd.f32 0.0, %v1286
        %v1288 = vpop.f32.mrf.mxu0
        %v1289 = vadd.f32 0.0, %v1288
        %1290 = vmatprep.mubr.bf16.mxu0 0
        %1291 = vmatmul.mubr.bf16.gmra.mxu0 %v1094
        %v1292 = vpop.f32.mrf.mxu0
        %v1293 = vadd.f32 0.0, %v1292
        %v1294 = vpop.f32.mrf.mxu0
        %v1295 = vadd.f32 0.0, %v1294
        %v1296 = vpop.f32.mrf.mxu0
        %v1297 = vadd.f32 0.0, %v1296
        %v1298 = vpop.f32.mrf.mxu0
        %v1299 = vadd.f32 0.0, %v1298
        %1300 = vmatprep.mubr.bf16.mxu0 0
        %1301 = vmatmul.mubr.bf16.gmra.mxu0 %v1095
        %v1302 = vpop.f32.mrf.mxu0
        %v1303 = vadd.f32 0.0, %v1302
        %v1304 = vpop.f32.mrf.mxu0
        %v1305 = vadd.f32 0.0, %v1304
        %v1306 = vpop.f32.mrf.mxu0
        %v1307 = vadd.f32 0.0, %v1306
        %v1308 = vpop.f32.mrf.mxu0
        %v1309 = vadd.f32 0.0, %v1308
        %1310 = vmatprep.mubr.bf16.mxu0 0
        %1311 = vmatmul.mubr.bf16.gmra.mxu0 %v1096
        %v1312 = vpop.f32.mrf.mxu0
        %v1313 = vadd.f32 0.0, %v1312
        %v1314 = vpop.f32.mrf.mxu0
        %v1315 = vadd.f32 0.0, %v1314
        %v1316 = vpop.f32.mrf.mxu0
        %v1317 = vadd.f32 0.0, %v1316
        %v1318 = vpop.f32.mrf.mxu0
        %v1319 = vadd.f32 0.0, %v1318
        %1320 = vmatprep.mubr.bf16.mxu0 0
        %1321 = vmatmul.mubr.bf16.gmra.mxu0 %v1097
        %v1322 = vpop.f32.mrf.mxu0
        %v1323 = vadd.f32 0.0, %v1322
        %v1324 = vpop.f32.mrf.mxu0
        %v1325 = vadd.f32 0.0, %v1324
        %v1326 = vpop.f32.mrf.mxu0
        %v1327 = vadd.f32 0.0, %v1326
        %v1328 = vpop.f32.mrf.mxu0
        %v1329 = vadd.f32 0.0, %v1328
        %1330 = vmatprep.mubr.bf16.mxu0 0
        %1331 = vmatmul.mubr.bf16.gmra.mxu0 %v1098
        %v1332 = vpop.f32.mrf.mxu0
        %v1333 = vadd.f32 0.0, %v1332
        %v1334 = vpop.f32.mrf.mxu0
        %v1335 = vadd.f32 0.0, %v1334
        %v1336 = vpop.f32.mrf.mxu0
        %v1337 = vadd.f32 0.0, %v1336
        %v1338 = vpop.f32.mrf.mxu0
        %v1339 = vadd.f32 0.0, %v1338
        %1340 = vmatprep.mubr.bf16.mxu0 0
        %1341 = vmatmul.mubr.bf16.gmra.mxu0 %v1099
        %v1342 = vpop.f32.mrf.mxu0
        %v1343 = vadd.f32 0.0, %v1342
        %v1344 = vpop.f32.mrf.mxu0
        %v1345 = vadd.f32 0.0, %v1344
        %v1346 = vpop.f32.mrf.mxu0
        %v1347 = vadd.f32 0.0, %v1346
        %v1348 = vpop.f32.mrf.mxu0
        %v1349 = vadd.f32 0.0, %v1348
        %1350 = vmatprep.mubr.bf16.mxu0 0
        %1351 = vmatmul.mubr.bf16.gmra.mxu0 %v1100
        %v1352 = vpop.f32.mrf.mxu0
        %v1353 = vadd.f32 0.0, %v1352
        %v1354 = vpop.f32.mrf.mxu0
        %v1355 = vadd.f32 0.0, %v1354
        %v1356 = vpop.f32.mrf.mxu0
        %v1357 = vadd.f32 0.0, %v1356
        %v1358 = vpop.f32.mrf.mxu0
        %v1359 = vadd.f32 0.0, %v1358
        %1360 = vmatprep.mubr.bf16.mxu0 0
        %1361 = vmatmul.mubr.bf16.gmra.mxu0 %v1101
        %v1362 = vpop.f32.mrf.mxu0
        %v1363 = vadd.f32 0.0, %v1362
        %v1364 = vpop.f32.mrf.mxu0
        %v1365 = vadd.f32 0.0, %v1364
        %v1366 = vpop.f32.mrf.mxu0
        %v1367 = vadd.f32 0.0, %v1366
        %v1368 = vpop.f32.mrf.mxu0
        %v1369 = vadd.f32 0.0, %v1368
        %1370 = vmatprep.mubr.bf16.mxu0 0
        %1371 = vmatmul.mubr.bf16.gmra.mxu0 %v1102
        %v1372 = vpop.f32.mrf.mxu0
        %v1373 = vadd.f32 0.0, %v1372
        %v1374 = vpop.f32.mrf.mxu0
        %v1375 = vadd.f32 0.0, %v1374
        %v1376 = vpop.f32.mrf.mxu0
        %v1377 = vadd.f32 0.0, %v1376
        %v1378 = vpop.f32.mrf.mxu0
        %v1379 = vadd.f32 0.0, %v1378
        %1380 = vmatprep.mubr.bf16.mxu0 0
        %1381 = vmatmul.mubr.bf16.gmra.mxu0 %v1103
        %v1382 = vpop.f32.mrf.mxu0
        %v1383 = vadd.f32 0.0, %v1382
        %v1384 = vpop.f32.mrf.mxu0
        %v1385 = vadd.f32 0.0, %v1384
        %v1386 = vpop.f32.mrf.mxu0
        %v1387 = vadd.f32 0.0, %v1386
        %v1388 = vpop.f32.mrf.mxu0
        %v1389 = vadd.f32 0.0, %v1388
        %1390 = vmatprep.mubr.bf16.mxu0 0
        %1391 = vmatmul.mubr.bf16.gmra.mxu0 %v1104
        %v1392 = vpop.f32.mrf.mxu0
        %v1393 = vadd.f32 0.0, %v1392
        %v1394 = vpop.f32.mrf.mxu0
        %v1395 = vadd.f32 0.0, %v1394
        %v1396 = vpop.f32.mrf.mxu0
        %v1397 = vadd.f32 0.0, %v1396
        %v1398 = vpop.f32.mrf.mxu0
        %v1399 = vadd.f32 0.0, %v1398
        %1400 = vmatprep.mubr.bf16.mxu0 0
        %1401 = vmatmul.mubr.bf16.gmra.mxu0 %v1105
        %v1402 = vpop.f32.mrf.mxu0
        %v1403 = vadd.f32 0.0, %v1402
        %v1404 = vpop.f32.mrf.mxu0
        %v1405 = vadd.f32 0.0, %v1404
        %v1406 = vpop.f32.mrf.mxu0
        %v1407 = vadd.f32 0.0, %v1406
        %v1408 = vpop.f32.mrf.mxu0
        %v1409 = vadd.f32 0.0, %v1408
        %1410 = vdwg.mxu0
        %v1411 = vld [vmem:[#allocation3] sm:$0xff]
        %v1412 = vld [vmem:[#allocation3 + $0x8] sm:$0xff]
        %v1413 = vld [vmem:[#allocation3 + $0x10] sm:$0xff]
        %v1414 = vld [vmem:[#allocation3 + $0x18] sm:$0xff]
        %v1415 = vld [vmem:[#allocation3 + $0x20] sm:$0xff]
        %v1416 = vld [vmem:[#allocation3 + $0x28] sm:$0xff]
        %v1417 = vld [vmem:[#allocation3 + $0x30] sm:$0xff]
        %v1418 = vld [vmem:[#allocation3 + $0x38] sm:$0xff]
        %v1419 = vld [vmem:[#allocation3 + $0x40] sm:$0xff]
        %v1420 = vld [vmem:[#allocation3 + $0x48] sm:$0xff]
        %v1421 = vld [vmem:[#allocation3 + $0x50] sm:$0xff]
        %v1422 = vld [vmem:[#allocation3 + $0x58] sm:$0xff]
        %v1423 = vld [vmem:[#allocation3 + $0x60] sm:$0xff]
        %v1424 = vld [vmem:[#allocation3 + $0x68] sm:$0xff]
        %v1425 = vld [vmem:[#allocation3 + $0x70] sm:$0xff]
        %v1426 = vld [vmem:[#allocation3 + $0x78] sm:$0xff]
        %v1427 = vld [vmem:[#allocation3 + $0x80] sm:$0xff]
        %v1428 = vld [vmem:[#allocation3 + $0x88] sm:$0xff]
        %v1429 = vld [vmem:[#allocation3 + $0x90] sm:$0xff]
        %v1430 = vld [vmem:[#allocation3 + $0x98] sm:$0xff]
        %v1431 = vld [vmem:[#allocation3 + $0xa0] sm:$0xff]
        %v1432 = vld [vmem:[#allocation3 + $0xa8] sm:$0xff]
        %v1433 = vld [vmem:[#allocation3 + $0xb0] sm:$0xff]
        %v1434 = vld [vmem:[#allocation3 + $0xb8] sm:$0xff]
        %v1435 = vld [vmem:[#allocation3 + $0xc0] sm:$0xff]
        %v1436 = vld [vmem:[#allocation3 + $0xc8] sm:$0xff]
        %v1437 = vld [vmem:[#allocation3 + $0xd0] sm:$0xff]
        %v1438 = vld [vmem:[#allocation3 + $0xd8] sm:$0xff]
        %v1439 = vld [vmem:[#allocation3 + $0xe0] sm:$0xff]
        %v1440 = vld [vmem:[#allocation3 + $0xe8] sm:$0xff]
        %v1441 = vld [vmem:[#allocation3 + $0xf0] sm:$0xff]
        %v1442 = vld [vmem:[#allocation3 + $0xf8] sm:$0xff]
        %v1443 = vmax.f32 %v1253, %v1255
        %1444 = vmax.xlane.f32.xlu0 %v1443
        %v1445 = vpop.xlane.xlu0 %1444
        %v1446 = vmax.f32 %v1257, %v1259
        %1447 = vmax.xlane.f32.xlu0 %v1446
        %v1448 = vpop.xlane.xlu0 %1447
        %v1449 = vmax.f32 %v1263, %v1265
        %1450 = vmax.xlane.f32.xlu0 %v1449
        %v1451 = vpop.xlane.xlu0 %1450
        %v1452 = vmax.f32 %v1267, %v1269
        %1453 = vmax.xlane.f32.xlu0 %v1452
        %v1454 = vpop.xlane.xlu0 %1453
        %v1455 = vmax.f32 %v1273, %v1275
        %1456 = vmax.xlane.f32.xlu0 %v1455
        %v1457 = vpop.xlane.xlu0 %1456
        %v1458 = vmax.f32 %v1277, %v1279
        %1459 = vmax.xlane.f32.xlu0 %v1458
        %v1460 = vpop.xlane.xlu0 %1459
        %v1461 = vmax.f32 %v1283, %v1285
        %1462 = vmax.xlane.f32.xlu0 %v1461
        %v1463 = vpop.xlane.xlu0 %1462
        %v1464 = vmax.f32 %v1287, %v1289
        %1465 = vmax.xlane.f32.xlu0 %v1464
        %v1466 = vpop.xlane.xlu0 %1465
        %v1467 = vmax.f32 %v1293, %v1295
        %1468 = vmax.xlane.f32.xlu0 %v1467
        %v1469 = vpop.xlane.xlu0 %1468
        %v1470 = vmax.f32 %v1297, %v1299
        %1471 = vmax.xlane.f32.xlu0 %v1470
        %v1472 = vpop.xlane.xlu0 %1471
        %v1473 = vmax.f32 %v1303, %v1305
        %1474 = vmax.xlane.f32.xlu0 %v1473
        %v1475 = vpop.xlane.xlu0 %1474
        %v1476 = vmax.f32 %v1307, %v1309
        %1477 = vmax.xlane.f32.xlu0 %v1476
        %v1478 = vpop.xlane.xlu0 %1477
        %v1479 = vmax.f32 %v1313, %v1315
        %1480 = vmax.xlane.f32.xlu0 %v1479
        %v1481 = vpop.xlane.xlu0 %1480
        %v1482 = vmax.f32 %v1317, %v1319
        %1483 = vmax.xlane.f32.xlu0 %v1482
        %v1484 = vpop.xlane.xlu0 %1483
        %v1485 = vmax.f32 %v1323, %v1325
        %1486 = vmax.xlane.f32.xlu0 %v1485
        %v1487 = vpop.xlane.xlu0 %1486
        %v1488 = vmax.f32 %v1327, %v1329
        %1489 = vmax.xlane.f32.xlu0 %v1488
        %v1490 = vpop.xlane.xlu0 %1489
        %v1491 = vmax.f32 %v1333, %v1335
        %1492 = vmax.xlane.f32.xlu0 %v1491
        %v1493 = vpop.xlane.xlu0 %1492
        %v1494 = vmax.f32 %v1337, %v1339
        %1495 = vmax.xlane.f32.xlu0 %v1494
        %v1496 = vpop.xlane.xlu0 %1495
        %v1497 = vmax.f32 %v1343, %v1345
        %1498 = vmax.xlane.f32.xlu0 %v1497
        %v1499 = vpop.xlane.xlu0 %1498
        %v1500 = vmax.f32 %v1347, %v1349
        %1501 = vmax.xlane.f32.xlu0 %v1500
        %v1502 = vpop.xlane.xlu0 %1501
        %v1503 = vmax.f32 %v1353, %v1355
        %1504 = vmax.xlane.f32.xlu0 %v1503
        %v1505 = vpop.xlane.xlu0 %1504
        %v1506 = vmax.f32 %v1357, %v1359
        %1507 = vmax.xlane.f32.xlu0 %v1506
        %v1508 = vpop.xlane.xlu0 %1507
        %v1509 = vmax.f32 %v1363, %v1365
        %1510 = vmax.xlane.f32.xlu0 %v1509
        %v1511 = vpop.xlane.xlu0 %1510
        %v1512 = vmax.f32 %v1367, %v1369
        %1513 = vmax.xlane.f32.xlu0 %v1512
        %v1514 = vpop.xlane.xlu0 %1513
        %v1515 = vmax.f32 %v1373, %v1375
        %1516 = vmax.xlane.f32.xlu0 %v1515
        %v1517 = vpop.xlane.xlu0 %1516
        %v1518 = vmax.f32 %v1377, %v1379
        %1519 = vmax.xlane.f32.xlu0 %v1518
        %v1520 = vpop.xlane.xlu0 %1519
        %v1521 = vmax.f32 %v1383, %v1385
        %1522 = vmax.xlane.f32.xlu0 %v1521
        %v1523 = vpop.xlane.xlu0 %1522
        %v1524 = vmax.f32 %v1387, %v1389
        %1525 = vmax.xlane.f32.xlu0 %v1524
        %v1526 = vpop.xlane.xlu0 %1525
        %v1527 = vmax.f32 %v1393, %v1395
        %1528 = vmax.xlane.f32.xlu0 %v1527
        %v1529 = vpop.xlane.xlu0 %1528
        %v1530 = vmax.f32 %v1397, %v1399
        %1531 = vmax.xlane.f32.xlu0 %v1530
        %v1532 = vpop.xlane.xlu0 %1531
        %v1533 = vmax.f32 %v1403, %v1405
        %1534 = vmax.xlane.f32.xlu0 %v1533
        %v1535 = vpop.xlane.xlu0 %1534
        %v1536 = vmax.f32 %v1407, %v1409
        %1537 = vmax.xlane.f32.xlu0 %v1536
        %v1538 = vpop.xlane.xlu0 %1537
        %v1539 = vmax.f32 %v1411, %v1445
        %v1540 = vmax.f32 %v1412, %v1448
        %v1541 = vmax.f32 %v1413, %v1451
        %v1542 = vmax.f32 %v1414, %v1454
        %v1543 = vmax.f32 %v1415, %v1457
        %v1544 = vmax.f32 %v1416, %v1460
        %v1545 = vmax.f32 %v1417, %v1463
        %v1546 = vmax.f32 %v1418, %v1466
        %v1547 = vmax.f32 %v1419, %v1469
        %v1548 = vmax.f32 %v1420, %v1472
        %v1549 = vmax.f32 %v1421, %v1475
        %v1550 = vmax.f32 %v1422, %v1478
        %v1551 = vmax.f32 %v1423, %v1481
        %v1552 = vmax.f32 %v1424, %v1484
        %v1553 = vmax.f32 %v1425, %v1487
        %v1554 = vmax.f32 %v1426, %v1490
        %v1555 = vmax.f32 %v1427, %v1493
        %v1556 = vmax.f32 %v1428, %v1496
        %v1557 = vmax.f32 %v1429, %v1499
        %v1558 = vmax.f32 %v1430, %v1502
        %v1559 = vmax.f32 %v1431, %v1505
        %v1560 = vmax.f32 %v1432, %v1508
        %v1561 = vmax.f32 %v1433, %v1511
        %v1562 = vmax.f32 %v1434, %v1514
        %v1563 = vmax.f32 %v1435, %v1517
        %v1564 = vmax.f32 %v1436, %v1520
        %v1565 = vmax.f32 %v1437, %v1523
        %v1566 = vmax.f32 %v1438, %v1526
        %v1567 = vmax.f32 %v1439, %v1529
        %v1568 = vmax.f32 %v1440, %v1532
        %v1569 = vmax.f32 %v1441, %v1535
        %v1570 = vmax.f32 %v1442, %v1538
        %v1571 = vsub.f32 %v1411, %v1539
        %v1572 = vsub.f32 %v1412, %v1540
        %v1573 = vsub.f32 %v1413, %v1541
        %v1574 = vsub.f32 %v1414, %v1542
        %v1575 = vsub.f32 %v1415, %v1543
        %v1576 = vsub.f32 %v1416, %v1544
        %v1577 = vsub.f32 %v1417, %v1545
        %v1578 = vsub.f32 %v1418, %v1546
        %v1579 = vsub.f32 %v1419, %v1547
        %v1580 = vsub.f32 %v1420, %v1548
        %v1581 = vsub.f32 %v1421, %v1549
        %v1582 = vsub.f32 %v1422, %v1550
        %v1583 = vsub.f32 %v1423, %v1551
        %v1584 = vsub.f32 %v1424, %v1552
        %v1585 = vsub.f32 %v1425, %v1553
        %v1586 = vsub.f32 %v1426, %v1554
        %v1587 = vsub.f32 %v1427, %v1555
        %v1588 = vsub.f32 %v1428, %v1556
        %v1589 = vsub.f32 %v1429, %v1557
        %v1590 = vsub.f32 %v1430, %v1558
        %v1591 = vsub.f32 %v1431, %v1559
        %v1592 = vsub.f32 %v1432, %v1560
        %v1593 = vsub.f32 %v1433, %v1561
        %v1594 = vsub.f32 %v1434, %v1562
        %v1595 = vsub.f32 %v1435, %v1563
        %v1596 = vsub.f32 %v1436, %v1564
        %v1597 = vsub.f32 %v1437, %v1565
        %v1598 = vsub.f32 %v1438, %v1566
        %v1599 = vsub.f32 %v1439, %v1567
        %v1600 = vsub.f32 %v1440, %v1568
        %v1601 = vsub.f32 %v1441, %v1569
        %v1602 = vsub.f32 %v1442, %v1570
        %v1603 = vmul.f32 %v1571, 1.442695
        %v1604 = vpow.pop %v1603
        %v1605 = vmul.f32 %v1572, 1.442695
        %v1606 = vpow.pop %v1605
        %v1607 = vmul.f32 %v1573, 1.442695
        %v1608 = vpow.pop %v1607
        %v1609 = vmul.f32 %v1574, 1.442695
        %v1610 = vpow.pop %v1609
        %v1611 = vmul.f32 %v1575, 1.442695
        %v1612 = vpow.pop %v1611
        %v1613 = vmul.f32 %v1576, 1.442695
        %v1614 = vpow.pop %v1613
        %v1615 = vmul.f32 %v1577, 1.442695
        %v1616 = vpow.pop %v1615
        %v1617 = vmul.f32 %v1578, 1.442695
        %v1618 = vpow.pop %v1617
        %v1619 = vmul.f32 %v1579, 1.442695
        %v1620 = vpow.pop %v1619
        %v1621 = vmul.f32 %v1580, 1.442695
        %v1622 = vpow.pop %v1621
        %v1623 = vmul.f32 %v1581, 1.442695
        %v1624 = vpow.pop %v1623
        %v1625 = vmul.f32 %v1582, 1.442695
        %v1626 = vpow.pop %v1625
        %v1627 = vmul.f32 %v1583, 1.442695
        %v1628 = vpow.pop %v1627
        %v1629 = vmul.f32 %v1584, 1.442695
        %v1630 = vpow.pop %v1629
        %v1631 = vmul.f32 %v1585, 1.442695
        %v1632 = vpow.pop %v1631
        %v1633 = vmul.f32 %v1586, 1.442695
        %v1634 = vpow.pop %v1633
        %v1635 = vmul.f32 %v1587, 1.442695
        %v1636 = vpow.pop %v1635
        %v1637 = vmul.f32 %v1588, 1.442695
        %v1638 = vpow.pop %v1637
        %v1639 = vmul.f32 %v1589, 1.442695
        %v1640 = vpow.pop %v1639
        %v1641 = vmul.f32 %v1590, 1.442695
        %v1642 = vpow.pop %v1641
        %v1643 = vmul.f32 %v1591, 1.442695
        %v1644 = vpow.pop %v1643
        %v1645 = vmul.f32 %v1592, 1.442695
        %v1646 = vpow.pop %v1645
        %v1647 = vmul.f32 %v1593, 1.442695
        %v1648 = vpow.pop %v1647
        %v1649 = vmul.f32 %v1594, 1.442695
        %v1650 = vpow.pop %v1649
        %v1651 = vmul.f32 %v1595, 1.442695
        %v1652 = vpow.pop %v1651
        %v1653 = vmul.f32 %v1596, 1.442695
        %v1654 = vpow.pop %v1653
        %v1655 = vmul.f32 %v1597, 1.442695
        %v1656 = vpow.pop %v1655
        %v1657 = vmul.f32 %v1598, 1.442695
        %v1658 = vpow.pop %v1657
        %v1659 = vmul.f32 %v1599, 1.442695
        %v1660 = vpow.pop %v1659
        %v1661 = vmul.f32 %v1600, 1.442695
        %v1662 = vpow.pop %v1661
        %v1663 = vmul.f32 %v1601, 1.442695
        %v1664 = vpow.pop %v1663
        %v1665 = vmul.f32 %v1602, 1.442695
        %v1666 = vpow.pop %v1665
        %1668 = vset.pattern.permute.xlu0 0
        %1669 = vperm.xlu0 %1668, %v1539
        %v1670 = vpop.permute.xlu0 %1669
        %1673 = vset.pattern.permute.xlu0 0
        %1674 = vperm.xlu0 %1673, %v1540
        %v1675 = vpop.permute.xlu0 %1674
        %1678 = vset.pattern.permute.xlu0 0
        %1679 = vperm.xlu0 %1678, %v1541
        %v1680 = vpop.permute.xlu0 %1679
        %1683 = vset.pattern.permute.xlu0 0
        %1684 = vperm.xlu0 %1683, %v1542
        %v1685 = vpop.permute.xlu0 %1684
        %1688 = vset.pattern.permute.xlu0 0
        %1689 = vperm.xlu0 %1688, %v1543
        %v1690 = vpop.permute.xlu0 %1689
        %1693 = vset.pattern.permute.xlu0 0
        %1694 = vperm.xlu0 %1693, %v1544
        %v1695 = vpop.permute.xlu0 %1694
        %1698 = vset.pattern.permute.xlu0 0
        %1699 = vperm.xlu0 %1698, %v1545
        %v1700 = vpop.permute.xlu0 %1699
        %1703 = vset.pattern.permute.xlu0 0
        %1704 = vperm.xlu0 %1703, %v1546
        %v1705 = vpop.permute.xlu0 %1704
        %1708 = vset.pattern.permute.xlu0 0
        %1709 = vperm.xlu0 %1708, %v1547
        %v1710 = vpop.permute.xlu0 %1709
        %1713 = vset.pattern.permute.xlu0 0
        %1714 = vperm.xlu0 %1713, %v1548
        %v1715 = vpop.permute.xlu0 %1714
        %1718 = vset.pattern.permute.xlu0 0
        %1719 = vperm.xlu0 %1718, %v1549
        %v1720 = vpop.permute.xlu0 %1719
        %1723 = vset.pattern.permute.xlu0 0
        %1724 = vperm.xlu0 %1723, %v1550
        %v1725 = vpop.permute.xlu0 %1724
        %1728 = vset.pattern.permute.xlu0 0
        %1729 = vperm.xlu0 %1728, %v1551
        %v1730 = vpop.permute.xlu0 %1729
        %1733 = vset.pattern.permute.xlu0 0
        %1734 = vperm.xlu0 %1733, %v1552
        %v1735 = vpop.permute.xlu0 %1734
        %1738 = vset.pattern.permute.xlu0 0
        %1739 = vperm.xlu0 %1738, %v1553
        %v1740 = vpop.permute.xlu0 %1739
        %1743 = vset.pattern.permute.xlu0 0
        %1744 = vperm.xlu0 %1743, %v1554
        %v1745 = vpop.permute.xlu0 %1744
        %1748 = vset.pattern.permute.xlu0 0
        %1749 = vperm.xlu0 %1748, %v1555
        %v1750 = vpop.permute.xlu0 %1749
        %1753 = vset.pattern.permute.xlu0 0
        %1754 = vperm.xlu0 %1753, %v1556
        %v1755 = vpop.permute.xlu0 %1754
        %1758 = vset.pattern.permute.xlu0 0
        %1759 = vperm.xlu0 %1758, %v1557
        %v1760 = vpop.permute.xlu0 %1759
        %1763 = vset.pattern.permute.xlu0 0
        %1764 = vperm.xlu0 %1763, %v1558
        %v1765 = vpop.permute.xlu0 %1764
        %1768 = vset.pattern.permute.xlu0 0
        %1769 = vperm.xlu0 %1768, %v1559
        %v1770 = vpop.permute.xlu0 %1769
        %1773 = vset.pattern.permute.xlu0 0
        %1774 = vperm.xlu0 %1773, %v1560
        %v1775 = vpop.permute.xlu0 %1774
        %1778 = vset.pattern.permute.xlu0 0
        %1779 = vperm.xlu0 %1778, %v1561
        %v1780 = vpop.permute.xlu0 %1779
        %1783 = vset.pattern.permute.xlu0 0
        %1784 = vperm.xlu0 %1783, %v1562
        %v1785 = vpop.permute.xlu0 %1784
        %1788 = vset.pattern.permute.xlu0 0
        %1789 = vperm.xlu0 %1788, %v1563
        %v1790 = vpop.permute.xlu0 %1789
        %1793 = vset.pattern.permute.xlu0 0
        %1794 = vperm.xlu0 %1793, %v1564
        %v1795 = vpop.permute.xlu0 %1794
        %1798 = vset.pattern.permute.xlu0 0
        %1799 = vperm.xlu0 %1798, %v1565
        %v1800 = vpop.permute.xlu0 %1799
        %1803 = vset.pattern.permute.xlu0 0
        %1804 = vperm.xlu0 %1803, %v1566
        %v1805 = vpop.permute.xlu0 %1804
        %1808 = vset.pattern.permute.xlu0 0
        %1809 = vperm.xlu0 %1808, %v1567
        %v1810 = vpop.permute.xlu0 %1809
        %1813 = vset.pattern.permute.xlu0 0
        %1814 = vperm.xlu0 %1813, %v1568
        %v1815 = vpop.permute.xlu0 %1814
        %1818 = vset.pattern.permute.xlu0 0
        %1819 = vperm.xlu0 %1818, %v1569
        %v1820 = vpop.permute.xlu0 %1819
        %1823 = vset.pattern.permute.xlu0 0
        %1824 = vperm.xlu0 %1823, %v1570
        %v1825 = vpop.permute.xlu0 %1824
        %v1827 = vsub.f32 %v1253, %v1670
        %v1828 = vsub.f32 %v1255, %v1670
        %v1829 = vsub.f32 %v1257, %v1675
        %v1830 = vsub.f32 %v1259, %v1675
        %v1831 = vsub.f32 %v1263, %v1680
        %v1832 = vsub.f32 %v1265, %v1680
        %v1833 = vsub.f32 %v1267, %v1685
        %v1834 = vsub.f32 %v1269, %v1685
        %v1835 = vsub.f32 %v1273, %v1690
        %v1836 = vsub.f32 %v1275, %v1690
        %v1837 = vsub.f32 %v1277, %v1695
        %v1838 = vsub.f32 %v1279, %v1695
        %v1839 = vsub.f32 %v1283, %v1700
        %v1840 = vsub.f32 %v1285, %v1700
        %v1841 = vsub.f32 %v1287, %v1705
        %v1842 = vsub.f32 %v1289, %v1705
        %v1843 = vsub.f32 %v1293, %v1710
        %v1844 = vsub.f32 %v1295, %v1710
        %v1845 = vsub.f32 %v1297, %v1715
        %v1846 = vsub.f32 %v1299, %v1715
        %v1847 = vsub.f32 %v1303, %v1720
        %v1848 = vsub.f32 %v1305, %v1720
        %v1849 = vsub.f32 %v1307, %v1725
        %v1850 = vsub.f32 %v1309, %v1725
        %v1851 = vsub.f32 %v1313, %v1730
        %v1852 = vsub.f32 %v1315, %v1730
        %v1853 = vsub.f32 %v1317, %v1735
        %v1854 = vsub.f32 %v1319, %v1735
        %v1855 = vsub.f32 %v1323, %v1740
        %v1856 = vsub.f32 %v1325, %v1740
        %v1857 = vsub.f32 %v1327, %v1745
        %v1858 = vsub.f32 %v1329, %v1745
        %v1859 = vsub.f32 %v1333, %v1750
        %v1860 = vsub.f32 %v1335, %v1750
        %v1861 = vsub.f32 %v1337, %v1755
        %v1862 = vsub.f32 %v1339, %v1755
        %v1863 = vsub.f32 %v1343, %v1760
        %v1864 = vsub.f32 %v1345, %v1760
        %v1865 = vsub.f32 %v1347, %v1765
        %v1866 = vsub.f32 %v1349, %v1765
        %v1867 = vsub.f32 %v1353, %v1770
        %v1868 = vsub.f32 %v1355, %v1770
        %v1869 = vsub.f32 %v1357, %v1775
        %v1870 = vsub.f32 %v1359, %v1775
        %v1871 = vsub.f32 %v1363, %v1780
        %v1872 = vsub.f32 %v1365, %v1780
        %v1873 = vsub.f32 %v1367, %v1785
        %v1874 = vsub.f32 %v1369, %v1785
        %v1875 = vsub.f32 %v1373, %v1790
        %v1876 = vsub.f32 %v1375, %v1790
        %v1877 = vsub.f32 %v1377, %v1795
        %v1878 = vsub.f32 %v1379, %v1795
        %v1879 = vsub.f32 %v1383, %v1800
        %v1880 = vsub.f32 %v1385, %v1800
        %v1881 = vsub.f32 %v1387, %v1805
        %v1882 = vsub.f32 %v1389, %v1805
        %v1883 = vsub.f32 %v1393, %v1810
        %v1884 = vsub.f32 %v1395, %v1810
        %v1885 = vsub.f32 %v1397, %v1815
        %v1886 = vsub.f32 %v1399, %v1815
        %v1887 = vsub.f32 %v1403, %v1820
        %v1888 = vsub.f32 %v1405, %v1820
        %v1889 = vsub.f32 %v1407, %v1825
        %v1890 = vsub.f32 %v1409, %v1825
        %v1891 = vmul.f32 %v1827, 1.442695
        %v1892 = vpow.pop %v1891
        %v1893 = vmul.f32 %v1828, 1.442695
        %v1894 = vpow.pop %v1893
        %v1895 = vmul.f32 %v1829, 1.442695
        %v1896 = vpow.pop %v1895
        %v1897 = vmul.f32 %v1830, 1.442695
        %v1898 = vpow.pop %v1897
        %v1899 = vmul.f32 %v1831, 1.442695
        %v1900 = vpow.pop %v1899
        %v1901 = vmul.f32 %v1832, 1.442695
        %v1902 = vpow.pop %v1901
        %v1903 = vmul.f32 %v1833, 1.442695
        %v1904 = vpow.pop %v1903
        %v1905 = vmul.f32 %v1834, 1.442695
        %v1906 = vpow.pop %v1905
        %v1907 = vmul.f32 %v1835, 1.442695
        %v1908 = vpow.pop %v1907
        %v1909 = vmul.f32 %v1836, 1.442695
        %v1910 = vpow.pop %v1909
        %v1911 = vmul.f32 %v1837, 1.442695
        %v1912 = vpow.pop %v1911
        %v1913 = vmul.f32 %v1838, 1.442695
        %v1914 = vpow.pop %v1913
        %v1915 = vmul.f32 %v1839, 1.442695
        %v1916 = vpow.pop %v1915
        %v1917 = vmul.f32 %v1840, 1.442695
        %v1918 = vpow.pop %v1917
        %v1919 = vmul.f32 %v1841, 1.442695
        %v1920 = vpow.pop %v1919
        %v1921 = vmul.f32 %v1842, 1.442695
        %v1922 = vpow.pop %v1921
        %v1923 = vmul.f32 %v1843, 1.442695
        %v1924 = vpow.pop %v1923
        %v1925 = vmul.f32 %v1844, 1.442695
        %v1926 = vpow.pop %v1925
        %v1927 = vmul.f32 %v1845, 1.442695
        %v1928 = vpow.pop %v1927
        %v1929 = vmul.f32 %v1846, 1.442695
        %v1930 = vpow.pop %v1929
        %v1931 = vmul.f32 %v1847, 1.442695
        %v1932 = vpow.pop %v1931
        %v1933 = vmul.f32 %v1848, 1.442695
        %v1934 = vpow.pop %v1933
        %v1935 = vmul.f32 %v1849, 1.442695
        %v1936 = vpow.pop %v1935
        %v1937 = vmul.f32 %v1850, 1.442695
        %v1938 = vpow.pop %v1937
        %v1939 = vmul.f32 %v1851, 1.442695
        %v1940 = vpow.pop %v1939
        %v1941 = vmul.f32 %v1852, 1.442695
        %v1942 = vpow.pop %v1941
        %v1943 = vmul.f32 %v1853, 1.442695
        %v1944 = vpow.pop %v1943
        %v1945 = vmul.f32 %v1854, 1.442695
        %v1946 = vpow.pop %v1945
        %v1947 = vmul.f32 %v1855, 1.442695
        %v1948 = vpow.pop %v1947
        %v1949 = vmul.f32 %v1856, 1.442695
        %v1950 = vpow.pop %v1949
        %v1951 = vmul.f32 %v1857, 1.442695
        %v1952 = vpow.pop %v1951
        %v1953 = vmul.f32 %v1858, 1.442695
        %v1954 = vpow.pop %v1953
        %v1955 = vmul.f32 %v1859, 1.442695
        %v1956 = vpow.pop %v1955
        %v1957 = vmul.f32 %v1860, 1.442695
        %v1958 = vpow.pop %v1957
        %v1959 = vmul.f32 %v1861, 1.442695
        %v1960 = vpow.pop %v1959
        %v1961 = vmul.f32 %v1862, 1.442695
        %v1962 = vpow.pop %v1961
        %v1963 = vmul.f32 %v1863, 1.442695
        %v1964 = vpow.pop %v1963
        %v1965 = vmul.f32 %v1864, 1.442695
        %v1966 = vpow.pop %v1965
        %v1967 = vmul.f32 %v1865, 1.442695
        %v1968 = vpow.pop %v1967
        %v1969 = vmul.f32 %v1866, 1.442695
        %v1970 = vpow.pop %v1969
        %v1971 = vmul.f32 %v1867, 1.442695
        %v1972 = vpow.pop %v1971
        %v1973 = vmul.f32 %v1868, 1.442695
        %v1974 = vpow.pop %v1973
        %v1975 = vmul.f32 %v1869, 1.442695
        %v1976 = vpow.pop %v1975
        %v1977 = vmul.f32 %v1870, 1.442695
        %v1978 = vpow.pop %v1977
        %v1979 = vmul.f32 %v1871, 1.442695
        %v1980 = vpow.pop %v1979
        %v1981 = vmul.f32 %v1872, 1.442695
        %v1982 = vpow.pop %v1981
        %v1983 = vmul.f32 %v1873, 1.442695
        %v1984 = vpow.pop %v1983
        %v1985 = vmul.f32 %v1874, 1.442695
        %v1986 = vpow.pop %v1985
        %v1987 = vmul.f32 %v1875, 1.442695
        %v1988 = vpow.pop %v1987
        %v1989 = vmul.f32 %v1876, 1.442695
        %v1990 = vpow.pop %v1989
        %v1991 = vmul.f32 %v1877, 1.442695
        %v1992 = vpow.pop %v1991
        %v1993 = vmul.f32 %v1878, 1.442695
        %v1994 = vpow.pop %v1993
        %v1995 = vmul.f32 %v1879, 1.442695
        %v1996 = vpow.pop %v1995
        %v1997 = vmul.f32 %v1880, 1.442695
        %v1998 = vpow.pop %v1997
        %v1999 = vmul.f32 %v1881, 1.442695
        %v2000 = vpow.pop %v1999
        %v2001 = vmul.f32 %v1882, 1.442695
        %v2002 = vpow.pop %v2001
        %v2003 = vmul.f32 %v1883, 1.442695
        %v2004 = vpow.pop %v2003
        %v2005 = vmul.f32 %v1884, 1.442695
        %v2006 = vpow.pop %v2005
        %v2007 = vmul.f32 %v1885, 1.442695
        %v2008 = vpow.pop %v2007
        %v2009 = vmul.f32 %v1886, 1.442695
        %v2010 = vpow.pop %v2009
        %v2011 = vmul.f32 %v1887, 1.442695
        %v2012 = vpow.pop %v2011
        %v2013 = vmul.f32 %v1888, 1.442695
        %v2014 = vpow.pop %v2013
        %v2015 = vmul.f32 %v1889, 1.442695
        %v2016 = vpow.pop %v2015
        %v2017 = vmul.f32 %v1890, 1.442695
        %v2018 = vpow.pop %v2017
        %v2019 = vld [vmem:[#allocation4] sm:$0xff]
        %v2020 = vld [vmem:[#allocation4 + $0x8] sm:$0xff]
        %v2021 = vld [vmem:[#allocation4 + $0x10] sm:$0xff]
        %v2022 = vld [vmem:[#allocation4 + $0x18] sm:$0xff]
        %v2023 = vld [vmem:[#allocation4 + $0x20] sm:$0xff]
        %v2024 = vld [vmem:[#allocation4 + $0x28] sm:$0xff]
        %v2025 = vld [vmem:[#allocation4 + $0x30] sm:$0xff]
        %v2026 = vld [vmem:[#allocation4 + $0x38] sm:$0xff]
        %v2027 = vld [vmem:[#allocation4 + $0x40] sm:$0xff]
        %v2028 = vld [vmem:[#allocation4 + $0x48] sm:$0xff]
        %v2029 = vld [vmem:[#allocation4 + $0x50] sm:$0xff]
        %v2030 = vld [vmem:[#allocation4 + $0x58] sm:$0xff]
        %v2031 = vld [vmem:[#allocation4 + $0x60] sm:$0xff]
        %v2032 = vld [vmem:[#allocation4 + $0x68] sm:$0xff]
        %v2033 = vld [vmem:[#allocation4 + $0x70] sm:$0xff]
        %v2034 = vld [vmem:[#allocation4 + $0x78] sm:$0xff]
        %v2035 = vld [vmem:[#allocation4 + $0x80] sm:$0xff]
        %v2036 = vld [vmem:[#allocation4 + $0x88] sm:$0xff]
        %v2037 = vld [vmem:[#allocation4 + $0x90] sm:$0xff]
        %v2038 = vld [vmem:[#allocation4 + $0x98] sm:$0xff]
        %v2039 = vld [vmem:[#allocation4 + $0xa0] sm:$0xff]
        %v2040 = vld [vmem:[#allocation4 + $0xa8] sm:$0xff]
        %v2041 = vld [vmem:[#allocation4 + $0xb0] sm:$0xff]
        %v2042 = vld [vmem:[#allocation4 + $0xb8] sm:$0xff]
        %v2043 = vld [vmem:[#allocation4 + $0xc0] sm:$0xff]
        %v2044 = vld [vmem:[#allocation4 + $0xc8] sm:$0xff]
        %v2045 = vld [vmem:[#allocation4 + $0xd0] sm:$0xff]
        %v2046 = vld [vmem:[#allocation4 + $0xd8] sm:$0xff]
        %v2047 = vld [vmem:[#allocation4 + $0xe0] sm:$0xff]
        %v2048 = vld [vmem:[#allocation4 + $0xe8] sm:$0xff]
        %v2049 = vld [vmem:[#allocation4 + $0xf0] sm:$0xff]
        %v2050 = vld [vmem:[#allocation4 + $0xf8] sm:$0xff]
        %v2051 = vmul.f32 %v1604, %v2019
        %v2052 = vmul.f32 %v1606, %v2020
        %v2053 = vmul.f32 %v1608, %v2021
        %v2054 = vmul.f32 %v1610, %v2022
        %v2055 = vmul.f32 %v1612, %v2023
        %v2056 = vmul.f32 %v1614, %v2024
        %v2057 = vmul.f32 %v1616, %v2025
        %v2058 = vmul.f32 %v1618, %v2026
        %v2059 = vmul.f32 %v1620, %v2027
        %v2060 = vmul.f32 %v1622, %v2028
        %v2061 = vmul.f32 %v1624, %v2029
        %v2062 = vmul.f32 %v1626, %v2030
        %v2063 = vmul.f32 %v1628, %v2031
        %v2064 = vmul.f32 %v1630, %v2032
        %v2065 = vmul.f32 %v1632, %v2033
        %v2066 = vmul.f32 %v1634, %v2034
        %v2067 = vmul.f32 %v1636, %v2035
        %v2068 = vmul.f32 %v1638, %v2036
        %v2069 = vmul.f32 %v1640, %v2037
        %v2070 = vmul.f32 %v1642, %v2038
        %v2071 = vmul.f32 %v1644, %v2039
        %v2072 = vmul.f32 %v1646, %v2040
        %v2073 = vmul.f32 %v1648, %v2041
        %v2074 = vmul.f32 %v1650, %v2042
        %v2075 = vmul.f32 %v1652, %v2043
        %v2076 = vmul.f32 %v1654, %v2044
        %v2077 = vmul.f32 %v1656, %v2045
        %v2078 = vmul.f32 %v1658, %v2046
        %v2079 = vmul.f32 %v1660, %v2047
        %v2080 = vmul.f32 %v1662, %v2048
        %v2081 = vmul.f32 %v1664, %v2049
        %v2082 = vmul.f32 %v1666, %v2050
        %v2083 = vadd.f32 %v1892, %v1894
        %2084 = vadd.xlane.f32.xlu0 %v2083
        %v2085 = vpop.xlane.xlu0 %2084
        %v2086 = vadd.f32 %v1896, %v1898
        %2087 = vadd.xlane.f32.xlu0 %v2086
        %v2088 = vpop.xlane.xlu0 %2087
        %v2089 = vadd.f32 %v1900, %v1902
        %2090 = vadd.xlane.f32.xlu0 %v2089
        %v2091 = vpop.xlane.xlu0 %2090
        %v2092 = vadd.f32 %v1904, %v1906
        %2093 = vadd.xlane.f32.xlu0 %v2092
        %v2094 = vpop.xlane.xlu0 %2093
        %v2095 = vadd.f32 %v1908, %v1910
        %2096 = vadd.xlane.f32.xlu0 %v2095
        %v2097 = vpop.xlane.xlu0 %2096
        %v2098 = vadd.f32 %v1912, %v1914
        %2099 = vadd.xlane.f32.xlu0 %v2098
        %v2100 = vpop.xlane.xlu0 %2099
        %v2101 = vadd.f32 %v1916, %v1918
        %2102 = vadd.xlane.f32.xlu0 %v2101
        %v2103 = vpop.xlane.xlu0 %2102
        %v2104 = vadd.f32 %v1920, %v1922
        %2105 = vadd.xlane.f32.xlu0 %v2104
        %v2106 = vpop.xlane.xlu0 %2105
        %v2107 = vadd.f32 %v1924, %v1926
        %2108 = vadd.xlane.f32.xlu0 %v2107
        %v2109 = vpop.xlane.xlu0 %2108
        %v2110 = vadd.f32 %v1928, %v1930
        %2111 = vadd.xlane.f32.xlu0 %v2110
        %v2112 = vpop.xlane.xlu0 %2111
        %v2113 = vadd.f32 %v1932, %v1934
        %2114 = vadd.xlane.f32.xlu0 %v2113
        %v2115 = vpop.xlane.xlu0 %2114
        %v2116 = vadd.f32 %v1936, %v1938
        %2117 = vadd.xlane.f32.xlu0 %v2116
        %v2118 = vpop.xlane.xlu0 %2117
        %v2119 = vadd.f32 %v1940, %v1942
        %2120 = vadd.xlane.f32.xlu0 %v2119
        %v2121 = vpop.xlane.xlu0 %2120
        %v2122 = vadd.f32 %v1944, %v1946
        %2123 = vadd.xlane.f32.xlu0 %v2122
        %v2124 = vpop.xlane.xlu0 %2123
        %v2125 = vadd.f32 %v1948, %v1950
        %2126 = vadd.xlane.f32.xlu0 %v2125
        %v2127 = vpop.xlane.xlu0 %2126
        %v2128 = vadd.f32 %v1952, %v1954
        %2129 = vadd.xlane.f32.xlu0 %v2128
        %v2130 = vpop.xlane.xlu0 %2129
        %v2131 = vadd.f32 %v1956, %v1958
        %2132 = vadd.xlane.f32.xlu0 %v2131
        %v2133 = vpop.xlane.xlu0 %2132
        %v2134 = vadd.f32 %v1960, %v1962
        %2135 = vadd.xlane.f32.xlu0 %v2134
        %v2136 = vpop.xlane.xlu0 %2135
        %v2137 = vadd.f32 %v1964, %v1966
        %2138 = vadd.xlane.f32.xlu0 %v2137
        %v2139 = vpop.xlane.xlu0 %2138
        %v2140 = vadd.f32 %v1968, %v1970
        %2141 = vadd.xlane.f32.xlu0 %v2140
        %v2142 = vpop.xlane.xlu0 %2141
        %v2143 = vadd.f32 %v1972, %v1974
        %2144 = vadd.xlane.f32.xlu0 %v2143
        %v2145 = vpop.xlane.xlu0 %2144
        %v2146 = vadd.f32 %v1976, %v1978
        %2147 = vadd.xlane.f32.xlu0 %v2146
        %v2148 = vpop.xlane.xlu0 %2147
        %v2149 = vadd.f32 %v1980, %v1982
        %2150 = vadd.xlane.f32.xlu0 %v2149
        %v2151 = vpop.xlane.xlu0 %2150
        %v2152 = vadd.f32 %v1984, %v1986
        %2153 = vadd.xlane.f32.xlu0 %v2152
        %v2154 = vpop.xlane.xlu0 %2153
        %v2155 = vadd.f32 %v1988, %v1990
        %2156 = vadd.xlane.f32.xlu0 %v2155
        %v2157 = vpop.xlane.xlu0 %2156
        %v2158 = vadd.f32 %v1992, %v1994
        %2159 = vadd.xlane.f32.xlu0 %v2158
        %v2160 = vpop.xlane.xlu0 %2159
        %v2161 = vadd.f32 %v1996, %v1998
        %2162 = vadd.xlane.f32.xlu0 %v2161
        %v2163 = vpop.xlane.xlu0 %2162
        %v2164 = vadd.f32 %v2000, %v2002
        %2165 = vadd.xlane.f32.xlu0 %v2164
        %v2166 = vpop.xlane.xlu0 %2165
        %v2167 = vadd.f32 %v2004, %v2006
        %2168 = vadd.xlane.f32.xlu0 %v2167
        %v2169 = vpop.xlane.xlu0 %2168
        %v2170 = vadd.f32 %v2008, %v2010
        %2171 = vadd.xlane.f32.xlu0 %v2170
        %v2172 = vpop.xlane.xlu0 %2171
        %v2173 = vadd.f32 %v2012, %v2014
        %2174 = vadd.xlane.f32.xlu0 %v2173
        %v2175 = vpop.xlane.xlu0 %2174
        %v2176 = vadd.f32 %v2016, %v2018
        %2177 = vadd.xlane.f32.xlu0 %v2176
        %v2178 = vpop.xlane.xlu0 %2177
        %v2179 = vadd.f32 %v2051, %v2085
        %v2180 = vadd.f32 %v2052, %v2088
        %v2181 = vadd.f32 %v2053, %v2091
        %v2182 = vadd.f32 %v2054, %v2094
        %v2183 = vadd.f32 %v2055, %v2097
        %v2184 = vadd.f32 %v2056, %v2100
        %v2185 = vadd.f32 %v2057, %v2103
        %v2186 = vadd.f32 %v2058, %v2106
        %v2187 = vadd.f32 %v2059, %v2109
        %v2188 = vadd.f32 %v2060, %v2112
        %v2189 = vadd.f32 %v2061, %v2115
        %v2190 = vadd.f32 %v2062, %v2118
        %v2191 = vadd.f32 %v2063, %v2121
        %v2192 = vadd.f32 %v2064, %v2124
        %v2193 = vadd.f32 %v2065, %v2127
        %v2194 = vadd.f32 %v2066, %v2130
        %v2195 = vadd.f32 %v2067, %v2133
        %v2196 = vadd.f32 %v2068, %v2136
        %v2197 = vadd.f32 %v2069, %v2139
        %v2198 = vadd.f32 %v2070, %v2142
        %v2199 = vadd.f32 %v2071, %v2145
        %v2200 = vadd.f32 %v2072, %v2148
        %v2201 = vadd.f32 %v2073, %v2151
        %v2202 = vadd.f32 %v2074, %v2154
        %v2203 = vadd.f32 %v2075, %v2157
        %v2204 = vadd.f32 %v2076, %v2160
        %v2205 = vadd.f32 %v2077, %v2163
        %v2206 = vadd.f32 %v2078, %v2166
        %v2207 = vadd.f32 %v2079, %v2169
        %v2208 = vadd.f32 %v2080, %v2172
        %v2209 = vadd.f32 %v2081, %v2175
        %v2210 = vadd.f32 %v2082, %v2178
        %vm2211 = vcmask 7168
        %2212 = vst.msk [vmem:[#allocation4] sm:$0xff] %vm2211, %v2179
        %2213 = vst.msk [vmem:[#allocation4 + $0x8] sm:$0xff] %vm2211, %v2180
        %2214 = vst.msk [vmem:[#allocation4 + $0x10] sm:$0xff] %vm2211, %v2181
        %2215 = vst.msk [vmem:[#allocation4 + $0x18] sm:$0xff] %vm2211, %v2182
        %2216 = vst.msk [vmem:[#allocation4 + $0x20] sm:$0xff] %vm2211, %v2183
        %2217 = vst.msk [vmem:[#allocation4 + $0x28] sm:$0xff] %vm2211, %v2184
        %2218 = vst.msk [vmem:[#allocation4 + $0x30] sm:$0xff] %vm2211, %v2185
        %2219 = vst.msk [vmem:[#allocation4 + $0x38] sm:$0xff] %vm2211, %v2186
        %2220 = vst.msk [vmem:[#allocation4 + $0x40] sm:$0xff] %vm2211, %v2187
        %2221 = vst.msk [vmem:[#allocation4 + $0x48] sm:$0xff] %vm2211, %v2188
        %2222 = vst.msk [vmem:[#allocation4 + $0x50] sm:$0xff] %vm2211, %v2189
        %2223 = vst.msk [vmem:[#allocation4 + $0x58] sm:$0xff] %vm2211, %v2190
        %2224 = vst.msk [vmem:[#allocation4 + $0x60] sm:$0xff] %vm2211, %v2191
        %2225 = vst.msk [vmem:[#allocation4 + $0x68] sm:$0xff] %vm2211, %v2192
        %2226 = vst.msk [vmem:[#allocation4 + $0x70] sm:$0xff] %vm2211, %v2193
        %2227 = vst.msk [vmem:[#allocation4 + $0x78] sm:$0xff] %vm2211, %v2194
        %2228 = vst.msk [vmem:[#allocation4 + $0x80] sm:$0xff] %vm2211, %v2195
        %2229 = vst.msk [vmem:[#allocation4 + $0x88] sm:$0xff] %vm2211, %v2196
        %2230 = vst.msk [vmem:[#allocation4 + $0x90] sm:$0xff] %vm2211, %v2197
        %2231 = vst.msk [vmem:[#allocation4 + $0x98] sm:$0xff] %vm2211, %v2198
        %2232 = vst.msk [vmem:[#allocation4 + $0xa0] sm:$0xff] %vm2211, %v2199
        %2233 = vst.msk [vmem:[#allocation4 + $0xa8] sm:$0xff] %vm2211, %v2200
        %2234 = vst.msk [vmem:[#allocation4 + $0xb0] sm:$0xff] %vm2211, %v2201
        %2235 = vst.msk [vmem:[#allocation4 + $0xb8] sm:$0xff] %vm2211, %v2202
        %2236 = vst.msk [vmem:[#allocation4 + $0xc0] sm:$0xff] %vm2211, %v2203
        %2237 = vst.msk [vmem:[#allocation4 + $0xc8] sm:$0xff] %vm2211, %v2204
        %2238 = vst.msk [vmem:[#allocation4 + $0xd0] sm:$0xff] %vm2211, %v2205
        %2239 = vst.msk [vmem:[#allocation4 + $0xd8] sm:$0xff] %vm2211, %v2206
        %2240 = vst.msk [vmem:[#allocation4 + $0xe0] sm:$0xff] %vm2211, %v2207
        %2241 = vst.msk [vmem:[#allocation4 + $0xe8] sm:$0xff] %vm2211, %v2208
        %2242 = vst.msk [vmem:[#allocation4 + $0xf0] sm:$0xff] %vm2211, %v2209
        %2243 = vst.msk [vmem:[#allocation4 + $0xf8] sm:$0xff] %vm2211, %v2210
        %v2244 = vld [vmem:[#allocation5] sm:$0xff]
        %v2245 = vld [vmem:[#allocation5 + $0x8] sm:$0xff]
        %v2246 = vld [vmem:[#allocation5 + $0x10] sm:$0xff]
        %v2247 = vld [vmem:[#allocation5 + $0x18] sm:$0xff]
        %v2248 = vld [vmem:[#allocation5 + $0x20] sm:$0xff]
        %v2249 = vld [vmem:[#allocation5 + $0x28] sm:$0xff]
        %v2250 = vld [vmem:[#allocation5 + $0x30] sm:$0xff]
        %v2251 = vld [vmem:[#allocation5 + $0x38] sm:$0xff]
        %v2252 = vld [vmem:[#allocation5 + $0x40] sm:$0xff]
        %v2253 = vld [vmem:[#allocation5 + $0x48] sm:$0xff]
        %v2254 = vld [vmem:[#allocation5 + $0x50] sm:$0xff]
        %v2255 = vld [vmem:[#allocation5 + $0x58] sm:$0xff]
        %v2256 = vld [vmem:[#allocation5 + $0x60] sm:$0xff]
        %v2257 = vld [vmem:[#allocation5 + $0x68] sm:$0xff]
        %v2258 = vld [vmem:[#allocation5 + $0x70] sm:$0xff]
        %v2259 = vld [vmem:[#allocation5 + $0x78] sm:$0xff]
        %v2260 = vld [vmem:[#allocation5 + $0x80] sm:$0xff]
        %v2261 = vld [vmem:[#allocation5 + $0x88] sm:$0xff]
        %v2262 = vld [vmem:[#allocation5 + $0x90] sm:$0xff]
        %v2263 = vld [vmem:[#allocation5 + $0x98] sm:$0xff]
        %v2264 = vld [vmem:[#allocation5 + $0xa0] sm:$0xff]
        %v2265 = vld [vmem:[#allocation5 + $0xa8] sm:$0xff]
        %v2266 = vld [vmem:[#allocation5 + $0xb0] sm:$0xff]
        %v2267 = vld [vmem:[#allocation5 + $0xb8] sm:$0xff]
        %v2268 = vld [vmem:[#allocation5 + $0xc0] sm:$0xff]
        %v2269 = vld [vmem:[#allocation5 + $0xc8] sm:$0xff]
        %v2270 = vld [vmem:[#allocation5 + $0xd0] sm:$0xff]
        %v2271 = vld [vmem:[#allocation5 + $0xd8] sm:$0xff]
        %v2272 = vld [vmem:[#allocation5 + $0xe0] sm:$0xff]
        %v2273 = vld [vmem:[#allocation5 + $0xe8] sm:$0xff]
        %v2274 = vld [vmem:[#allocation5 + $0xf0] sm:$0xff]
        %v2275 = vld [vmem:[#allocation5 + $0xf8] sm:$0xff]
        %2277 = vset.pattern.permute.xlu0 0
        %2278 = vperm.xlu0 %2277, %v1604
        %v2279 = vpop.permute.xlu0 %2278
        %2282 = vset.pattern.permute.xlu0 0
        %2283 = vperm.xlu0 %2282, %v1606
        %v2284 = vpop.permute.xlu0 %2283
        %2287 = vset.pattern.permute.xlu0 0
        %2288 = vperm.xlu0 %2287, %v1608
        %v2289 = vpop.permute.xlu0 %2288
        %2292 = vset.pattern.permute.xlu0 0
        %2293 = vperm.xlu0 %2292, %v1610
        %v2294 = vpop.permute.xlu0 %2293
        %2297 = vset.pattern.permute.xlu0 0
        %2298 = vperm.xlu0 %2297, %v1612
        %v2299 = vpop.permute.xlu0 %2298
        %2302 = vset.pattern.permute.xlu0 0
        %2303 = vperm.xlu0 %2302, %v1614
        %v2304 = vpop.permute.xlu0 %2303
        %2307 = vset.pattern.permute.xlu0 0
        %2308 = vperm.xlu0 %2307, %v1616
        %v2309 = vpop.permute.xlu0 %2308
        %2312 = vset.pattern.permute.xlu0 0
        %2313 = vperm.xlu0 %2312, %v1618
        %v2314 = vpop.permute.xlu0 %2313
        %2317 = vset.pattern.permute.xlu0 0
        %2318 = vperm.xlu0 %2317, %v1620
        %v2319 = vpop.permute.xlu0 %2318
        %2322 = vset.pattern.permute.xlu0 0
        %2323 = vperm.xlu0 %2322, %v1622
        %v2324 = vpop.permute.xlu0 %2323
        %2327 = vset.pattern.permute.xlu0 0
        %2328 = vperm.xlu0 %2327, %v1624
        %v2329 = vpop.permute.xlu0 %2328
        %2332 = vset.pattern.permute.xlu0 0
        %2333 = vperm.xlu0 %2332, %v1626
        %v2334 = vpop.permute.xlu0 %2333
        %2337 = vset.pattern.permute.xlu0 0
        %2338 = vperm.xlu0 %2337, %v1628
        %v2339 = vpop.permute.xlu0 %2338
        %2342 = vset.pattern.permute.xlu0 0
        %2343 = vperm.xlu0 %2342, %v1630
        %v2344 = vpop.permute.xlu0 %2343
        %2347 = vset.pattern.permute.xlu0 0
        %2348 = vperm.xlu0 %2347, %v1632
        %v2349 = vpop.permute.xlu0 %2348
        %2352 = vset.pattern.permute.xlu0 0
        %2353 = vperm.xlu0 %2352, %v1634
        %v2354 = vpop.permute.xlu0 %2353
        %2357 = vset.pattern.permute.xlu0 0
        %2358 = vperm.xlu0 %2357, %v1636
        %v2359 = vpop.permute.xlu0 %2358
        %2362 = vset.pattern.permute.xlu0 0
        %2363 = vperm.xlu0 %2362, %v1638
        %v2364 = vpop.permute.xlu0 %2363
        %2367 = vset.pattern.permute.xlu0 0
        %2368 = vperm.xlu0 %2367, %v1640
        %v2369 = vpop.permute.xlu0 %2368
        %2372 = vset.pattern.permute.xlu0 0
        %2373 = vperm.xlu0 %2372, %v1642
        %v2374 = vpop.permute.xlu0 %2373
        %2377 = vset.pattern.permute.xlu0 0
        %2378 = vperm.xlu0 %2377, %v1644
        %v2379 = vpop.permute.xlu0 %2378
        %2382 = vset.pattern.permute.xlu0 0
        %2383 = vperm.xlu0 %2382, %v1646
        %v2384 = vpop.permute.xlu0 %2383
        %2387 = vset.pattern.permute.xlu0 0
        %2388 = vperm.xlu0 %2387, %v1648
        %v2389 = vpop.permute.xlu0 %2388
        %2392 = vset.pattern.permute.xlu0 0
        %2393 = vperm.xlu0 %2392, %v1650
        %v2394 = vpop.permute.xlu0 %2393
        %2397 = vset.pattern.permute.xlu0 0
        %2398 = vperm.xlu0 %2397, %v1652
        %v2399 = vpop.permute.xlu0 %2398
        %2402 = vset.pattern.permute.xlu0 0
        %2403 = vperm.xlu0 %2402, %v1654
        %v2404 = vpop.permute.xlu0 %2403
        %2407 = vset.pattern.permute.xlu0 0
        %2408 = vperm.xlu0 %2407, %v1656
        %v2409 = vpop.permute.xlu0 %2408
        %2412 = vset.pattern.permute.xlu0 0
        %2413 = vperm.xlu0 %2412, %v1658
        %v2414 = vpop.permute.xlu0 %2413
        %2417 = vset.pattern.permute.xlu0 0
        %2418 = vperm.xlu0 %2417, %v1660
        %v2419 = vpop.permute.xlu0 %2418
        %2422 = vset.pattern.permute.xlu0 0
        %2423 = vperm.xlu0 %2422, %v1662
        %v2424 = vpop.permute.xlu0 %2423
        %2427 = vset.pattern.permute.xlu0 0
        %2428 = vperm.xlu0 %2427, %v1664
        %v2429 = vpop.permute.xlu0 %2428
        %2432 = vset.pattern.permute.xlu0 0
        %2433 = vperm.xlu0 %2432, %v1666
        %v2434 = vpop.permute.xlu0 %2433
        %v2436 = vmul.f32 %v2279, %v2244
        %v2437 = vmul.f32 %v2284, %v2245
        %v2438 = vmul.f32 %v2289, %v2246
        %v2439 = vmul.f32 %v2294, %v2247
        %v2440 = vmul.f32 %v2299, %v2248
        %v2441 = vmul.f32 %v2304, %v2249
        %v2442 = vmul.f32 %v2309, %v2250
        %v2443 = vmul.f32 %v2314, %v2251
        %v2444 = vmul.f32 %v2319, %v2252
        %v2445 = vmul.f32 %v2324, %v2253
        %v2446 = vmul.f32 %v2329, %v2254
        %v2447 = vmul.f32 %v2334, %v2255
        %v2448 = vmul.f32 %v2339, %v2256
        %v2449 = vmul.f32 %v2344, %v2257
        %v2450 = vmul.f32 %v2349, %v2258
        %v2451 = vmul.f32 %v2354, %v2259
        %v2452 = vmul.f32 %v2359, %v2260
        %v2453 = vmul.f32 %v2364, %v2261
        %v2454 = vmul.f32 %v2369, %v2262
        %v2455 = vmul.f32 %v2374, %v2263
        %v2456 = vmul.f32 %v2379, %v2264
        %v2457 = vmul.f32 %v2384, %v2265
        %v2458 = vmul.f32 %v2389, %v2266
        %v2459 = vmul.f32 %v2394, %v2267
        %v2460 = vmul.f32 %v2399, %v2268
        %v2461 = vmul.f32 %v2404, %v2269
        %v2462 = vmul.f32 %v2409, %v2270
        %v2463 = vmul.f32 %v2414, %v2271
        %v2464 = vmul.f32 %v2419, %v2272
        %v2465 = vmul.f32 %v2424, %v2273
        %v2466 = vmul.f32 %v2429, %v2274
        %v2467 = vmul.f32 %v2434, %v2275
        %v2468 = vpack.c.bf16 %v1896, %v1892
        %v2469 = vpack.c.bf16 %v1898, %v1894
        %v2470 = vpack.c.bf16 %v1904, %v1900
        %v2471 = vpack.c.bf16 %v1906, %v1902
        %v2472 = vpack.c.bf16 %v1912, %v1908
        %v2473 = vpack.c.bf16 %v1914, %v1910
        %v2474 = vpack.c.bf16 %v1920, %v1916
        %v2475 = vpack.c.bf16 %v1922, %v1918
        %v2476 = vpack.c.bf16 %v1928, %v1924
        %v2477 = vpack.c.bf16 %v1930, %v1926
        %v2478 = vpack.c.bf16 %v1936, %v1932
        %v2479 = vpack.c.bf16 %v1938, %v1934
        %v2480 = vpack.c.bf16 %v1944, %v1940
        %v2481 = vpack.c.bf16 %v1946, %v1942
        %v2482 = vpack.c.bf16 %v1952, %v1948
        %v2483 = vpack.c.bf16 %v1954, %v1950
        %v2484 = vpack.c.bf16 %v1960, %v1956
        %v2485 = vpack.c.bf16 %v1962, %v1958
        %v2486 = vpack.c.bf16 %v1968, %v1964
        %v2487 = vpack.c.bf16 %v1970, %v1966
        %v2488 = vpack.c.bf16 %v1976, %v1972
        %v2489 = vpack.c.bf16 %v1978, %v1974
        %v2490 = vpack.c.bf16 %v1984, %v1980
        %v2491 = vpack.c.bf16 %v1986, %v1982
        %v2492 = vpack.c.bf16 %v1992, %v1988
        %v2493 = vpack.c.bf16 %v1994, %v1990
        %v2494 = vpack.c.bf16 %v2000, %v1996
        %v2495 = vpack.c.bf16 %v2002, %v1998
        %v2496 = vpack.c.bf16 %v2008, %v2004
        %v2497 = vpack.c.bf16 %v2010, %v2006
        %v2498 = vpack.c.bf16 %v2016, %v2012
        %v2499 = vpack.c.bf16 %v2018, %v2014
        %v2532 = vunpack.c.l.b16 %v962
        %v2533 = vunpack.c.l.b16 %v963
        %v2534 = vunpack.c.l.b16 %v964
        %v2535 = vunpack.c.l.b16 %v965
        %v2536 = vunpack.c.l.b16 %v966
        %v2537 = vunpack.c.l.b16 %v967
        %v2538 = vunpack.c.l.b16 %v968
        %v2539 = vunpack.c.l.b16 %v969
        %v2540 = vunpack.c.l.b16 %v970
        %v2541 = vunpack.c.l.b16 %v971
        %v2542 = vunpack.c.l.b16 %v972
        %v2543 = vunpack.c.l.b16 %v973
        %v2544 = vunpack.c.l.b16 %v974
        %v2545 = vunpack.c.l.b16 %v975
        %v2546 = vunpack.c.l.b16 %v976
        %v2547 = vunpack.c.l.b16 %v977
        %v2548 = vunpack.c.l.b16 %v978
        %v2549 = vunpack.c.l.b16 %v979
        %v2550 = vunpack.c.l.b16 %v980
        %v2551 = vunpack.c.l.b16 %v981
        %v2552 = vunpack.c.l.b16 %v982
        %v2553 = vunpack.c.l.b16 %v983
        %v2554 = vunpack.c.l.b16 %v984
        %v2555 = vunpack.c.l.b16 %v985
        %v2556 = vunpack.c.l.b16 %v986
        %v2557 = vunpack.c.l.b16 %v987
        %v2558 = vunpack.c.l.b16 %v988
        %v2559 = vunpack.c.l.b16 %v989
        %v2560 = vunpack.c.l.b16 %v990
        %v2561 = vunpack.c.l.b16 %v991
        %v2562 = vunpack.c.l.b16 %v992
        %v2563 = vunpack.c.l.b16 %v993
        %v2564 = vpack.c.b16 %v2533, %v2532
        %v2565 = vpack.c.b16 %v2535, %v2534
        %v2566 = vpack.c.b16 %v2537, %v2536
        %v2567 = vpack.c.b16 %v2539, %v2538
        %v2568 = vpack.c.b16 %v2541, %v2540
        %v2569 = vpack.c.b16 %v2543, %v2542
        %v2570 = vpack.c.b16 %v2545, %v2544
        %v2571 = vpack.c.b16 %v2547, %v2546
        %v2572 = vpack.c.b16 %v2549, %v2548
        %v2573 = vpack.c.b16 %v2551, %v2550
        %v2574 = vpack.c.b16 %v2553, %v2552
        %v2575 = vpack.c.b16 %v2555, %v2554
        %v2576 = vpack.c.b16 %v2557, %v2556
        %v2577 = vpack.c.b16 %v2559, %v2558
        %v2578 = vpack.c.b16 %v2561, %v2560
        %v2579 = vpack.c.b16 %v2563, %v2562
        %2596 = vmatprep.subr.bf16.mxu0 0
        %2597 = vmatpush1.bf16.msra.mxu0 %v2571
        %2598 = vmatprep.subr.bf16.mxu0 0
        %2599 = vmatpush1.bf16.msra.mxu0 %v2570
        %2600 = vmatprep.subr.bf16.mxu0 0
        %2601 = vmatpush1.bf16.msra.mxu0 %v2569
        %2602 = vmatprep.subr.bf16.mxu0 0
        %2603 = vmatpush1.bf16.msra.mxu0 %v2568
        %2604 = vmatprep.subr.bf16.mxu0 0
        %2605 = vmatpush1.bf16.msra.mxu0 %v2567
        %2606 = vmatprep.subr.bf16.mxu0 0
        %2607 = vmatpush1.bf16.msra.mxu0 %v2566
        %2608 = vmatprep.subr.bf16.mxu0 0
        %2609 = vmatpush1.bf16.msra.mxu0 %v2565
        %2610 = vmatprep.subr.bf16.mxu0 0
        %2611 = vmatpush1.bf16.msra.mxu0 %v2564
        %2612 = vmatprep.subr.bf16.mxu0 0
        %2613 = vmatpush2.bf16.msra.mxu0 %v2579
        %2614 = vmatprep.subr.bf16.mxu0 0
        %2615 = vmatpush2.bf16.msra.mxu0 %v2578
        %2616 = vmatprep.subr.bf16.mxu0 0
        %2617 = vmatpush2.bf16.msra.mxu0 %v2577
        %2618 = vmatprep.subr.bf16.mxu0 0
        %2619 = vmatpush2.bf16.msra.mxu0 %v2576
        %2620 = vmatprep.subr.bf16.mxu0 0
        %2621 = vmatpush2.bf16.msra.mxu0 %v2575
        %2622 = vmatprep.subr.bf16.mxu0 0
        %2623 = vmatpush2.bf16.msra.mxu0 %v2574
        %2624 = vmatprep.subr.bf16.mxu0 0
        %2625 = vmatpush2.bf16.msra.mxu0 %v2573
        %2626 = vmatprep.subr.bf16.mxu0 0
        %2627 = vmatpush2.bf16.msra.mxu0 %v2572
        %2628 = vmatprep.mubr.bf16.mxu0 %v2469
        %2629 = vmatmul.mubr.bf16.gmra.mxu0 %v2468
        %v2630 = vpop.f32.mrf.mxu0
        %v2631 = vadd.f32 0.0, %v2630
        %v2632 = vpop.f32.mrf.mxu0
        %v2633 = vpop.f32.mrf.mxu0
        %v2634 = vadd.f32 0.0, %v2633
        %v2635 = vpop.f32.mrf.mxu0
        %2636 = vmatprep.mubr.bf16.mxu0 %v2471
        %2637 = vmatmul.mubr.bf16.gmra.mxu0 %v2470
        %v2638 = vpop.f32.mrf.mxu0
        %v2639 = vadd.f32 0.0, %v2638
        %v2640 = vpop.f32.mrf.mxu0
        %v2641 = vpop.f32.mrf.mxu0
        %v2642 = vadd.f32 0.0, %v2641
        %v2643 = vpop.f32.mrf.mxu0
        %2644 = vmatprep.mubr.bf16.mxu0 %v2473
        %2645 = vmatmul.mubr.bf16.gmra.mxu0 %v2472
        %v2646 = vpop.f32.mrf.mxu0
        %v2647 = vadd.f32 0.0, %v2646
        %v2648 = vpop.f32.mrf.mxu0
        %v2649 = vpop.f32.mrf.mxu0
        %v2650 = vadd.f32 0.0, %v2649
        %v2651 = vpop.f32.mrf.mxu0
        %2652 = vmatprep.mubr.bf16.mxu0 %v2475
        %2653 = vmatmul.mubr.bf16.gmra.mxu0 %v2474
        %v2654 = vpop.f32.mrf.mxu0
        %v2655 = vadd.f32 0.0, %v2654
        %v2656 = vpop.f32.mrf.mxu0
        %v2657 = vpop.f32.mrf.mxu0
        %v2658 = vadd.f32 0.0, %v2657
        %v2659 = vpop.f32.mrf.mxu0
        %2660 = vmatprep.mubr.bf16.mxu0 %v2477
        %2661 = vmatmul.mubr.bf16.gmra.mxu0 %v2476
        %v2662 = vpop.f32.mrf.mxu0
        %v2663 = vadd.f32 0.0, %v2662
        %v2664 = vpop.f32.mrf.mxu0
        %v2665 = vpop.f32.mrf.mxu0
        %v2666 = vadd.f32 0.0, %v2665
        %v2667 = vpop.f32.mrf.mxu0
        %2668 = vmatprep.mubr.bf16.mxu0 %v2479
        %2669 = vmatmul.mubr.bf16.gmra.mxu0 %v2478
        %v2670 = vpop.f32.mrf.mxu0
        %v2671 = vadd.f32 0.0, %v2670
        %v2672 = vpop.f32.mrf.mxu0
        %v2673 = vpop.f32.mrf.mxu0
        %v2674 = vadd.f32 0.0, %v2673
        %v2675 = vpop.f32.mrf.mxu0
        %2676 = vmatprep.mubr.bf16.mxu0 %v2481
        %2677 = vmatmul.mubr.bf16.gmra.mxu0 %v2480
        %v2678 = vpop.f32.mrf.mxu0
        %v2679 = vadd.f32 0.0, %v2678
        %v2680 = vpop.f32.mrf.mxu0
        %v2681 = vpop.f32.mrf.mxu0
        %v2682 = vadd.f32 0.0, %v2681
        %v2683 = vpop.f32.mrf.mxu0
        %2684 = vmatprep.mubr.bf16.mxu0 %v2483
        %2685 = vmatmul.mubr.bf16.gmra.mxu0 %v2482
        %v2686 = vpop.f32.mrf.mxu0
        %v2687 = vadd.f32 0.0, %v2686
        %v2688 = vpop.f32.mrf.mxu0
        %v2689 = vpop.f32.mrf.mxu0
        %v2690 = vadd.f32 0.0, %v2689
        %v2691 = vpop.f32.mrf.mxu0
        %2692 = vmatprep.mubr.bf16.mxu0 %v2485
        %2693 = vmatmul.mubr.bf16.gmra.mxu0 %v2484
        %v2694 = vpop.f32.mrf.mxu0
        %v2695 = vadd.f32 0.0, %v2694
        %v2696 = vpop.f32.mrf.mxu0
        %v2697 = vpop.f32.mrf.mxu0
        %v2698 = vadd.f32 0.0, %v2697
        %v2699 = vpop.f32.mrf.mxu0
        %2700 = vmatprep.mubr.bf16.mxu0 %v2487
        %2701 = vmatmul.mubr.bf16.gmra.mxu0 %v2486
        %v2702 = vpop.f32.mrf.mxu0
        %v2703 = vadd.f32 0.0, %v2702
        %v2704 = vpop.f32.mrf.mxu0
        %v2705 = vpop.f32.mrf.mxu0
        %v2706 = vadd.f32 0.0, %v2705
        %v2707 = vpop.f32.mrf.mxu0
        %2708 = vmatprep.mubr.bf16.mxu0 %v2489
        %2709 = vmatmul.mubr.bf16.gmra.mxu0 %v2488
        %v2710 = vpop.f32.mrf.mxu0
        %v2711 = vadd.f32 0.0, %v2710
        %v2712 = vpop.f32.mrf.mxu0
        %v2713 = vpop.f32.mrf.mxu0
        %v2714 = vadd.f32 0.0, %v2713
        %v2715 = vpop.f32.mrf.mxu0
        %2716 = vmatprep.mubr.bf16.mxu0 %v2491
        %2717 = vmatmul.mubr.bf16.gmra.mxu0 %v2490
        %v2718 = vpop.f32.mrf.mxu0
        %v2719 = vadd.f32 0.0, %v2718
        %v2720 = vpop.f32.mrf.mxu0
        %v2721 = vpop.f32.mrf.mxu0
        %v2722 = vadd.f32 0.0, %v2721
        %v2723 = vpop.f32.mrf.mxu0
        %2724 = vmatprep.mubr.bf16.mxu0 %v2493
        %2725 = vmatmul.mubr.bf16.gmra.mxu0 %v2492
        %v2726 = vpop.f32.mrf.mxu0
        %v2727 = vadd.f32 0.0, %v2726
        %v2728 = vpop.f32.mrf.mxu0
        %v2729 = vpop.f32.mrf.mxu0
        %v2730 = vadd.f32 0.0, %v2729
        %v2731 = vpop.f32.mrf.mxu0
        %2732 = vmatprep.mubr.bf16.mxu0 %v2495
        %2733 = vmatmul.mubr.bf16.gmra.mxu0 %v2494
        %v2734 = vpop.f32.mrf.mxu0
        %v2735 = vadd.f32 0.0, %v2734
        %v2736 = vpop.f32.mrf.mxu0
        %v2737 = vpop.f32.mrf.mxu0
        %v2738 = vadd.f32 0.0, %v2737
        %v2739 = vpop.f32.mrf.mxu0
        %2740 = vmatprep.mubr.bf16.mxu0 %v2497
        %2741 = vmatmul.mubr.bf16.gmra.mxu0 %v2496
        %v2742 = vpop.f32.mrf.mxu0
        %v2743 = vadd.f32 0.0, %v2742
        %v2744 = vpop.f32.mrf.mxu0
        %v2745 = vpop.f32.mrf.mxu0
        %v2746 = vadd.f32 0.0, %v2745
        %v2747 = vpop.f32.mrf.mxu0
        %2748 = vmatprep.mubr.bf16.mxu0 %v2499
        %2749 = vmatmul.mubr.bf16.gmra.mxu0 %v2498
        %v2750 = vpop.f32.mrf.mxu0
        %v2751 = vadd.f32 0.0, %v2750
        %v2752 = vpop.f32.mrf.mxu0
        %v2753 = vpop.f32.mrf.mxu0
        %v2754 = vadd.f32 0.0, %v2753
        %v2755 = vpop.f32.mrf.mxu0
        %2756 = vdwg.mxu0
        %v2757 = vadd.f32 %v2436, %v2631
        %v2758 = vadd.f32 %v2437, %v2634
        %v2759 = vadd.f32 %v2438, %v2639
        %v2760 = vadd.f32 %v2439, %v2642
        %v2761 = vadd.f32 %v2440, %v2647
        %v2762 = vadd.f32 %v2441, %v2650
        %v2763 = vadd.f32 %v2442, %v2655
        %v2764 = vadd.f32 %v2443, %v2658
        %v2765 = vadd.f32 %v2444, %v2663
        %v2766 = vadd.f32 %v2445, %v2666
        %v2767 = vadd.f32 %v2446, %v2671
        %v2768 = vadd.f32 %v2447, %v2674
        %v2769 = vadd.f32 %v2448, %v2679
        %v2770 = vadd.f32 %v2449, %v2682
        %v2771 = vadd.f32 %v2450, %v2687
        %v2772 = vadd.f32 %v2451, %v2690
        %v2773 = vadd.f32 %v2452, %v2695
        %v2774 = vadd.f32 %v2453, %v2698
        %v2775 = vadd.f32 %v2454, %v2703
        %v2776 = vadd.f32 %v2455, %v2706
        %v2777 = vadd.f32 %v2456, %v2711
        %v2778 = vadd.f32 %v2457, %v2714
        %v2779 = vadd.f32 %v2458, %v2719
        %v2780 = vadd.f32 %v2459, %v2722
        %v2781 = vadd.f32 %v2460, %v2727
        %v2782 = vadd.f32 %v2461, %v2730
        %v2783 = vadd.f32 %v2462, %v2735
        %v2784 = vadd.f32 %v2463, %v2738
        %v2785 = vadd.f32 %v2464, %v2743
        %v2786 = vadd.f32 %v2465, %v2746
        %v2787 = vadd.f32 %v2466, %v2751
        %v2788 = vadd.f32 %v2467, %v2754
        %2789 = vst [vmem:[#allocation5] sm:$0xff] %v2757
        %2790 = vst [vmem:[#allocation5 + $0x8] sm:$0xff] %v2758
        %2791 = vst [vmem:[#allocation5 + $0x10] sm:$0xff] %v2759
        %2792 = vst [vmem:[#allocation5 + $0x18] sm:$0xff] %v2760
        %2793 = vst [vmem:[#allocation5 + $0x20] sm:$0xff] %v2761
        %2794 = vst [vmem:[#allocation5 + $0x28] sm:$0xff] %v2762
        %2795 = vst [vmem:[#allocation5 + $0x30] sm:$0xff] %v2763
        %2796 = vst [vmem:[#allocation5 + $0x38] sm:$0xff] %v2764
        %2797 = vst [vmem:[#allocation5 + $0x40] sm:$0xff] %v2765
        %2798 = vst [vmem:[#allocation5 + $0x48] sm:$0xff] %v2766
        %2799 = vst [vmem:[#allocation5 + $0x50] sm:$0xff] %v2767
        %2800 = vst [vmem:[#allocation5 + $0x58] sm:$0xff] %v2768
        %2801 = vst [vmem:[#allocation5 + $0x60] sm:$0xff] %v2769
        %2802 = vst [vmem:[#allocation5 + $0x68] sm:$0xff] %v2770
        %2803 = vst [vmem:[#allocation5 + $0x70] sm:$0xff] %v2771
        %2804 = vst [vmem:[#allocation5 + $0x78] sm:$0xff] %v2772
        %2805 = vst [vmem:[#allocation5 + $0x80] sm:$0xff] %v2773
        %2806 = vst [vmem:[#allocation5 + $0x88] sm:$0xff] %v2774
        %2807 = vst [vmem:[#allocation5 + $0x90] sm:$0xff] %v2775
        %2808 = vst [vmem:[#allocation5 + $0x98] sm:$0xff] %v2776
        %2809 = vst [vmem:[#allocation5 + $0xa0] sm:$0xff] %v2777
        %2810 = vst [vmem:[#allocation5 + $0xa8] sm:$0xff] %v2778
        %2811 = vst [vmem:[#allocation5 + $0xb0] sm:$0xff] %v2779
        %2812 = vst [vmem:[#allocation5 + $0xb8] sm:$0xff] %v2780
        %2813 = vst [vmem:[#allocation5 + $0xc0] sm:$0xff] %v2781
        %2814 = vst [vmem:[#allocation5 + $0xc8] sm:$0xff] %v2782
        %2815 = vst [vmem:[#allocation5 + $0xd0] sm:$0xff] %v2783
        %2816 = vst [vmem:[#allocation5 + $0xd8] sm:$0xff] %v2784
        %2817 = vst [vmem:[#allocation5 + $0xe0] sm:$0xff] %v2785
        %2818 = vst [vmem:[#allocation5 + $0xe8] sm:$0xff] %v2786
        %2819 = vst [vmem:[#allocation5 + $0xf0] sm:$0xff] %v2787
        %2820 = vst [vmem:[#allocation5 + $0xf8] sm:$0xff] %v2788
        %2821 = vst.msk [vmem:[#allocation3] sm:$0xff] %vm2211, %v1539
        %2822 = vst.msk [vmem:[#allocation3 + $0x8] sm:$0xff] %vm2211, %v1540
        %2823 = vst.msk [vmem:[#allocation3 + $0x10] sm:$0xff] %vm2211, %v1541
        %2824 = vst.msk [vmem:[#allocation3 + $0x18] sm:$0xff] %vm2211, %v1542
        %2825 = vst.msk [vmem:[#allocation3 + $0x20] sm:$0xff] %vm2211, %v1543
        %2826 = vst.msk [vmem:[#allocation3 + $0x28] sm:$0xff] %vm2211, %v1544
        %2827 = vst.msk [vmem:[#allocation3 + $0x30] sm:$0xff] %vm2211, %v1545
        %2828 = vst.msk [vmem:[#allocation3 + $0x38] sm:$0xff] %vm2211, %v1546
        %2829 = vst.msk [vmem:[#allocation3 + $0x40] sm:$0xff] %vm2211, %v1547
        %2830 = vst.msk [vmem:[#allocation3 + $0x48] sm:$0xff] %vm2211, %v1548
        %2831 = vst.msk [vmem:[#allocation3 + $0x50] sm:$0xff] %vm2211, %v1549
        %2832 = vst.msk [vmem:[#allocation3 + $0x58] sm:$0xff] %vm2211, %v1550
        %2833 = vst.msk [vmem:[#allocation3 + $0x60] sm:$0xff] %vm2211, %v1551
        %2834 = vst.msk [vmem:[#allocation3 + $0x68] sm:$0xff] %vm2211, %v1552
        %2835 = vst.msk [vmem:[#allocation3 + $0x70] sm:$0xff] %vm2211, %v1553
        %2836 = vst.msk [vmem:[#allocation3 + $0x78] sm:$0xff] %vm2211, %v1554
        %2837 = vst.msk [vmem:[#allocation3 + $0x80] sm:$0xff] %vm2211, %v1555
        %2838 = vst.msk [vmem:[#allocation3 + $0x88] sm:$0xff] %vm2211, %v1556
        %2839 = vst.msk [vmem:[#allocation3 + $0x90] sm:$0xff] %vm2211, %v1557
        %2840 = vst.msk [vmem:[#allocation3 + $0x98] sm:$0xff] %vm2211, %v1558
        %2841 = vst.msk [vmem:[#allocation3 + $0xa0] sm:$0xff] %vm2211, %v1559
        %2842 = vst.msk [vmem:[#allocation3 + $0xa8] sm:$0xff] %vm2211, %v1560
        %2843 = vst.msk [vmem:[#allocation3 + $0xb0] sm:$0xff] %vm2211, %v1561
        %2844 = vst.msk [vmem:[#allocation3 + $0xb8] sm:$0xff] %vm2211, %v1562
        %2845 = vst.msk [vmem:[#allocation3 + $0xc0] sm:$0xff] %vm2211, %v1563
        %2846 = vst.msk [vmem:[#allocation3 + $0xc8] sm:$0xff] %vm2211, %v1564
        %2847 = vst.msk [vmem:[#allocation3 + $0xd0] sm:$0xff] %vm2211, %v1565
        %2848 = vst.msk [vmem:[#allocation3 + $0xd8] sm:$0xff] %vm2211, %v1566
        %2849 = vst.msk [vmem:[#allocation3 + $0xe0] sm:$0xff] %vm2211, %v1567
        %2850 = vst.msk [vmem:[#allocation3 + $0xe8] sm:$0xff] %vm2211, %v1568
        %2851 = vst.msk [vmem:[#allocation3 + $0xf0] sm:$0xff] %vm2211, %v1569
        %2852 = vst.msk [vmem:[#allocation3 + $0xf8] sm:$0xff] %vm2211, %v1570
        // Predicated region
        $region53: #{_self_attention_impl.3} parent=47 // pred_check
          %p2853 = pneg %p389
        $region54: #{_self_attention_impl.3} parent=47 // pred_check_branch
          %2855 = sbr.rel (%p2853) target = $region56
        $region55: #{_self_attention_impl.3} parent=47 // pred_region
          %s2856 = sld [smem:[#allocation6]]
          %v2857 = vld [vmem:[#allocation4] sm:$0xff]
          %v2858 = vld [vmem:[#allocation4 + $0x8] sm:$0xff]
          %v2859 = vld [vmem:[#allocation4 + $0x10] sm:$0xff]
          %v2860 = vld [vmem:[#allocation4 + $0x18] sm:$0xff]
          %v2861 = vld [vmem:[#allocation4 + $0x20] sm:$0xff]
          %v2862 = vld [vmem:[#allocation4 + $0x28] sm:$0xff]
          %v2863 = vld [vmem:[#allocation4 + $0x30] sm:$0xff]
          %v2864 = vld [vmem:[#allocation4 + $0x38] sm:$0xff]
          %v2865 = vld [vmem:[#allocation4 + $0x40] sm:$0xff]
          %v2866 = vld [vmem:[#allocation4 + $0x48] sm:$0xff]
          %v2867 = vld [vmem:[#allocation4 + $0x50] sm:$0xff]
          %v2868 = vld [vmem:[#allocation4 + $0x58] sm:$0xff]
          %v2869 = vld [vmem:[#allocation4 + $0x60] sm:$0xff]
          %v2870 = vld [vmem:[#allocation4 + $0x68] sm:$0xff]
          %v2871 = vld [vmem:[#allocation4 + $0x70] sm:$0xff]
          %v2872 = vld [vmem:[#allocation4 + $0x78] sm:$0xff]
          %v2873 = vld [vmem:[#allocation4 + $0x80] sm:$0xff]
          %v2874 = vld [vmem:[#allocation4 + $0x88] sm:$0xff]
          %v2875 = vld [vmem:[#allocation4 + $0x90] sm:$0xff]
          %v2876 = vld [vmem:[#allocation4 + $0x98] sm:$0xff]
          %v2877 = vld [vmem:[#allocation4 + $0xa0] sm:$0xff]
          %v2878 = vld [vmem:[#allocation4 + $0xa8] sm:$0xff]
          %v2879 = vld [vmem:[#allocation4 + $0xb0] sm:$0xff]
          %v2880 = vld [vmem:[#allocation4 + $0xb8] sm:$0xff]
          %v2881 = vld [vmem:[#allocation4 + $0xc0] sm:$0xff]
          %v2882 = vld [vmem:[#allocation4 + $0xc8] sm:$0xff]
          %v2883 = vld [vmem:[#allocation4 + $0xd0] sm:$0xff]
          %v2884 = vld [vmem:[#allocation4 + $0xd8] sm:$0xff]
          %v2885 = vld [vmem:[#allocation4 + $0xe0] sm:$0xff]
          %v2886 = vld [vmem:[#allocation4 + $0xe8] sm:$0xff]
          %v2887 = vld [vmem:[#allocation4 + $0xf0] sm:$0xff]
          %v2888 = vld [vmem:[#allocation4 + $0xf8] sm:$0xff]
          %v2889 = vrcp.pop %v2857
          %v2890 = vrcp.pop %v2858
          %v2891 = vrcp.pop %v2859
          %v2892 = vrcp.pop %v2860
          %v2893 = vrcp.pop %v2861
          %v2894 = vrcp.pop %v2862
          %v2895 = vrcp.pop %v2863
          %v2896 = vrcp.pop %v2864
          %v2897 = vrcp.pop %v2865
          %v2898 = vrcp.pop %v2866
          %v2899 = vrcp.pop %v2867
          %v2900 = vrcp.pop %v2868
          %v2901 = vrcp.pop %v2869
          %v2902 = vrcp.pop %v2870
          %v2903 = vrcp.pop %v2871
          %v2904 = vrcp.pop %v2872
          %v2905 = vrcp.pop %v2873
          %v2906 = vrcp.pop %v2874
          %v2907 = vrcp.pop %v2875
          %v2908 = vrcp.pop %v2876
          %v2909 = vrcp.pop %v2877
          %v2910 = vrcp.pop %v2878
          %v2911 = vrcp.pop %v2879
          %v2912 = vrcp.pop %v2880
          %v2913 = vrcp.pop %v2881
          %v2914 = vrcp.pop %v2882
          %v2915 = vrcp.pop %v2883
          %v2916 = vrcp.pop %v2884
          %v2917 = vrcp.pop %v2885
          %v2918 = vrcp.pop %v2886
          %v2919 = vrcp.pop %v2887
          %v2920 = vrcp.pop %v2888
          %v2921 = vstv %s2856
          %v2922 = vmul.f32 %v2921, %v2889
          %v2923 = vmul.f32 %v2921, %v2890
          %v2924 = vmul.f32 %v2921, %v2891
          %v2925 = vmul.f32 %v2921, %v2892
          %v2926 = vmul.f32 %v2921, %v2893
          %v2927 = vmul.f32 %v2921, %v2894
          %v2928 = vmul.f32 %v2921, %v2895
          %v2929 = vmul.f32 %v2921, %v2896
          %v2930 = vmul.f32 %v2921, %v2897
          %v2931 = vmul.f32 %v2921, %v2898
          %v2932 = vmul.f32 %v2921, %v2899
          %v2933 = vmul.f32 %v2921, %v2900
          %v2934 = vmul.f32 %v2921, %v2901
          %v2935 = vmul.f32 %v2921, %v2902
          %v2936 = vmul.f32 %v2921, %v2903
          %v2937 = vmul.f32 %v2921, %v2904
          %v2938 = vmul.f32 %v2921, %v2905
          %v2939 = vmul.f32 %v2921, %v2906
          %v2940 = vmul.f32 %v2921, %v2907
          %v2941 = vmul.f32 %v2921, %v2908
          %v2942 = vmul.f32 %v2921, %v2909
          %v2943 = vmul.f32 %v2921, %v2910
          %v2944 = vmul.f32 %v2921, %v2911
          %v2945 = vmul.f32 %v2921, %v2912
          %v2946 = vmul.f32 %v2921, %v2913
          %v2947 = vmul.f32 %v2921, %v2914
          %v2948 = vmul.f32 %v2921, %v2915
          %v2949 = vmul.f32 %v2921, %v2916
          %v2950 = vmul.f32 %v2921, %v2917
          %v2951 = vmul.f32 %v2921, %v2918
          %v2952 = vmul.f32 %v2921, %v2919
          %v2953 = vmul.f32 %v2921, %v2920
          %v2954 = vld [vmem:[#allocation5] sm:$0xff]
          %v2955 = vld [vmem:[#allocation5 + $0x8] sm:$0xff]
          %v2956 = vld [vmem:[#allocation5 + $0x10] sm:$0xff]
          %v2957 = vld [vmem:[#allocation5 + $0x18] sm:$0xff]
          %v2958 = vld [vmem:[#allocation5 + $0x20] sm:$0xff]
          %v2959 = vld [vmem:[#allocation5 + $0x28] sm:$0xff]
          %v2960 = vld [vmem:[#allocation5 + $0x30] sm:$0xff]
          %v2961 = vld [vmem:[#allocation5 + $0x38] sm:$0xff]
          %v2962 = vld [vmem:[#allocation5 + $0x40] sm:$0xff]
          %v2963 = vld [vmem:[#allocation5 + $0x48] sm:$0xff]
          %v2964 = vld [vmem:[#allocation5 + $0x50] sm:$0xff]
          %v2965 = vld [vmem:[#allocation5 + $0x58] sm:$0xff]
          %v2966 = vld [vmem:[#allocation5 + $0x60] sm:$0xff]
          %v2967 = vld [vmem:[#allocation5 + $0x68] sm:$0xff]
          %v2968 = vld [vmem:[#allocation5 + $0x70] sm:$0xff]
          %v2969 = vld [vmem:[#allocation5 + $0x78] sm:$0xff]
          %v2970 = vld [vmem:[#allocation5 + $0x80] sm:$0xff]
          %v2971 = vld [vmem:[#allocation5 + $0x88] sm:$0xff]
          %v2972 = vld [vmem:[#allocation5 + $0x90] sm:$0xff]
          %v2973 = vld [vmem:[#allocation5 + $0x98] sm:$0xff]
          %v2974 = vld [vmem:[#allocation5 + $0xa0] sm:$0xff]
          %v2975 = vld [vmem:[#allocation5 + $0xa8] sm:$0xff]
          %v2976 = vld [vmem:[#allocation5 + $0xb0] sm:$0xff]
          %v2977 = vld [vmem:[#allocation5 + $0xb8] sm:$0xff]
          %v2978 = vld [vmem:[#allocation5 + $0xc0] sm:$0xff]
          %v2979 = vld [vmem:[#allocation5 + $0xc8] sm:$0xff]
          %v2980 = vld [vmem:[#allocation5 + $0xd0] sm:$0xff]
          %v2981 = vld [vmem:[#allocation5 + $0xd8] sm:$0xff]
          %v2982 = vld [vmem:[#allocation5 + $0xe0] sm:$0xff]
          %v2983 = vld [vmem:[#allocation5 + $0xe8] sm:$0xff]
          %v2984 = vld [vmem:[#allocation5 + $0xf0] sm:$0xff]
          %v2985 = vld [vmem:[#allocation5 + $0xf8] sm:$0xff]
          %2987 = vset.pattern.permute.xlu0 0
          %2988 = vperm.xlu0 %2987, %v2922
          %v2989 = vpop.permute.xlu0 %2988
          %2992 = vset.pattern.permute.xlu0 0
          %2993 = vperm.xlu0 %2992, %v2923
          %v2994 = vpop.permute.xlu0 %2993
          %2997 = vset.pattern.permute.xlu0 0
          %2998 = vperm.xlu0 %2997, %v2924
          %v2999 = vpop.permute.xlu0 %2998
          %3002 = vset.pattern.permute.xlu0 0
          %3003 = vperm.xlu0 %3002, %v2925
          %v3004 = vpop.permute.xlu0 %3003
          %3007 = vset.pattern.permute.xlu0 0
          %3008 = vperm.xlu0 %3007, %v2926
          %v3009 = vpop.permute.xlu0 %3008
          %3012 = vset.pattern.permute.xlu0 0
          %3013 = vperm.xlu0 %3012, %v2927
          %v3014 = vpop.permute.xlu0 %3013
          %3017 = vset.pattern.permute.xlu0 0
          %3018 = vperm.xlu0 %3017, %v2928
          %v3019 = vpop.permute.xlu0 %3018
          %3022 = vset.pattern.permute.xlu0 0
          %3023 = vperm.xlu0 %3022, %v2929
          %v3024 = vpop.permute.xlu0 %3023
          %3027 = vset.pattern.permute.xlu0 0
          %3028 = vperm.xlu0 %3027, %v2930
          %v3029 = vpop.permute.xlu0 %3028
          %3032 = vset.pattern.permute.xlu0 0
          %3033 = vperm.xlu0 %3032, %v2931
          %v3034 = vpop.permute.xlu0 %3033
          %3037 = vset.pattern.permute.xlu0 0
          %3038 = vperm.xlu0 %3037, %v2932
          %v3039 = vpop.permute.xlu0 %3038
          %3042 = vset.pattern.permute.xlu0 0
          %3043 = vperm.xlu0 %3042, %v2933
          %v3044 = vpop.permute.xlu0 %3043
          %3047 = vset.pattern.permute.xlu0 0
          %3048 = vperm.xlu0 %3047, %v2934
          %v3049 = vpop.permute.xlu0 %3048
          %3052 = vset.pattern.permute.xlu0 0
          %3053 = vperm.xlu0 %3052, %v2935
          %v3054 = vpop.permute.xlu0 %3053
          %3057 = vset.pattern.permute.xlu0 0
          %3058 = vperm.xlu0 %3057, %v2936
          %v3059 = vpop.permute.xlu0 %3058
          %3062 = vset.pattern.permute.xlu0 0
          %3063 = vperm.xlu0 %3062, %v2937
          %v3064 = vpop.permute.xlu0 %3063
          %3067 = vset.pattern.permute.xlu0 0
          %3068 = vperm.xlu0 %3067, %v2938
          %v3069 = vpop.permute.xlu0 %3068
          %3072 = vset.pattern.permute.xlu0 0
          %3073 = vperm.xlu0 %3072, %v2939
          %v3074 = vpop.permute.xlu0 %3073
          %3077 = vset.pattern.permute.xlu0 0
          %3078 = vperm.xlu0 %3077, %v2940
          %v3079 = vpop.permute.xlu0 %3078
          %3082 = vset.pattern.permute.xlu0 0
          %3083 = vperm.xlu0 %3082, %v2941
          %v3084 = vpop.permute.xlu0 %3083
          %3087 = vset.pattern.permute.xlu0 0
          %3088 = vperm.xlu0 %3087, %v2942
          %v3089 = vpop.permute.xlu0 %3088
          %3092 = vset.pattern.permute.xlu0 0
          %3093 = vperm.xlu0 %3092, %v2943
          %v3094 = vpop.permute.xlu0 %3093
          %3097 = vset.pattern.permute.xlu0 0
          %3098 = vperm.xlu0 %3097, %v2944
          %v3099 = vpop.permute.xlu0 %3098
          %3102 = vset.pattern.permute.xlu0 0
          %3103 = vperm.xlu0 %3102, %v2945
          %v3104 = vpop.permute.xlu0 %3103
          %3107 = vset.pattern.permute.xlu0 0
          %3108 = vperm.xlu0 %3107, %v2946
          %v3109 = vpop.permute.xlu0 %3108
          %3112 = vset.pattern.permute.xlu0 0
          %3113 = vperm.xlu0 %3112, %v2947
          %v3114 = vpop.permute.xlu0 %3113
          %3117 = vset.pattern.permute.xlu0 0
          %3118 = vperm.xlu0 %3117, %v2948
          %v3119 = vpop.permute.xlu0 %3118
          %3122 = vset.pattern.permute.xlu0 0
          %3123 = vperm.xlu0 %3122, %v2949
          %v3124 = vpop.permute.xlu0 %3123
          %3127 = vset.pattern.permute.xlu0 0
          %3128 = vperm.xlu0 %3127, %v2950
          %v3129 = vpop.permute.xlu0 %3128
          %3132 = vset.pattern.permute.xlu0 0
          %3133 = vperm.xlu0 %3132, %v2951
          %v3134 = vpop.permute.xlu0 %3133
          %3137 = vset.pattern.permute.xlu0 0
          %3138 = vperm.xlu0 %3137, %v2952
          %v3139 = vpop.permute.xlu0 %3138
          %3142 = vset.pattern.permute.xlu0 0
          %3143 = vperm.xlu0 %3142, %v2953
          %v3144 = vpop.permute.xlu0 %3143
          %v3146 = vmul.f32 %v2954, %v2989
          %v3147 = vmul.f32 %v2955, %v2994
          %v3148 = vmul.f32 %v2956, %v2999
          %v3149 = vmul.f32 %v2957, %v3004
          %v3150 = vmul.f32 %v2958, %v3009
          %v3151 = vmul.f32 %v2959, %v3014
          %v3152 = vmul.f32 %v2960, %v3019
          %v3153 = vmul.f32 %v2961, %v3024
          %v3154 = vmul.f32 %v2962, %v3029
          %v3155 = vmul.f32 %v2963, %v3034
          %v3156 = vmul.f32 %v2964, %v3039
          %v3157 = vmul.f32 %v2965, %v3044
          %v3158 = vmul.f32 %v2966, %v3049
          %v3159 = vmul.f32 %v2967, %v3054
          %v3160 = vmul.f32 %v2968, %v3059
          %v3161 = vmul.f32 %v2969, %v3064
          %v3162 = vmul.f32 %v2970, %v3069
          %v3163 = vmul.f32 %v2971, %v3074
          %v3164 = vmul.f32 %v2972, %v3079
          %v3165 = vmul.f32 %v2973, %v3084
          %v3166 = vmul.f32 %v2974, %v3089
          %v3167 = vmul.f32 %v2975, %v3094
          %v3168 = vmul.f32 %v2976, %v3099
          %v3169 = vmul.f32 %v2977, %v3104
          %v3170 = vmul.f32 %v2978, %v3109
          %v3171 = vmul.f32 %v2979, %v3114
          %v3172 = vmul.f32 %v2980, %v3119
          %v3173 = vmul.f32 %v2981, %v3124
          %v3174 = vmul.f32 %v2982, %v3129
          %v3175 = vmul.f32 %v2983, %v3134
          %v3176 = vmul.f32 %v2984, %v3139
          %v3177 = vmul.f32 %v2985, %v3144
          %v3178 = vld [vmem:[%s5] sm:$0x1]
          %v3179 = vmul.f32 %v2921, %v3178
          %v3181 = vlaneseq
          %v3182 = vshrl.u32 %v3181, 7
          %v3183 = vsub.s32 0, %v3182
          %v3184 = vrot.slane %v3179, %v3183
          %v3186 = vadd.f32 %v3146, %v3184
          %v3187 = vadd.f32 %v3147, %v3184
          %v3188 = vadd.f32 %v3148, %v3184
          %v3189 = vadd.f32 %v3149, %v3184
          %v3190 = vadd.f32 %v3150, %v3184
          %v3191 = vadd.f32 %v3151, %v3184
          %v3192 = vadd.f32 %v3152, %v3184
          %v3193 = vadd.f32 %v3153, %v3184
          %v3194 = vadd.f32 %v3154, %v3184
          %v3195 = vadd.f32 %v3155, %v3184
          %v3196 = vadd.f32 %v3156, %v3184
          %v3197 = vadd.f32 %v3157, %v3184
          %v3198 = vadd.f32 %v3158, %v3184
          %v3199 = vadd.f32 %v3159, %v3184
          %v3200 = vadd.f32 %v3160, %v3184
          %v3201 = vadd.f32 %v3161, %v3184
          %v3202 = vadd.f32 %v3162, %v3184
          %v3203 = vadd.f32 %v3163, %v3184
          %v3204 = vadd.f32 %v3164, %v3184
          %v3205 = vadd.f32 %v3165, %v3184
          %v3206 = vadd.f32 %v3166, %v3184
          %v3207 = vadd.f32 %v3167, %v3184
          %v3208 = vadd.f32 %v3168, %v3184
          %v3209 = vadd.f32 %v3169, %v3184
          %v3210 = vadd.f32 %v3170, %v3184
          %v3211 = vadd.f32 %v3171, %v3184
          %v3212 = vadd.f32 %v3172, %v3184
          %v3213 = vadd.f32 %v3173, %v3184
          %v3214 = vadd.f32 %v3174, %v3184
          %v3215 = vadd.f32 %v3175, %v3184
          %v3216 = vadd.f32 %v3176, %v3184
          %v3217 = vadd.f32 %v3177, %v3184
          %v3218 = vld [vmem:[%s365] sm:$0xff]
          %v3219 = vld [vmem:[%s365 + $0x8] sm:$0xff]
          %v3220 = vld [vmem:[%s365 + $0x10] sm:$0xff]
          %v3221 = vld [vmem:[%s365 + $0x18] sm:$0xff]
          %v3222 = vld [vmem:[%s365 + $0x20] sm:$0xff]
          %v3223 = vld [vmem:[%s365 + $0x28] sm:$0xff]
          %v3224 = vld [vmem:[%s365 + $0x30] sm:$0xff]
          %v3225 = vld [vmem:[%s365 + $0x38] sm:$0xff]
          %v3226 = vld [vmem:[%s365 + $0x40] sm:$0xff]
          %v3227 = vld [vmem:[%s365 + $0x48] sm:$0xff]
          %v3228 = vld [vmem:[%s365 + $0x50] sm:$0xff]
          %v3229 = vld [vmem:[%s365 + $0x58] sm:$0xff]
          %v3230 = vld [vmem:[%s365 + $0x60] sm:$0xff]
          %v3231 = vld [vmem:[%s365 + $0x68] sm:$0xff]
          %v3232 = vld [vmem:[%s365 + $0x70] sm:$0xff]
          %v3233 = vld [vmem:[%s365 + $0x78] sm:$0xff]
          %v3234 = vld [vmem:[%s365 + $0x80] sm:$0xff]
          %v3235 = vld [vmem:[%s365 + $0x88] sm:$0xff]
          %v3236 = vld [vmem:[%s365 + $0x90] sm:$0xff]
          %v3237 = vld [vmem:[%s365 + $0x98] sm:$0xff]
          %v3238 = vld [vmem:[%s365 + $0xa0] sm:$0xff]
          %v3239 = vld [vmem:[%s365 + $0xa8] sm:$0xff]
          %v3240 = vld [vmem:[%s365 + $0xb0] sm:$0xff]
          %v3241 = vld [vmem:[%s365 + $0xb8] sm:$0xff]
          %v3242 = vld [vmem:[%s365 + $0xc0] sm:$0xff]
          %v3243 = vld [vmem:[%s365 + $0xc8] sm:$0xff]
          %v3244 = vld [vmem:[%s365 + $0xd0] sm:$0xff]
          %v3245 = vld [vmem:[%s365 + $0xd8] sm:$0xff]
          %v3246 = vld [vmem:[%s365 + $0xe0] sm:$0xff]
          %v3247 = vld [vmem:[%s365 + $0xe8] sm:$0xff]
          %v3248 = vld [vmem:[%s365 + $0xf0] sm:$0xff]
          %v3249 = vld [vmem:[%s365 + $0xf8] sm:$0xff]
          %v3250 = vadd.f32 %v3186, %v3218
          %v3251 = vadd.f32 %v3187, %v3219
          %v3252 = vadd.f32 %v3188, %v3220
          %v3253 = vadd.f32 %v3189, %v3221
          %v3254 = vadd.f32 %v3190, %v3222
          %v3255 = vadd.f32 %v3191, %v3223
          %v3256 = vadd.f32 %v3192, %v3224
          %v3257 = vadd.f32 %v3193, %v3225
          %v3258 = vadd.f32 %v3194, %v3226
          %v3259 = vadd.f32 %v3195, %v3227
          %v3260 = vadd.f32 %v3196, %v3228
          %v3261 = vadd.f32 %v3197, %v3229
          %v3262 = vadd.f32 %v3198, %v3230
          %v3263 = vadd.f32 %v3199, %v3231
          %v3264 = vadd.f32 %v3200, %v3232
          %v3265 = vadd.f32 %v3201, %v3233
          %v3266 = vadd.f32 %v3202, %v3234
          %v3267 = vadd.f32 %v3203, %v3235
          %v3268 = vadd.f32 %v3204, %v3236
          %v3269 = vadd.f32 %v3205, %v3237
          %v3270 = vadd.f32 %v3206, %v3238
          %v3271 = vadd.f32 %v3207, %v3239
          %v3272 = vadd.f32 %v3208, %v3240
          %v3273 = vadd.f32 %v3209, %v3241
          %v3274 = vadd.f32 %v3210, %v3242
          %v3275 = vadd.f32 %v3211, %v3243
          %v3276 = vadd.f32 %v3212, %v3244
          %v3277 = vadd.f32 %v3213, %v3245
          %v3278 = vadd.f32 %v3214, %v3246
          %v3279 = vadd.f32 %v3215, %v3247
          %v3280 = vadd.f32 %v3216, %v3248
          %v3281 = vadd.f32 %v3217, %v3249
          %3282 = vst [vmem:[%s356] sm:$0xff] %v3250
          %3283 = vst [vmem:[%s356 + $0x8] sm:$0xff] %v3251
          %3284 = vst [vmem:[%s356 + $0x10] sm:$0xff] %v3252
          %3285 = vst [vmem:[%s356 + $0x18] sm:$0xff] %v3253
          %3286 = vst [vmem:[%s356 + $0x20] sm:$0xff] %v3254
          %3287 = vst [vmem:[%s356 + $0x28] sm:$0xff] %v3255
          %3288 = vst [vmem:[%s356 + $0x30] sm:$0xff] %v3256
          %3289 = vst [vmem:[%s356 + $0x38] sm:$0xff] %v3257
          %3290 = vst [vmem:[%s356 + $0x40] sm:$0xff] %v3258
          %3291 = vst [vmem:[%s356 + $0x48] sm:$0xff] %v3259
          %3292 = vst [vmem:[%s356 + $0x50] sm:$0xff] %v3260
          %3293 = vst [vmem:[%s356 + $0x58] sm:$0xff] %v3261
          %3294 = vst [vmem:[%s356 + $0x60] sm:$0xff] %v3262
          %3295 = vst [vmem:[%s356 + $0x68] sm:$0xff] %v3263
          %3296 = vst [vmem:[%s356 + $0x70] sm:$0xff] %v3264
          %3297 = vst [vmem:[%s356 + $0x78] sm:$0xff] %v3265
          %3298 = vst [vmem:[%s356 + $0x80] sm:$0xff] %v3266
          %3299 = vst [vmem:[%s356 + $0x88] sm:$0xff] %v3267
          %3300 = vst [vmem:[%s356 + $0x90] sm:$0xff] %v3268
          %3301 = vst [vmem:[%s356 + $0x98] sm:$0xff] %v3269
          %3302 = vst [vmem:[%s356 + $0xa0] sm:$0xff] %v3270
          %3303 = vst [vmem:[%s356 + $0xa8] sm:$0xff] %v3271
          %3304 = vst [vmem:[%s356 + $0xb0] sm:$0xff] %v3272
          %3305 = vst [vmem:[%s356 + $0xb8] sm:$0xff] %v3273
          %3306 = vst [vmem:[%s356 + $0xc0] sm:$0xff] %v3274
          %3307 = vst [vmem:[%s356 + $0xc8] sm:$0xff] %v3275
          %3308 = vst [vmem:[%s356 + $0xd0] sm:$0xff] %v3276
          %3309 = vst [vmem:[%s356 + $0xd8] sm:$0xff] %v3277
          %3310 = vst [vmem:[%s356 + $0xe0] sm:$0xff] %v3278
          %3311 = vst [vmem:[%s356 + $0xe8] sm:$0xff] %v3279
          %3312 = vst [vmem:[%s356 + $0xf0] sm:$0xff] %v3280
          %3313 = vst [vmem:[%s356 + $0xf8] sm:$0xff] %v3281
        $region56: #{_self_attention_impl.3} parent=47 // pred_fallthru
          _
        %s3314 = sand.u32 %s219, 1
        %s3315 = scalar_lea.sflag [#allocation8], %s3314
        %s3316 = sand.u32 %s219, 1
        %s3317 = smul.addr %s3316, 256
        %s3318 = scalar_lea.vmem [#allocation7], %s3317
        // Predicated region
        $region57: #{_self_attention_impl.3} parent=47 // pred_check
          %p3319 = pneg %p229
        $region58: #{_self_attention_impl.3} parent=47 // pred_check_branch
          %3321 = sbr.rel (%p3319) target = $region60
        $region59: #{_self_attention_impl.3} parent=47 // pred_region
          %s3322 = smul.u32 32, %s28
          %s3324 = ssub.s32 4096, 4096
          %3325 = vsyncadd %s3315, %s3324
          %s3326 = smul.addr %s27, 32
          %s3327 = sadd.s32 %s3322, %s3326
          %s3328 = smul.addr %s3327, 128
          %s3329 = scalar_lea.hbm %s7, %s3328
          %s3330 = sshll.u32 %s3318, 4
          %s3331 = int_to_ptr.vmem [resolvable:$true] %s3330
          %3336 = dma.vmem_to_hbm [thread:$0]  %s3331, 4096, %s3329, %s3315, 128, 128, 8
        $region60: #{_self_attention_impl.3} parent=47 // pred_fallthru
          _
      $region48: #{_self_attention_impl.3} parent=5 // pred_fallthru
        _
      %p3337 = scmp.le.s32.totalorder 2, %s17
      // Predicated region
      $region61: #{_self_attention_impl.3} parent=5 // pred_check
        %p3338 = pneg %p3337
      $region62: #{_self_attention_impl.3} parent=5 // pred_check_branch
        %3340 = sbr.rel (%p3338) target = $region64
      $region63: #{_self_attention_impl.3} parent=5 // pred_region
        %s3341 = ssub.s32 %s17, 2
        // Predicated region
        $region65: #{_self_attention_impl.3} parent=63 // pred_check
          %p3342 = pneg %p235
        $region66: #{_self_attention_impl.3} parent=63 // pred_check_branch
          %3344 = sbr.rel (%p3342) target = $region68
        $region67: #{_self_attention_impl.3} parent=63 // pred_region
          %s3345 = sand.u32 %s220, 1
          %s3346 = scalar_lea.sflag [#allocation8], %s3345
          %s3347 = sand.u32 %s220, 1
          %s3348 = smul.addr %s3347, 256
          %s3349 = scalar_lea.vmem [#allocation7], %s3348
          %3350 = dma.done %s3346, 4096
        $region68: #{_self_attention_impl.3} parent=63 // pred_fallthru
          _
      $region64: #{_self_attention_impl.3} parent=5 // pred_fallthru
        _
    $region6: #{_self_attention_impl.3} parent=1 // loop_footer
      %s21 = sadd.s32 1, %s17
    $region7: #{_self_attention_impl.3} parent=1 // loop_footer_branch
      %16 = sbr.rel target = $region3
    $region8: #{_self_attention_impl.3} parent=1 // loop_exit
      _
    %3351 = vsyncpa [#allocation8], 1
    %s3352 = scalar_lea.sflag [#allocation8], 1
    %3353 = vsyncpa %s3352, 1

</llo_original>
